<compile_context>
chip_gen: v6e
topology: v6e:2x2x1
jax: 0.10.0
libtpu: 0.0.40
codegen_flags: <defaults>
</compile_context>

<pallas_src>
import functools

import jax
import jax.numpy as jnp
from jax.experimental import pallas as pl
from jax.experimental.pallas import tpu as pltpu

LANES = 128  # pad FC output (num_classes) to a full lane width


# ----------------------------------------------------------------------------
# Fused kernel: one image per grid step.
# ----------------------------------------------------------------------------
def _fused_cnn_kernel(x_ref, w1_ref, b1_ref, s1e_ref, s1o_ref,
                      w2_ref, b2_ref, s2e_ref, s2o_ref,
                      wfc_ref, bfc_ref, o_ref,
                      xpad1, xpad2, *, H, W, C0, C1, C2, KH, pad):
    f32 = jnp.float32
    H2, W2 = H // 2, W // 2
    H4 = H // 4
    N1 = W * C1          # conv1 output row width  (lane = w*C1 + o)
    N2 = W2 * C2         # conv2 output row width  (lane = w*C2 + o)

    # ---------------- conv1 (+ bias, ReLU) ----------------
    # Height zero-padding via VMEM scratch; width padding is folded into w1.
    xpad1[...] = jnp.zeros_like(xpad1)
    xpad1[pad:pad + H, :] = x_ref[0]
    acc1 = jnp.zeros((H, N1), f32)
    for kh in range(KH):                     # 5 matmuls, K = W*C0, N = W*C1
        acc1 = acc1 + jnp.dot(xpad1[kh:kh + H, :], w1_ref[kh],
                              preferred_element_type=f32)
    y1 = jnp.maximum(acc1 + b1_ref[...], 0.0)

    # ---------------- maxpool 2x2 ----------------
    t1 = jnp.max(y1.reshape(H2, 2, N1), axis=1)                 # pool along H
    p1 = jnp.maximum(                                           # pool along W via
        jnp.dot(t1, s1e_ref[...], preferred_element_type=f32),  # constant 0/1
        jnp.dot(t1, s1o_ref[...], preferred_element_type=f32))  # selection matmuls

    # ---------------- conv2 (+ bias, ReLU) ----------------
    xpad2[...] = jnp.zeros_like(xpad2)
    xpad2[pad:pad + H2, :] = p1
    acc2 = jnp.zeros((H2, N2), f32)
    for kh in range(KH):                     # 5 matmuls, K = W2*C1, N = W2*C2
        acc2 = acc2 + jnp.dot(xpad2[kh:kh + H2, :], w2_ref[kh],
                              preferred_element_type=f32)
    y2 = jnp.maximum(acc2 + b2_ref[...], 0.0)

    # ---------------- maxpool 2x2 ----------------
    t2 = jnp.max(y2.reshape(H4, 2, N2), axis=1)
    p2 = jnp.maximum(
        jnp.dot(t2, s2e_ref[...], preferred_element_type=f32),
        jnp.dot(t2, s2o_ref[...], preferred_element_type=f32))  # (H4, W4*C2)

    # ---------------- FC (classes padded to 128 lanes) ----------------
    out = bfc_ref[...]                                          # (1, LANES)
    for h in range(H4):                      # K = W4*C2, N = 128 per matmul
        out = out + jnp.dot(p2[h:h + 1, :], wfc_ref[h],
                            preferred_element_type=f32)
    o_ref[0] = out.astype(o_ref.dtype)


# ----------------------------------------------------------------------------
# One-time parameter preparation (off the hot path).
# ----------------------------------------------------------------------------
def _toeplitz_conv_weight(w_hwio, width, pad):
    """(KH, KW, Cin, Cout) -> (KH, width*Cin, width*Cout) block-Toeplitz
    matrices; width zero-padding is folded in (out-of-range taps dropped)."""
    KH, KW, Cin, Cout = w_hwio.shape
    mats = []
    for kh in range(KH):
        m = jnp.zeros((width * Cin, width * Cout), jnp.float32)
        for kw in range(KW):
            # e[wi, w] = 1  iff  wi == w + kw - pad
            e = jnp.eye(width, width, k=pad - kw, dtype=jnp.float32)
            m = m + jnp.einsum("iw,co->icwo", e, w_hwio[kh, kw]
                               ).reshape(width * Cin, width * Cout)
        mats.append(m)
    return jnp.stack(mats)


def _pool_select_matrices(width, c):
    """0/1 matrices selecting even/odd W positions: (width*c, (width//2)*c)."""
    w_out = width // 2
    eye_c = jnp.eye(c, dtype=jnp.float32)

    def sel(offset):
        p = (jnp.arange(width)[:, None] ==
             (2 * jnp.arange(w_out)[None, :] + offset)).astype(jnp.float32)
        return jnp.einsum("wv,op->wovp", p, eye_c).reshape(width * c, w_out * c)

    return sel(0), sel(1)


def prepare_params(params, input_size):
    """Convert PyTorch-layout params to kernel layouts (run once, not per step)."""
    w1, b1, w2, b2, wfc, bfc = params
    H, W = input_size
    KH, KW, C0, C1 = w1.shape
    C2 = w2.shape[-1]
    pad = (KH - 1) // 2
    W2, H4, W4 = W // 2, H // 4, W // 4
    num_classes = wfc.shape[-1]
    assert H % 4 == 0 and W % 4 == 0, "two 2x2 max-pools need H, W % 4 == 0"
    assert KH == KW and KH == 2 * pad + 1, "expects odd 'same'-padded conv kernels"
    assert num_classes <= LANES

    w1_t = _toeplitz_conv_weight(w1, W, pad)              # (KH, W*C0,  W*C1)
    w2_t = _toeplitz_conv_weight(w2, W2, pad)             # (KH, W2*C1, W2*C2)
    b1_t = jnp.tile(b1, W).reshape(1, W * C1)             # lane = w*C1 + o
    b2_t = jnp.tile(b2, W2).reshape(1, W2 * C2)           # lane = w*C2 + o
    s1e, s1o = _pool_select_matrices(W, C1)               # (W*C1,  W2*C1)
    s2e, s2o = _pool_select_matrices(W2, C2)              # (W2*C2, W4*C2)

    # FC: torch flattens NCHW -> f = o*(H4*W4) + h*W4 + w; pooled features in
    # the kernel arrive as rows h with lane = w*C2 + o. Permute + pad classes.
    wfc_r = wfc.reshape(C2, H4, W4, num_classes)
    wfc_r = jnp.transpose(wfc_r, (1, 2, 0, 3)).reshape(H4, W4 * C2, num_classes)
    wfc_k = jnp.pad(wfc_r, ((0, 0), (0, 0), (0, LANES - num_classes)))
    bfc_k = jnp.pad(bfc, (0, LANES - num_classes)).reshape(1, LANES)

    return (w1_t.astype(jnp.float32), b1_t.astype(jnp.float32), s1e, s1o,
            w2_t.astype(jnp.float32), b2_t.astype(jnp.float32), s2e, s2o,
            wfc_k.astype(jnp.float32), bfc_k.astype(jnp.float32))


# ----------------------------------------------------------------------------
# Forward pass: one fused pallas_call on the hot path.
# ----------------------------------------------------------------------------
@functools.partial(jax.jit, static_argnames=("num_classes",))
def convolutional_nn_forward(x_nchw, kparams, *, num_classes):
    w1_t, b1_t, s1e, s1o, w2_t, b2_t, s2e, s2o, wfc_k, bfc_k = kparams
    B, C0, H, W = x_nchw.shape
    KH = w1_t.shape[0]
    pad = (KH - 1) // 2
    C1 = w1_t.shape[2] // W
    H2, W2 = H // 2, W // 2
    C2 = w2_t.shape[2] // W2

    # NCHW -> packed rows (B, H, W*C0); the only XLA op on the hot path.
    x_p = jnp.transpose(x_nchw, (0, 2, 3, 1)).reshape(B, H, W * C0)

    kern = functools.partial(_fused_cnn_kernel, H=H, W=W, C0=C0, C1=C1, C2=C2,
                             KH=KH, pad=pad)

    def bcast_spec(arr):  # weights: same block for every grid step
        if arr.ndim == 2:
            return pl.BlockSpec(arr.shape, lambda b: (0, 0))
        return pl.BlockSpec(arr.shape, lambda b: (0, 0, 0))

    out = pl.pallas_call(
        kern,
        out_shape=jax.ShapeDtypeStruct((B, 1, LANES), jnp.float32),
        grid=(B,),
        in_specs=[
            pl.BlockSpec((1, H, W * C0), lambda b: (b, 0, 0)),
            bcast_spec(w1_t), bcast_spec(b1_t), bcast_spec(s1e), bcast_spec(s1o),
            bcast_spec(w2_t), bcast_spec(b2_t), bcast_spec(s2e), bcast_spec(s2o),
            bcast_spec(wfc_k), bcast_spec(bfc_k),
        ],
        out_specs=pl.BlockSpec((1, 1, LANES), lambda b: (b, 0, 0)),
        scratch_shapes=[
            pltpu.VMEM((H + 2 * pad, W * C0), jnp.float32),    # conv1 H-pad
            pltpu.VMEM((H2 + 2 * pad, W2 * C1), jnp.float32),  # conv2 H-pad
        ],
        compiler_params=pltpu.CompilerParams(
            dimension_semantics=("parallel",)),
    )(x_p, w1_t, b1_t, s1e, s1o, w2_t, b2_t, s2e, s2o, wfc_k, bfc_k)

    return out.reshape(B, LANES)[:, :num_classes]


# ----------------------------------------------------------------------------
# Deterministic parameter init (PyTorch-style uniform(-1/sqrt(fan_in), ...))
# ----------------------------------------------------------------------------
def init_params(key, in_channel, input_size, num_classes):
    H, W = input_size
    ks = jax.random.split(key, 6)

    def u(k, shape, fan_in):
        bound = 1.0 / jnp.sqrt(float(fan_in))
        return jax.random.uniform(k, shape, jnp.float32, -bound, bound)

    # Conv weights stored as (KH, KW, Cin, Cout); FC as (F, C) == torch weight.T
    w1 = u(ks[0], (5, 5, in_channel, 16), in_channel * 25)
    b1 = u(ks[1], (16,), in_channel * 25)
    w2 = u(ks[2], (5, 5, 16, 32), 16 * 25)
    b2 = u(ks[3], (32,), 16 * 25)
    feat = 32 * (H // 4) * (W // 4)
    wfc = u(ks[4], (feat, num_classes), feat)
    bfc = u(ks[5], (num_classes,), feat)
    return (w1, b1, w2, b2, wfc, bfc)


# ----------------------------------------------------------------------------
# Pure-JAX reference for a correctness sanity check
# ----------------------------------------------------------------------------
def reference_forward(x_nchw, params):
    w1, b1, w2, b2, wfc, bfc = params

    def conv(x, w_hwio, b):
        w_oihw = jnp.transpose(w_hwio, (3, 2, 0, 1))
        y = jax.lax.conv_general_dilated(
            x, w_oihw, window_strides=(1, 1), padding=((2, 2), (2, 2)),
            dimension_numbers=("NCHW", "OIHW", "NCHW"))
        return y + b[None, :, None, None]

    def pool(x):  # NCHW, 2x2 max pool
        return jax.lax.reduce_window(x, -jnp.inf, jax.lax.max,
                                     (1, 1, 2, 2), (1, 1, 2, 2), "VALID")

    y = pool(jax.nn.relu(conv(x_nchw, w1, b1)))
    y = pool(jax.nn.relu(conv(y, w2, b2)))
    y = y.reshape(y.shape[0], -1)
    return y @ wfc + bfc[None, :]


if __name__ == "__main__":
    key = jax.random.PRNGKey(0)
    k_x, k_p = jax.random.split(key)

    batch, in_channel, H, W = 2, 4, 16, 16
    num_classes = 10

    x = jax.random.normal(k_x, (batch, in_channel, H, W), jnp.float32)
    params = init_params(k_p, in_channel, (H, W), num_classes)

    # One-time conversion of torch-layout params to kernel layouts.
    kparams = prepare_params(params, (H, W))

    out = convolutional_nn_forward(x, kparams, num_classes=num_classes)
    out = jax.block_until_ready(out)

    ref = reference_forward(x, params)
    assert out.shape == (batch, num_classes), out.shape
    assert jnp.allclose(out, ref, rtol=2e-2, atol=2e-2), (
        f"max abs diff = {jnp.max(jnp.abs(out - ref))}")

    print("KERNEL_OK")
</pallas_src>

<mosaic_0001>
module attributes {stable_mosaic.version = 11 : i64} {
  func.func @_fused_cnn_kernel(%arg0: i32, %arg1: memref<1x16x64xf32, #tpu.memory_space<vmem>>, %arg2: memref<5x64x256xf32, #tpu.memory_space<vmem>>, %arg3: memref<1x256xf32, #tpu.memory_space<vmem>>, %arg4: memref<256x128xf32, #tpu.memory_space<vmem>>, %arg5: memref<256x128xf32, #tpu.memory_space<vmem>>, %arg6: memref<5x128x256xf32, #tpu.memory_space<vmem>>, %arg7: memref<1x256xf32, #tpu.memory_space<vmem>>, %arg8: memref<256x128xf32, #tpu.memory_space<vmem>>, %arg9: memref<256x128xf32, #tpu.memory_space<vmem>>, %arg10: memref<4x128x128xf32, #tpu.memory_space<vmem>>, %arg11: memref<1x128xf32, #tpu.memory_space<vmem>>, %arg12: memref<1x1x128xf32, #tpu.memory_space<vmem>>, %arg13: memref<20x64xf32, #tpu.memory_space<vmem>>, %arg14: memref<12x128xf32, #tpu.memory_space<vmem>>) attributes {dimension_semantics = [#tpu.dimension_semantics<parallel>], iteration_bounds = array<i64: 2>, scalar_prefetch = 0 : i64, scratch_operands = 2 : i64, tpu.core_type = #tpu.core_type<tc>, window_params = [{transform_indices = @transform_0, window_bounds = array<i64: 1, 16, 64>}, {pipeline_mode = #tpu.pipeline_mode<synchronous>, transform_indices = @transform_1, window_bounds = array<i64: 5, 64, 256>}, {pipeline_mode = #tpu.pipeline_mode<synchronous>, transform_indices = @transform_2, window_bounds = array<i64: 1, 256>}, {pipeline_mode = #tpu.pipeline_mode<synchronous>, transform_indices = @transform_3, window_bounds = array<i64: 256, 128>}, {pipeline_mode = #tpu.pipeline_mode<synchronous>, transform_indices = @transform_4, window_bounds = array<i64: 256, 128>}, {pipeline_mode = #tpu.pipeline_mode<synchronous>, transform_indices = @transform_5, window_bounds = array<i64: 5, 128, 256>}, {pipeline_mode = #tpu.pipeline_mode<synchronous>, transform_indices = @transform_6, window_bounds = array<i64: 1, 256>}, {pipeline_mode = #tpu.pipeline_mode<synchronous>, transform_indices = @transform_7, window_bounds = array<i64: 256, 128>}, {pipeline_mode = #tpu.pipeline_mode<synchronous>, transform_indices = @transform_8, window_bounds = array<i64: 256, 128>}, {pipeline_mode = #tpu.pipeline_mode<synchronous>, transform_indices = @transform_9, window_bounds = array<i64: 4, 128, 128>}, {pipeline_mode = #tpu.pipeline_mode<synchronous>, transform_indices = @transform_10, window_bounds = array<i64: 1, 128>}, {transform_indices = @transform_11, window_bounds = array<i64: 1, 1, 128>}]} {
    %cst = arith.constant 0.000000e+00 : f32
    %0 = vector.broadcast %cst : f32 to vector<20x64xf32>
    %c0 = arith.constant 0 : index
    %c0_0 = arith.constant 0 : index
    %1 = vector.load %arg13[%c0, %c0_0] : memref<20x64xf32, #tpu.memory_space<vmem>>, vector<20x64xf32>
    tpu.vector_store %arg13[%c0, %c0_0], %0 {strides = array<i32>} : memref<20x64xf32, #tpu.memory_space<vmem>>, vector<20x64xf32>,
    %c0_1 = arith.constant 0 : index
    %c0_2 = arith.constant 0 : index
    %c0_3 = arith.constant 0 : index
    %2 = vector.load %arg1[%c0_1, %c0_2, %c0_3] : memref<1x16x64xf32, #tpu.memory_space<vmem>>, vector<1x16x64xf32>
    %3 = vector.shape_cast %2 : vector<1x16x64xf32> to vector<16x64xf32>
    %c2 = arith.constant 2 : index
    %c0_4 = arith.constant 0 : index
    %4 = vector.load %arg13[%c2, %c0_4] : memref<20x64xf32, #tpu.memory_space<vmem>>, vector<16x64xf32>
    tpu.vector_store %arg13[%c2, %c0_4], %3 {strides = array<i32>} : memref<20x64xf32, #tpu.memory_space<vmem>>, vector<16x64xf32>,
    %cst_5 = arith.constant 0.000000e+00 : f32
    %5 = vector.broadcast %cst_5 : f32 to vector<16x256xf32>
    %c0_6 = arith.constant 0 : index
    %c0_7 = arith.constant 0 : index
    %6 = vector.load %arg13[%c0_6, %c0_7] : memref<20x64xf32, #tpu.memory_space<vmem>>, vector<16x64xf32>
    %c0_8 = arith.constant 0 : index
    %c0_9 = arith.constant 0 : index
    %c0_10 = arith.constant 0 : index
    %7 = vector.load %arg2[%c0_8, %c0_9, %c0_10] : memref<5x64x256xf32, #tpu.memory_space<vmem>>, vector<1x64x256xf32>
    %8 = vector.shape_cast %7 : vector<1x64x256xf32> to vector<64x256xf32>
    %cst_11 = arith.constant dense<0.000000e+00> : vector<16x256xf32>
    %9 = tpu.matmul %6, %8, %cst_11 {dimension_numbers = #tpu.dot_dimension_numbers<[1], [0], [0], [1], [0, 0, 1, 1], [], []>} : vector<16x64xf32>, vector<64x256xf32>, vector<16x256xf32> -> vector<16x256xf32>
    %10 = arith.addf %5, %9 : vector<16x256xf32>
    %c1 = arith.constant 1 : index
    %c0_12 = arith.constant 0 : index
    %11 = vector.load %arg13[%c1, %c0_12] : memref<20x64xf32, #tpu.memory_space<vmem>>, vector<16x64xf32>
    %c1_13 = arith.constant 1 : index
    %c0_14 = arith.constant 0 : index
    %c0_15 = arith.constant 0 : index
    %12 = vector.load %arg2[%c1_13, %c0_14, %c0_15] : memref<5x64x256xf32, #tpu.memory_space<vmem>>, vector<1x64x256xf32>
    %13 = vector.shape_cast %12 : vector<1x64x256xf32> to vector<64x256xf32>
    %cst_16 = arith.constant dense<0.000000e+00> : vector<16x256xf32>
    %14 = tpu.matmul %11, %13, %cst_16 {dimension_numbers = #tpu.dot_dimension_numbers<[1], [0], [0], [1], [0, 0, 1, 1], [], []>} : vector<16x64xf32>, vector<64x256xf32>, vector<16x256xf32> -> vector<16x256xf32>
    %15 = arith.addf %10, %14 : vector<16x256xf32>
    %c2_17 = arith.constant 2 : index
    %c0_18 = arith.constant 0 : index
    %16 = vector.load %arg13[%c2_17, %c0_18] : memref<20x64xf32, #tpu.memory_space<vmem>>, vector<16x64xf32>
    %c2_19 = arith.constant 2 : index
    %c0_20 = arith.constant 0 : index
    %c0_21 = arith.constant 0 : index
    %17 = vector.load %arg2[%c2_19, %c0_20, %c0_21] : memref<5x64x256xf32, #tpu.memory_space<vmem>>, vector<1x64x256xf32>
    %18 = vector.shape_cast %17 : vector<1x64x256xf32> to vector<64x256xf32>
    %cst_22 = arith.constant dense<0.000000e+00> : vector<16x256xf32>
    %19 = tpu.matmul %16, %18, %cst_22 {dimension_numbers = #tpu.dot_dimension_numbers<[1], [0], [0], [1], [0, 0, 1, 1], [], []>} : vector<16x64xf32>, vector<64x256xf32>, vector<16x256xf32> -> vector<16x256xf32>
    %20 = arith.addf %15, %19 : vector<16x256xf32>
    %c3 = arith.constant 3 : index
    %c0_23 = arith.constant 0 : index
    %21 = vector.load %arg13[%c3, %c0_23] : memref<20x64xf32, #tpu.memory_space<vmem>>, vector<16x64xf32>
    %c3_24 = arith.constant 3 : index
    %c0_25 = arith.constant 0 : index
    %c0_26 = arith.constant 0 : index
    %22 = vector.load %arg2[%c3_24, %c0_25, %c0_26] : memref<5x64x256xf32, #tpu.memory_space<vmem>>, vector<1x64x256xf32>
    %23 = vector.shape_cast %22 : vector<1x64x256xf32> to vector<64x256xf32>
    %cst_27 = arith.constant dense<0.000000e+00> : vector<16x256xf32>
    %24 = tpu.matmul %21, %23, %cst_27 {dimension_numbers = #tpu.dot_dimension_numbers<[1], [0], [0], [1], [0, 0, 1, 1], [], []>} : vector<16x64xf32>, vector<64x256xf32>, vector<16x256xf32> -> vector<16x256xf32>
    %25 = arith.addf %20, %24 : vector<16x256xf32>
    %c4 = arith.constant 4 : index
    %c0_28 = arith.constant 0 : index
    %26 = vector.load %arg13[%c4, %c0_28] : memref<20x64xf32, #tpu.memory_space<vmem>>, vector<16x64xf32>
    %c4_29 = arith.constant 4 : index
    %c0_30 = arith.constant 0 : index
    %c0_31 = arith.constant 0 : index
    %27 = vector.load %arg2[%c4_29, %c0_30, %c0_31] : memref<5x64x256xf32, #tpu.memory_space<vmem>>, vector<1x64x256xf32>
    %28 = vector.shape_cast %27 : vector<1x64x256xf32> to vector<64x256xf32>
    %cst_32 = arith.constant dense<0.000000e+00> : vector<16x256xf32>
    %29 = tpu.matmul %26, %28, %cst_32 {dimension_numbers = #tpu.dot_dimension_numbers<[1], [0], [0], [1], [0, 0, 1, 1], [], []>} : vector<16x64xf32>, vector<64x256xf32>, vector<16x256xf32> -> vector<16x256xf32>
    %30 = arith.addf %25, %29 : vector<16x256xf32>
    %c0_33 = arith.constant 0 : index
    %c0_34 = arith.constant 0 : index
    %31 = vector.load %arg3[%c0_33, %c0_34] : memref<1x256xf32, #tpu.memory_space<vmem>>, vector<1x256xf32>
    %32 = vector.broadcast %31 : vector<1x256xf32> to vector<16x256xf32>
    %33 = arith.addf %30, %32 : vector<16x256xf32>
    %cst_35 = arith.constant 0.000000e+00 : f32
    %34 = vector.broadcast %cst_35 : f32 to vector<16x256xf32>
    %35 = arith.maximumf %33, %34 : vector<16x256xf32>
    %36 = vector.shape_cast %35 : vector<16x256xf32> to vector<8x2x256xf32>
    %cst_36 = arith.constant dense<0xFF800000> : vector<8x256xf32>
    %37 = vector.multi_reduction <maximumf>, %36, %cst_36 [1] : vector<8x2x256xf32> to vector<8x256xf32>
    %c0_37 = arith.constant 0 : index
    %c0_38 = arith.constant 0 : index
    %38 = vector.load %arg4[%c0_37, %c0_38] : memref<256x128xf32, #tpu.memory_space<vmem>>, vector<256x128xf32>
    %cst_39 = arith.constant dense<0.000000e+00> : vector<8x128xf32>
    %39 = tpu.matmul %37, %38, %cst_39 {dimension_numbers = #tpu.dot_dimension_numbers<[1], [0], [0], [1], [0, 0, 1, 1], [], []>} : vector<8x256xf32>, vector<256x128xf32>, vector<8x128xf32> -> vector<8x128xf32>
    %c0_40 = arith.constant 0 : index
    %c0_41 = arith.constant 0 : index
    %40 = vector.load %arg5[%c0_40, %c0_41] : memref<256x128xf32, #tpu.memory_space<vmem>>, vector<256x128xf32>
    %cst_42 = arith.constant dense<0.000000e+00> : vector<8x128xf32>
    %41 = tpu.matmul %37, %40, %cst_42 {dimension_numbers = #tpu.dot_dimension_numbers<[1], [0], [0], [1], [0, 0, 1, 1], [], []>} : vector<8x256xf32>, vector<256x128xf32>, vector<8x128xf32> -> vector<8x128xf32>
    %42 = arith.maximumf %39, %41 : vector<8x128xf32>
    %cst_43 = arith.constant 0.000000e+00 : f32
    %43 = vector.broadcast %cst_43 : f32 to vector<12x128xf32>
    %c0_44 = arith.constant 0 : index
    %c0_45 = arith.constant 0 : index
    %44 = vector.load %arg14[%c0_44, %c0_45] : memref<12x128xf32, #tpu.memory_space<vmem>>, vector<12x128xf32>
    tpu.vector_store %arg14[%c0_44, %c0_45], %43 {strides = array<i32>} : memref<12x128xf32, #tpu.memory_space<vmem>>, vector<12x128xf32>,
    %c2_46 = arith.constant 2 : index
    %c0_47 = arith.constant 0 : index
    %45 = vector.load %arg14[%c2_46, %c0_47] : memref<12x128xf32, #tpu.memory_space<vmem>>, vector<8x128xf32>
    tpu.vector_store %arg14[%c2_46, %c0_47], %42 {strides = array<i32>} : memref<12x128xf32, #tpu.memory_space<vmem>>, vector<8x128xf32>,
    %cst_48 = arith.constant 0.000000e+00 : f32
    %46 = vector.broadcast %cst_48 : f32 to vector<8x256xf32>
    %c0_49 = arith.constant 0 : index
    %c0_50 = arith.constant 0 : index
    %47 = vector.load %arg14[%c0_49, %c0_50] : memref<12x128xf32, #tpu.memory_space<vmem>>, vector<8x128xf32>
    %c0_51 = arith.constant 0 : index
    %c0_52 = arith.constant 0 : index
    %c0_53 = arith.constant 0 : index
    %48 = vector.load %arg6[%c0_51, %c0_52, %c0_53] : memref<5x128x256xf32, #tpu.memory_space<vmem>>, vector<1x128x256xf32>
    %49 = vector.shape_cast %48 : vector<1x128x256xf32> to vector<128x256xf32>
    %cst_54 = arith.constant dense<0.000000e+00> : vector<8x256xf32>
    %50 = tpu.matmul %47, %49, %cst_54 {dimension_numbers = #tpu.dot_dimension_numbers<[1], [0], [0], [1], [0, 0, 1, 1], [], []>} : vector<8x128xf32>, vector<128x256xf32>, vector<8x256xf32> -> vector<8x256xf32>
    %51 = arith.addf %46, %50 : vector<8x256xf32>
    %c1_55 = arith.constant 1 : index
    %c0_56 = arith.constant 0 : index
    %52 = vector.load %arg14[%c1_55, %c0_56] : memref<12x128xf32, #tpu.memory_space<vmem>>, vector<8x128xf32>
    %c1_57 = arith.constant 1 : index
    %c0_58 = arith.constant 0 : index
    %c0_59 = arith.constant 0 : index
    %53 = vector.load %arg6[%c1_57, %c0_58, %c0_59] : memref<5x128x256xf32, #tpu.memory_space<vmem>>, vector<1x128x256xf32>
    %54 = vector.shape_cast %53 : vector<1x128x256xf32> to vector<128x256xf32>
    %cst_60 = arith.constant dense<0.000000e+00> : vector<8x256xf32>
    %55 = tpu.matmul %52, %54, %cst_60 {dimension_numbers = #tpu.dot_dimension_numbers<[1], [0], [0], [1], [0, 0, 1, 1], [], []>} : vector<8x128xf32>, vector<128x256xf32>, vector<8x256xf32> -> vector<8x256xf32>
    %56 = arith.addf %51, %55 : vector<8x256xf32>
    %c2_61 = arith.constant 2 : index
    %c0_62 = arith.constant 0 : index
    %57 = vector.load %arg14[%c2_61, %c0_62] : memref<12x128xf32, #tpu.memory_space<vmem>>, vector<8x128xf32>
    %c2_63 = arith.constant 2 : index
    %c0_64 = arith.constant 0 : index
    %c0_65 = arith.constant 0 : index
    %58 = vector.load %arg6[%c2_63, %c0_64, %c0_65] : memref<5x128x256xf32, #tpu.memory_space<vmem>>, vector<1x128x256xf32>
    %59 = vector.shape_cast %58 : vector<1x128x256xf32> to vector<128x256xf32>
    %cst_66 = arith.constant dense<0.000000e+00> : vector<8x256xf32>
    %60 = tpu.matmul %57, %59, %cst_66 {dimension_numbers = #tpu.dot_dimension_numbers<[1], [0], [0], [1], [0, 0, 1, 1], [], []>} : vector<8x128xf32>, vector<128x256xf32>, vector<8x256xf32> -> vector<8x256xf32>
    %61 = arith.addf %56, %60 : vector<8x256xf32>
    %c3_67 = arith.constant 3 : index
    %c0_68 = arith.constant 0 : index
    %62 = vector.load %arg14[%c3_67, %c0_68] : memref<12x128xf32, #tpu.memory_space<vmem>>, vector<8x128xf32>
    %c3_69 = arith.constant 3 : index
    %c0_70 = arith.constant 0 : index
    %c0_71 = arith.constant 0 : index
    %63 = vector.load %arg6[%c3_69, %c0_70, %c0_71] : memref<5x128x256xf32, #tpu.memory_space<vmem>>, vector<1x128x256xf32>
    %64 = vector.shape_cast %63 : vector<1x128x256xf32> to vector<128x256xf32>
    %cst_72 = arith.constant dense<0.000000e+00> : vector<8x256xf32>
    %65 = tpu.matmul %62, %64, %cst_72 {dimension_numbers = #tpu.dot_dimension_numbers<[1], [0], [0], [1], [0, 0, 1, 1], [], []>} : vector<8x128xf32>, vector<128x256xf32>, vector<8x256xf32> -> vector<8x256xf32>
    %66 = arith.addf %61, %65 : vector<8x256xf32>
    %c4_73 = arith.constant 4 : index
    %c0_74 = arith.constant 0 : index
    %67 = vector.load %arg14[%c4_73, %c0_74] : memref<12x128xf32, #tpu.memory_space<vmem>>, vector<8x128xf32>
    %c4_75 = arith.constant 4 : index
    %c0_76 = arith.constant 0 : index
    %c0_77 = arith.constant 0 : index
    %68 = vector.load %arg6[%c4_75, %c0_76, %c0_77] : memref<5x128x256xf32, #tpu.memory_space<vmem>>, vector<1x128x256xf32>
    %69 = vector.shape_cast %68 : vector<1x128x256xf32> to vector<128x256xf32>
    %cst_78 = arith.constant dense<0.000000e+00> : vector<8x256xf32>
    %70 = tpu.matmul %67, %69, %cst_78 {dimension_numbers = #tpu.dot_dimension_numbers<[1], [0], [0], [1], [0, 0, 1, 1], [], []>} : vector<8x128xf32>, vector<128x256xf32>, vector<8x256xf32> -> vector<8x256xf32>
    %71 = arith.addf %66, %70 : vector<8x256xf32>
    %c0_79 = arith.constant 0 : index
    %c0_80 = arith.constant 0 : index
    %72 = vector.load %arg7[%c0_79, %c0_80] : memref<1x256xf32, #tpu.memory_space<vmem>>, vector<1x256xf32>
    %73 = vector.broadcast %72 : vector<1x256xf32> to vector<8x256xf32>
    %74 = arith.addf %71, %73 : vector<8x256xf32>
    %cst_81 = arith.constant 0.000000e+00 : f32
    %75 = vector.broadcast %cst_81 : f32 to vector<8x256xf32>
    %76 = arith.maximumf %74, %75 : vector<8x256xf32>
    %77 = vector.shape_cast %76 : vector<8x256xf32> to vector<4x2x256xf32>
    %cst_82 = arith.constant dense<0xFF800000> : vector<4x256xf32>
    %78 = vector.multi_reduction <maximumf>, %77, %cst_82 [1] : vector<4x2x256xf32> to vector<4x256xf32>
    %c0_83 = arith.constant 0 : index
    %c0_84 = arith.constant 0 : index
    %79 = vector.load %arg8[%c0_83, %c0_84] : memref<256x128xf32, #tpu.memory_space<vmem>>, vector<256x128xf32>
    %cst_85 = arith.constant dense<0.000000e+00> : vector<4x128xf32>
    %80 = tpu.matmul %78, %79, %cst_85 {dimension_numbers = #tpu.dot_dimension_numbers<[1], [0], [0], [1], [0, 0, 1, 1], [], []>} : vector<4x256xf32>, vector<256x128xf32>, vector<4x128xf32> -> vector<4x128xf32>
    %c0_86 = arith.constant 0 : index
    %c0_87 = arith.constant 0 : index
    %81 = vector.load %arg9[%c0_86, %c0_87] : memref<256x128xf32, #tpu.memory_space<vmem>>, vector<256x128xf32>
    %cst_88 = arith.constant dense<0.000000e+00> : vector<4x128xf32>
    %82 = tpu.matmul %78, %81, %cst_88 {dimension_numbers = #tpu.dot_dimension_numbers<[1], [0], [0], [1], [0, 0, 1, 1], [], []>} : vector<4x256xf32>, vector<256x128xf32>, vector<4x128xf32> -> vector<4x128xf32>
    %83 = arith.maximumf %80, %82 : vector<4x128xf32>
    %c0_89 = arith.constant 0 : index
    %c0_90 = arith.constant 0 : index
    %84 = vector.load %arg11[%c0_89, %c0_90] : memref<1x128xf32, #tpu.memory_space<vmem>>, vector<1x128xf32>
    %85 = vector.extract_strided_slice %83 {offsets = [0, 0], sizes = [1, 128], strides = [1, 1]} : vector<4x128xf32> to vector<1x128xf32>
    %c0_91 = arith.constant 0 : index
    %c0_92 = arith.constant 0 : index
    %c0_93 = arith.constant 0 : index
    %86 = vector.load %arg10[%c0_91, %c0_92, %c0_93] : memref<4x128x128xf32, #tpu.memory_space<vmem>>, vector<1x128x128xf32>
    %87 = vector.shape_cast %86 : vector<1x128x128xf32> to vector<128x128xf32>
    %cst_94 = arith.constant dense<0.000000e+00> : vector<1x128xf32>
    %88 = tpu.matmul %85, %87, %cst_94 {dimension_numbers = #tpu.dot_dimension_numbers<[1], [0], [0], [1], [0, 0, 1, 1], [], []>} : vector<1x128xf32>, vector<128x128xf32>, vector<1x128xf32> -> vector<1x128xf32>
    %89 = arith.addf %84, %88 : vector<1x128xf32>
    %90 = vector.extract_strided_slice %83 {offsets = [1, 0], sizes = [1, 128], strides = [1, 1]} : vector<4x128xf32> to vector<1x128xf32>
    %c1_95 = arith.constant 1 : index
    %c0_96 = arith.constant 0 : index
    %c0_97 = arith.constant 0 : index
    %91 = vector.load %arg10[%c1_95, %c0_96, %c0_97] : memref<4x128x128xf32, #tpu.memory_space<vmem>>, vector<1x128x128xf32>
    %92 = vector.shape_cast %91 : vector<1x128x128xf32> to vector<128x128xf32>
    %cst_98 = arith.constant dense<0.000000e+00> : vector<1x128xf32>
    %93 = tpu.matmul %90, %92, %cst_98 {dimension_numbers = #tpu.dot_dimension_numbers<[1], [0], [0], [1], [0, 0, 1, 1], [], []>} : vector<1x128xf32>, vector<128x128xf32>, vector<1x128xf32> -> vector<1x128xf32>
    %94 = arith.addf %89, %93 : vector<1x128xf32>
    %95 = vector.extract_strided_slice %83 {offsets = [2, 0], sizes = [1, 128], strides = [1, 1]} : vector<4x128xf32> to vector<1x128xf32>
    %c2_99 = arith.constant 2 : index
    %c0_100 = arith.constant 0 : index
    %c0_101 = arith.constant 0 : index
    %96 = vector.load %arg10[%c2_99, %c0_100, %c0_101] : memref<4x128x128xf32, #tpu.memory_space<vmem>>, vector<1x128x128xf32>
    %97 = vector.shape_cast %96 : vector<1x128x128xf32> to vector<128x128xf32>
    %cst_102 = arith.constant dense<0.000000e+00> : vector<1x128xf32>
    %98 = tpu.matmul %95, %97, %cst_102 {dimension_numbers = #tpu.dot_dimension_numbers<[1], [0], [0], [1], [0, 0, 1, 1], [], []>} : vector<1x128xf32>, vector<128x128xf32>, vector<1x128xf32> -> vector<1x128xf32>
    %99 = arith.addf %94, %98 : vector<1x128xf32>
    %100 = vector.extract_strided_slice %83 {offsets = [3, 0], sizes = [1, 128], strides = [1, 1]} : vector<4x128xf32> to vector<1x128xf32>
    %c3_103 = arith.constant 3 : index
    %c0_104 = arith.constant 0 : index
    %c0_105 = arith.constant 0 : index
    %101 = vector.load %arg10[%c3_103, %c0_104, %c0_105] : memref<4x128x128xf32, #tpu.memory_space<vmem>>, vector<1x128x128xf32>
    %102 = vector.shape_cast %101 : vector<1x128x128xf32> to vector<128x128xf32>
    %cst_106 = arith.constant dense<0.000000e+00> : vector<1x128xf32>
    %103 = tpu.matmul %100, %102, %cst_106 {dimension_numbers = #tpu.dot_dimension_numbers<[1], [0], [0], [1], [0, 0, 1, 1], [], []>} : vector<1x128xf32>, vector<128x128xf32>, vector<1x128xf32> -> vector<1x128xf32>
    %104 = arith.addf %99, %103 : vector<1x128xf32>
    %c0_107 = arith.constant 0 : index
    %c0_108 = arith.constant 0 : index
    %c0_109 = arith.constant 0 : index
    %105 = vector.load %arg12[%c0_107, %c0_108, %c0_109] : memref<1x1x128xf32, #tpu.memory_space<vmem>>, vector<1x1x128xf32>
    %106 = vector.shape_cast %105 : vector<1x1x128xf32> to vector<1x128xf32>
    %107 = vector.shape_cast %104 : vector<1x128xf32> to vector<1x1x128xf32>
    tpu.vector_store %arg12[%c0_107, %c0_108, %c0_109], %107 {strides = array<i32>} : memref<1x1x128xf32, #tpu.memory_space<vmem>>, vector<1x1x128xf32>,
    return
  }
  func.func @transform_0(%arg0: i32) -> (i32, i32, i32) {
    %c0_i32 = arith.constant 0 : i32
    %c0_i32_0 = arith.constant 0 : i32
    %c0_i32_1 = arith.constant 0 : i32
    return %arg0, %c0_i32, %c0_i32_0 : i32, i32, i32
  }
  func.func @transform_1(%arg0: i32) -> (i32, i32, i32) {
    %c0_i32 = arith.constant 0 : i32
    %c0_i32_0 = arith.constant 0 : i32
    %c0_i32_1 = arith.constant 0 : i32
    %c0_i32_2 = arith.constant 0 : i32
    return %c0_i32, %c0_i32_0, %c0_i32_1 : i32, i32, i32
  }
  func.func @transform_2(%arg0: i32) -> (i32, i32) {
    %c0_i32 = arith.constant 0 : i32
    %c0_i32_0 = arith.constant 0 : i32
    %c0_i32_1 = arith.constant 0 : i32
    return %c0_i32, %c0_i32_0 : i32, i32
  }
  func.func @transform_3(%arg0: i32) -> (i32, i32) {
    %c0_i32 = arith.constant 0 : i32
    %c0_i32_0 = arith.constant 0 : i32
    %c0_i32_1 = arith.constant 0 : i32
    return %c0_i32, %c0_i32_0 : i32, i32
  }
  func.func @transform_4(%arg0: i32) -> (i32, i32) {
    %c0_i32 = arith.constant 0 : i32
    %c0_i32_0 = arith.constant 0 : i32
    %c0_i32_1 = arith.constant 0 : i32
    return %c0_i32, %c0_i32_0 : i32, i32
  }
  func.func @transform_5(%arg0: i32) -> (i32, i32, i32) {
    %c0_i32 = arith.constant 0 : i32
    %c0_i32_0 = arith.constant 0 : i32
    %c0_i32_1 = arith.constant 0 : i32
    %c0_i32_2 = arith.constant 0 : i32
    return %c0_i32, %c0_i32_0, %c0_i32_1 : i32, i32, i32
  }
  func.func @transform_6(%arg0: i32) -> (i32, i32) {
    %c0_i32 = arith.constant 0 : i32
    %c0_i32_0 = arith.constant 0 : i32
    %c0_i32_1 = arith.constant 0 : i32
    return %c0_i32, %c0_i32_0 : i32, i32
  }
  func.func @transform_7(%arg0: i32) -> (i32, i32) {
    %c0_i32 = arith.constant 0 : i32
    %c0_i32_0 = arith.constant 0 : i32
    %c0_i32_1 = arith.constant 0 : i32
    return %c0_i32, %c0_i32_0 : i32, i32
  }
  func.func @transform_8(%arg0: i32) -> (i32, i32) {
    %c0_i32 = arith.constant 0 : i32
    %c0_i32_0 = arith.constant 0 : i32
    %c0_i32_1 = arith.constant 0 : i32
    return %c0_i32, %c0_i32_0 : i32, i32
  }
  func.func @transform_9(%arg0: i32) -> (i32, i32, i32) {
    %c0_i32 = arith.constant 0 : i32
    %c0_i32_0 = arith.constant 0 : i32
    %c0_i32_1 = arith.constant 0 : i32
    %c0_i32_2 = arith.constant 0 : i32
    return %c0_i32, %c0_i32_0, %c0_i32_1 : i32, i32, i32
  }
  func.func @transform_10(%arg0: i32) -> (i32, i32) {
    %c0_i32 = arith.constant 0 : i32
    %c0_i32_0 = arith.constant 0 : i32
    %c0_i32_1 = arith.constant 0 : i32
    return %c0_i32, %c0_i32_0 : i32, i32
  }
  func.func @transform_11(%arg0: i32) -> (i32, i32, i32) {
    %c0_i32 = arith.constant 0 : i32
    %c0_i32_0 = arith.constant 0 : i32
    %c0_i32_1 = arith.constant 0 : i32
    return %arg0, %c0_i32, %c0_i32_0 : i32, i32, i32
  }
}

</mosaic_0001>

<llo_original>
// kernel: convolutional_nn_forward.1
$region0: #{convolutional_nn_forward.1}
  #allocation0 [shape = 'u32[]', space=smem, size = 0x4, offset = 0x4, fixed_abs, tag = 'smem constant byte address 0x4 - core index']
  #allocation1 [shape = 'u32[144,128]{1,0:T(1,128)}', space=vmem, size = 0x12000, scoped, tag = 'internal scratch']
  #allocation2 [shape = 'f32[20,64]{1,0:T(8,128)}', space=vmem, size = 0x3000, scoped, tag = 'scratch operand']
  #allocation3 [shape = 'f32[12,128]{1,0:T(8,128)}', space=vmem, size = 0x2000, scoped, tag = 'scratch operand']
  %s0 = inlined_call_operand.vmem [shape: f32[2,16,64], index: 0, kind: input, shape index: {}]
  %s1 = inlined_call_operand.hbm [shape: f32[5,64,256], index: 1, kind: input, shape index: {}]
  %s2 = inlined_call_operand.vmem [shape: f32[1,256], index: 2, kind: input, shape index: {}]
  %s3 = inlined_call_operand.vmem [shape: f32[256,128], index: 3, kind: input, shape index: {}]
  %s4 = inlined_call_operand.hbm [shape: f32[256,128], index: 4, kind: input, shape index: {}]
  %s5 = inlined_call_operand.hbm [shape: f32[5,128,256], index: 5, kind: input, shape index: {}]
  %s6 = inlined_call_operand.vmem [shape: f32[1,256], index: 6, kind: input, shape index: {}]
  %s7 = inlined_call_operand.hbm [shape: f32[256,128], index: 7, kind: input, shape index: {}]
  %s8 = inlined_call_operand.hbm [shape: f32[256,128], index: 8, kind: input, shape index: {}]
  %s9 = inlined_call_operand.hbm [shape: f32[4,128,128], index: 9, kind: input, shape index: {}]
  %s10 = inlined_call_operand.vmem [shape: f32[1,128], index: 10, kind: input, shape index: {}]
  %s11 = inlined_call_operand.hbm [shape: f32[2,1,128], index: 11, kind: output, shape index: {}]
  %s12 = sld [smem:[#allocation0]]
  $region101: #{convolutional_nn_forward.1} parent=0
    _
  %s14 = ssub.s32 1, %s12
  %s15 = scalar_select 0, %s14, %s12
  $region1: #{convolutional_nn_forward.1} parent=0
    #allocation4 [shape = 'u8[327680]{0}', space=vmem, size = 0x50000, scoped, tag = 'input window, operand 1, single buffered']
    #allocation5 [shape = 's32[2]{0}', space=sflag, size = 0x8, scoped, tag = 'scoped memory for convolutional_nn_forward.1']
    #allocation6 [shape = 's32[2]{0}', space=sflag, size = 0x8, scoped, tag = 'scoped memory for convolutional_nn_forward.1']
    #allocation7 [shape = 'u8[131072]{0}', space=vmem, size = 0x20000, scoped, tag = 'input window, operand 4, single buffered']
    #allocation8 [shape = 's32[1]{0}', space=sflag, size = 0x4, scoped, tag = 'scoped memory for convolutional_nn_forward.1']
    #allocation9 [shape = 'u8[655360]{0}', space=vmem, size = 0xa0000, scoped, tag = 'input window, operand 5, single buffered']
    #allocation10 [shape = 'u8[131072]{0}', space=vmem, size = 0x20000, scoped, tag = 'input window, operand 7, single buffered']
    #allocation11 [shape = 's32[1]{0}', space=sflag, size = 0x4, scoped, tag = 'scoped memory for convolutional_nn_forward.1']
    #allocation12 [shape = 'u8[131072]{0}', space=vmem, size = 0x20000, scoped, tag = 'input window, operand 8, single buffered']
    #allocation13 [shape = 'u8[262144]{0}', space=vmem, size = 0x40000, scoped, tag = 'input window, operand 9, single buffered']
    #allocation14 [shape = 's32[1]{0}', space=sflag, size = 0x4, scoped, tag = 'scoped memory for convolutional_nn_forward.1']
    #allocation15 [shape = 'u8[1024]{0}', space=vmem, size = 0x400, scoped, tag = 'output window, operand 0']
    %16 = vsyncpa [#allocation5], 0
    %17 = vsyncpa [#allocation8], 0
    %18 = vsyncpa [#allocation11], 0
    %19 = vsyncpa [#allocation14], 0
    %20 = vsyncpa [#allocation6], 0
    %s21 = scalar_lea.sflag [#allocation6], 1
    %22 = vsyncpa %s21, 0
    loop: start=0, step=1, limit=4
    $region2: #{convolutional_nn_forward.1} parent=1 // loop_pre_header
      _
    $region3: #{convolutional_nn_forward.1} parent=1 // loop_header
      %s24 = sphi 0, %s28
      %p25 = scmp.ge.s32.totalorder %s24, 4
      %s34 = sphi 0, %s36
      %s37 = sphi 0, %s34
      %s38 = sphi 0, %s37
      %s54 = sphi 0, %s38
      %s58 = sphi 0, %s58
      %s60 = sphi 0, %s58
      %s61 = sphi 0, %s60
      %s75 = sphi 0, %s61
      %s79 = sphi 0, %s79
      %s81 = sphi 0, %s79
      %s82 = sphi 0, %s81
      %s96 = sphi 0, %s82
      %s100 = sphi 0, %s100
      %s102 = sphi 0, %s100
      %s103 = sphi 0, %s102
      %s117 = sphi 0, %s103
      %s121 = sphi 0, %s121
      %s123 = sphi 0, %s121
      %s124 = sphi 0, %s123
      %s138 = sphi 0, %s124
      %s142 = sphi 0, %s142
      %s144 = sphi 0, %s142
      %s145 = sphi 0, %s144
      %s159 = sphi 0, %s145
      %s163 = sphi 0, %s163
      %s165 = sphi 0, %s163
      %s166 = sphi 0, %s165
      %s180 = sphi 0, %s166
      %s184 = sphi 0, %s184
      %s186 = sphi 0, %s184
      %s187 = sphi 0, %s186
      %s201 = sphi 0, %s187
      %s205 = sphi 0, %s205
      %s207 = sphi 0, %s205
      %s208 = sphi 0, %s207
      %s222 = sphi 0, %s208
      %s226 = sphi 0, %s226
      %s228 = sphi 0, %s226
      %s229 = sphi 0, %s228
      %s243 = sphi 0, %s229
      %s247 = sphi 0, %s247
      %s249 = sphi 0, %s247
      %s250 = sphi 0, %s249
      %s264 = sphi 0, %s250
      %s270 = sphi 0, %s272
      %s273 = sphi 0, %s270
      %s274 = sphi 0, %s273
      %s290 = sphi 0, %s274
    $region4: #{convolutional_nn_forward.1} parent=1 // loop_header_branch
      %27 = sbr.rel (%p25) target = $region8
    $region5: #{convolutional_nn_forward.1} parent=1 // loop_body
      %s29 = ssub.s32 %s24, 1
      %s30 = ssub.s32 %s24, 2
      %s31 = sadd.s32 %s24, 1
      %s32 = ssub.s32 %s24, %s31
      %p33 = scmp.eq.s32.totalorder %s32, 0
      %s35 = sadd.s32 %s34, 1
      %s36 = scalar_select %p33, %s34, %s35
      %p39 = pneg %p33
      %p40 = scmp.eq.s32.totalorder %s24, 1
      %p41 = por %p39, %p40
      %p42 = scmp.ne.s32.totalorder %s34, %s37
      %p43 = scmp.eq.s32.totalorder %s24, 0
      %p44 = por %p42, %p43
      %p45 = scmp.ne.s32.totalorder %s34, %s37
      %p46 = scmp.eq.s32.totalorder %s29, 1
      %p47 = por %p45, %p46
      %p48 = scmp.ne.s32.totalorder %s37, %s38
      %p49 = scmp.eq.s32.totalorder %s29, 0
      %p50 = por %p48, %p49
      %p51 = scmp.ne.s32.totalorder %s37, %s38
      %p52 = scmp.eq.s32.totalorder %s30, 1
      %p53 = por %p51, %p52
      %p55 = scmp.ne.s32.totalorder %s38, %s54
      %p56 = scmp.eq.s32.totalorder %s30, 0
      %p57 = por %p55, %p56
      %s59 = sadd.s32 %s58, 1
      %p62 = scmp.eq.s32.totalorder %s24, 1
      %p63 = scmp.ne.s32.totalorder %s58, %s60
      %p64 = scmp.eq.s32.totalorder %s24, 0
      %p65 = por %p63, %p64
      %p66 = scmp.ne.s32.totalorder %s58, %s60
      %p67 = scmp.eq.s32.totalorder %s29, 1
      %p68 = por %p66, %p67
      %p69 = scmp.ne.s32.totalorder %s60, %s61
      %p70 = scmp.eq.s32.totalorder %s29, 0
      %p71 = por %p69, %p70
      %p72 = scmp.ne.s32.totalorder %s60, %s61
      %p73 = scmp.eq.s32.totalorder %s30, 1
      %p74 = por %p72, %p73
      %p76 = scmp.ne.s32.totalorder %s61, %s75
      %p77 = scmp.eq.s32.totalorder %s30, 0
      %p78 = por %p76, %p77
      %s80 = sadd.s32 %s79, 1
      %p83 = scmp.eq.s32.totalorder %s24, 1
      %p84 = scmp.ne.s32.totalorder %s79, %s81
      %p85 = scmp.eq.s32.totalorder %s24, 0
      %p86 = por %p84, %p85
      %p87 = scmp.ne.s32.totalorder %s79, %s81
      %p88 = scmp.eq.s32.totalorder %s29, 1
      %p89 = por %p87, %p88
      %p90 = scmp.ne.s32.totalorder %s81, %s82
      %p91 = scmp.eq.s32.totalorder %s29, 0
      %p92 = por %p90, %p91
      %p93 = scmp.ne.s32.totalorder %s81, %s82
      %p94 = scmp.eq.s32.totalorder %s30, 1
      %p95 = por %p93, %p94
      %p97 = scmp.ne.s32.totalorder %s82, %s96
      %p98 = scmp.eq.s32.totalorder %s30, 0
      %p99 = por %p97, %p98
      %s101 = sadd.s32 %s100, 1
      %p104 = scmp.eq.s32.totalorder %s24, 1
      %p105 = scmp.ne.s32.totalorder %s100, %s102
      %p106 = scmp.eq.s32.totalorder %s24, 0
      %p107 = por %p105, %p106
      %p108 = scmp.ne.s32.totalorder %s100, %s102
      %p109 = scmp.eq.s32.totalorder %s29, 1
      %p110 = por %p108, %p109
      %p111 = scmp.ne.s32.totalorder %s102, %s103
      %p112 = scmp.eq.s32.totalorder %s29, 0
      %p113 = por %p111, %p112
      %p114 = scmp.ne.s32.totalorder %s102, %s103
      %p115 = scmp.eq.s32.totalorder %s30, 1
      %p116 = por %p114, %p115
      %p118 = scmp.ne.s32.totalorder %s103, %s117
      %p119 = scmp.eq.s32.totalorder %s30, 0
      %p120 = por %p118, %p119
      %s122 = sadd.s32 %s121, 1
      %p125 = scmp.eq.s32.totalorder %s24, 1
      %p126 = scmp.ne.s32.totalorder %s121, %s123
      %p127 = scmp.eq.s32.totalorder %s24, 0
      %p128 = por %p126, %p127
      %p129 = scmp.ne.s32.totalorder %s121, %s123
      %p130 = scmp.eq.s32.totalorder %s29, 1
      %p131 = por %p129, %p130
      %p132 = scmp.ne.s32.totalorder %s123, %s124
      %p133 = scmp.eq.s32.totalorder %s29, 0
      %p134 = por %p132, %p133
      %p135 = scmp.ne.s32.totalorder %s123, %s124
      %p136 = scmp.eq.s32.totalorder %s30, 1
      %p137 = por %p135, %p136
      %p139 = scmp.ne.s32.totalorder %s124, %s138
      %p140 = scmp.eq.s32.totalorder %s30, 0
      %p141 = por %p139, %p140
      %s143 = sadd.s32 %s142, 1
      %p146 = scmp.eq.s32.totalorder %s24, 1
      %p147 = scmp.ne.s32.totalorder %s142, %s144
      %p148 = scmp.eq.s32.totalorder %s24, 0
      %p149 = por %p147, %p148
      %p150 = scmp.ne.s32.totalorder %s142, %s144
      %p151 = scmp.eq.s32.totalorder %s29, 1
      %p152 = por %p150, %p151
      %p153 = scmp.ne.s32.totalorder %s144, %s145
      %p154 = scmp.eq.s32.totalorder %s29, 0
      %p155 = por %p153, %p154
      %p156 = scmp.ne.s32.totalorder %s144, %s145
      %p157 = scmp.eq.s32.totalorder %s30, 1
      %p158 = por %p156, %p157
      %p160 = scmp.ne.s32.totalorder %s145, %s159
      %p161 = scmp.eq.s32.totalorder %s30, 0
      %p162 = por %p160, %p161
      %s164 = sadd.s32 %s163, 1
      %p167 = scmp.eq.s32.totalorder %s24, 1
      %p168 = scmp.ne.s32.totalorder %s163, %s165
      %p169 = scmp.eq.s32.totalorder %s24, 0
      %p170 = por %p168, %p169
      %p171 = scmp.ne.s32.totalorder %s163, %s165
      %p172 = scmp.eq.s32.totalorder %s29, 1
      %p173 = por %p171, %p172
      %p174 = scmp.ne.s32.totalorder %s165, %s166
      %p175 = scmp.eq.s32.totalorder %s29, 0
      %p176 = por %p174, %p175
      %p177 = scmp.ne.s32.totalorder %s165, %s166
      %p178 = scmp.eq.s32.totalorder %s30, 1
      %p179 = por %p177, %p178
      %p181 = scmp.ne.s32.totalorder %s166, %s180
      %p182 = scmp.eq.s32.totalorder %s30, 0
      %p183 = por %p181, %p182
      %s185 = sadd.s32 %s184, 1
      %p188 = scmp.eq.s32.totalorder %s24, 1
      %p189 = scmp.ne.s32.totalorder %s184, %s186
      %p190 = scmp.eq.s32.totalorder %s24, 0
      %p191 = por %p189, %p190
      %p192 = scmp.ne.s32.totalorder %s184, %s186
      %p193 = scmp.eq.s32.totalorder %s29, 1
      %p194 = por %p192, %p193
      %p195 = scmp.ne.s32.totalorder %s186, %s187
      %p196 = scmp.eq.s32.totalorder %s29, 0
      %p197 = por %p195, %p196
      %p198 = scmp.ne.s32.totalorder %s186, %s187
      %p199 = scmp.eq.s32.totalorder %s30, 1
      %p200 = por %p198, %p199
      %p202 = scmp.ne.s32.totalorder %s187, %s201
      %p203 = scmp.eq.s32.totalorder %s30, 0
      %p204 = por %p202, %p203
      %s206 = sadd.s32 %s205, 1
      %p209 = scmp.eq.s32.totalorder %s24, 1
      %p210 = scmp.ne.s32.totalorder %s205, %s207
      %p211 = scmp.eq.s32.totalorder %s24, 0
      %p212 = por %p210, %p211
      %p213 = scmp.ne.s32.totalorder %s205, %s207
      %p214 = scmp.eq.s32.totalorder %s29, 1
      %p215 = por %p213, %p214
      %p216 = scmp.ne.s32.totalorder %s207, %s208
      %p217 = scmp.eq.s32.totalorder %s29, 0
      %p218 = por %p216, %p217
      %p219 = scmp.ne.s32.totalorder %s207, %s208
      %p220 = scmp.eq.s32.totalorder %s30, 1
      %p221 = por %p219, %p220
      %p223 = scmp.ne.s32.totalorder %s208, %s222
      %p224 = scmp.eq.s32.totalorder %s30, 0
      %p225 = por %p223, %p224
      %s227 = sadd.s32 %s226, 1
      %p230 = scmp.eq.s32.totalorder %s24, 1
      %p231 = scmp.ne.s32.totalorder %s226, %s228
      %p232 = scmp.eq.s32.totalorder %s24, 0
      %p233 = por %p231, %p232
      %p234 = scmp.ne.s32.totalorder %s226, %s228
      %p235 = scmp.eq.s32.totalorder %s29, 1
      %p236 = por %p234, %p235
      %p237 = scmp.ne.s32.totalorder %s228, %s229
      %p238 = scmp.eq.s32.totalorder %s29, 0
      %p239 = por %p237, %p238
      %p240 = scmp.ne.s32.totalorder %s228, %s229
      %p241 = scmp.eq.s32.totalorder %s30, 1
      %p242 = por %p240, %p241
      %p244 = scmp.ne.s32.totalorder %s229, %s243
      %p245 = scmp.eq.s32.totalorder %s30, 0
      %p246 = por %p244, %p245
      %s248 = sadd.s32 %s247, 1
      %p251 = scmp.eq.s32.totalorder %s24, 1
      %p252 = scmp.ne.s32.totalorder %s247, %s249
      %p253 = scmp.eq.s32.totalorder %s24, 0
      %p254 = por %p252, %p253
      %p255 = scmp.ne.s32.totalorder %s247, %s249
      %p256 = scmp.eq.s32.totalorder %s29, 1
      %p257 = por %p255, %p256
      %p258 = scmp.ne.s32.totalorder %s249, %s250
      %p259 = scmp.eq.s32.totalorder %s29, 0
      %p260 = por %p258, %p259
      %p261 = scmp.ne.s32.totalorder %s249, %s250
      %p262 = scmp.eq.s32.totalorder %s30, 1
      %p263 = por %p261, %p262
      %p265 = scmp.ne.s32.totalorder %s250, %s264
      %p266 = scmp.eq.s32.totalorder %s30, 0
      %p267 = por %p265, %p266
      %s268 = ssub.s32 %s24, %s31
      %p269 = scmp.eq.s32.totalorder %s268, 0
      %s271 = sadd.s32 %s270, 1
      %s272 = scalar_select %p269, %s270, %s271
      %p275 = pneg %p269
      %p276 = scmp.eq.s32.totalorder %s24, 1
      %p277 = por %p275, %p276
      %p278 = scmp.ne.s32.totalorder %s270, %s273
      %p279 = scmp.eq.s32.totalorder %s24, 0
      %p280 = por %p278, %p279
      %p281 = scmp.ne.s32.totalorder %s270, %s273
      %p282 = scmp.eq.s32.totalorder %s29, 1
      %p283 = por %p281, %p282
      %p284 = scmp.ne.s32.totalorder %s273, %s274
      %p285 = scmp.eq.s32.totalorder %s29, 0
      %p286 = por %p284, %p285
      %p287 = scmp.ne.s32.totalorder %s273, %s274
      %p288 = scmp.eq.s32.totalorder %s30, 1
      %p289 = por %p287, %p288
      %p291 = scmp.ne.s32.totalorder %s274, %s290
      %p292 = scmp.eq.s32.totalorder %s30, 0
      %p293 = por %p291, %p292
      %p294 = scmp.le.s32.totalorder 1, %s24
      %p295 = scmp.lt.s32.totalorder %s24, 3
      %p296 = pnand %p294, %p295
      %p297 = pneg %p296
      // Predicated region
      $region9: #{convolutional_nn_forward.1} parent=5 // pred_check
        _
      $region10: #{convolutional_nn_forward.1} parent=5 // pred_check_branch
        %299 = sbr.rel (%p296) target = $region12
      $region11: #{convolutional_nn_forward.1} parent=5 // pred_region
        %s300 = ssub.s32 %s24, 1
        // Predicated region
        $region13: #{convolutional_nn_forward.1} parent=11 // pred_check
          %p301 = pneg %p71
        $region14: #{convolutional_nn_forward.1} parent=11 // pred_check_branch
          %303 = sbr.rel (%p301) target = $region16
        $region15: #{convolutional_nn_forward.1} parent=11 // pred_region
          %s305 = ssub.s32 10240, 10240
          %306 = vsyncadd [#allocation5], %s305
          %s307 = sshll.u32 [#allocation4], 4
          %s308 = int_to_ptr.vmem [resolvable:$true] %s307
          %313 = dma.hbm_to_vmem [thread:$0]  %s1, 10240, %s308, [#allocation5], 256, 256, 16
        $region16: #{convolutional_nn_forward.1} parent=11 // pred_fallthru
          _
        // Predicated region
        $region17: #{convolutional_nn_forward.1} parent=11 // pred_check
          %p314 = pneg %p92
        $region18: #{convolutional_nn_forward.1} parent=11 // pred_check_branch
          %316 = sbr.rel (%p314) target = $region20
        $region19: #{convolutional_nn_forward.1} parent=11 // pred_region
          _
        $region20: #{convolutional_nn_forward.1} parent=11 // pred_fallthru
          _
        // Predicated region
        $region21: #{convolutional_nn_forward.1} parent=11 // pred_check
          %p317 = pneg %p113
        $region22: #{convolutional_nn_forward.1} parent=11 // pred_check_branch
          %319 = sbr.rel (%p317) target = $region24
        $region23: #{convolutional_nn_forward.1} parent=11 // pred_region
          _
        $region24: #{convolutional_nn_forward.1} parent=11 // pred_fallthru
          _
        // Predicated region
        $region25: #{convolutional_nn_forward.1} parent=11 // pred_check
          %p320 = pneg %p134
        $region26: #{convolutional_nn_forward.1} parent=11 // pred_check_branch
          %322 = sbr.rel (%p320) target = $region28
        $region27: #{convolutional_nn_forward.1} parent=11 // pred_region
          %s324 = ssub.s32 4096, 4096
          %325 = vsyncadd [#allocation8], %s324
          %s326 = sshll.u32 [#allocation7], 4
          %s327 = int_to_ptr.vmem [resolvable:$true] %s326
          %332 = dma.hbm_to_vmem [thread:$0]  %s4, 4096, %s327, [#allocation8], 128, 128, 8
        $region28: #{convolutional_nn_forward.1} parent=11 // pred_fallthru
          _
        // Predicated region
        $region29: #{convolutional_nn_forward.1} parent=11 // pred_check
          %p333 = pneg %p155
        $region30: #{convolutional_nn_forward.1} parent=11 // pred_check_branch
          %335 = sbr.rel (%p333) target = $region32
        $region31: #{convolutional_nn_forward.1} parent=11 // pred_region
          %s337 = ssub.s32 20480, 20480
          %338 = vsyncadd [#allocation8], %s337
          %s339 = sshll.u32 [#allocation9], 4
          %s340 = int_to_ptr.vmem [resolvable:$true] %s339
          %345 = dma.hbm_to_vmem [thread:$0]  %s5, 20480, %s340, [#allocation8], 256, 256, 16
        $region32: #{convolutional_nn_forward.1} parent=11 // pred_fallthru
          _
        // Predicated region
        $region33: #{convolutional_nn_forward.1} parent=11 // pred_check
          %p346 = pneg %p176
        $region34: #{convolutional_nn_forward.1} parent=11 // pred_check_branch
          %348 = sbr.rel (%p346) target = $region36
        $region35: #{convolutional_nn_forward.1} parent=11 // pred_region
          _
        $region36: #{convolutional_nn_forward.1} parent=11 // pred_fallthru
          _
        // Predicated region
        $region37: #{convolutional_nn_forward.1} parent=11 // pred_check
          %p349 = pneg %p197
        $region38: #{convolutional_nn_forward.1} parent=11 // pred_check_branch
          %351 = sbr.rel (%p349) target = $region40
        $region39: #{convolutional_nn_forward.1} parent=11 // pred_region
          %s353 = ssub.s32 4096, 4096
          %354 = vsyncadd [#allocation11], %s353
          %s355 = sshll.u32 [#allocation10], 4
          %s356 = int_to_ptr.vmem [resolvable:$true] %s355
          %361 = dma.hbm_to_vmem [thread:$0]  %s7, 4096, %s356, [#allocation11], 128, 128, 8
        $region40: #{convolutional_nn_forward.1} parent=11 // pred_fallthru
          _
        // Predicated region
        $region41: #{convolutional_nn_forward.1} parent=11 // pred_check
          %p362 = pneg %p218
        $region42: #{convolutional_nn_forward.1} parent=11 // pred_check_branch
          %364 = sbr.rel (%p362) target = $region44
        $region43: #{convolutional_nn_forward.1} parent=11 // pred_region
          %s366 = ssub.s32 4096, 4096
          %367 = vsyncadd [#allocation11], %s366
          %s368 = sshll.u32 [#allocation12], 4
          %s369 = int_to_ptr.vmem [resolvable:$true] %s368
          %374 = dma.hbm_to_vmem [thread:$0]  %s8, 4096, %s369, [#allocation11], 128, 128, 8
        $region44: #{convolutional_nn_forward.1} parent=11 // pred_fallthru
          _
        // Predicated region
        $region45: #{convolutional_nn_forward.1} parent=11 // pred_check
          %p375 = pneg %p239
        $region46: #{convolutional_nn_forward.1} parent=11 // pred_check_branch
          %377 = sbr.rel (%p375) target = $region48
        $region47: #{convolutional_nn_forward.1} parent=11 // pred_region
          %s379 = ssub.s32 8192, 8192
          %380 = vsyncadd [#allocation14], %s379
          %s381 = sshll.u32 [#allocation13], 4
          %s382 = int_to_ptr.vmem [resolvable:$true] %s381
          %387 = dma.hbm_to_vmem [thread:$0]  %s9, 8192, %s382, [#allocation14], 128, 128, 8
        $region48: #{convolutional_nn_forward.1} parent=11 // pred_fallthru
          _
        // Predicated region
        $region49: #{convolutional_nn_forward.1} parent=11 // pred_check
          %p388 = pneg %p260
        $region50: #{convolutional_nn_forward.1} parent=11 // pred_check_branch
          %390 = sbr.rel (%p388) target = $region52
        $region51: #{convolutional_nn_forward.1} parent=11 // pred_region
          _
        $region52: #{convolutional_nn_forward.1} parent=11 // pred_fallthru
          _
      $region12: #{convolutional_nn_forward.1} parent=5 // pred_fallthru
        _
      %p391 = scmp.lt.s32.totalorder %s24, 2
      // Predicated region
      $region53: #{convolutional_nn_forward.1} parent=5 // pred_check
        %p392 = pneg %p391
      $region54: #{convolutional_nn_forward.1} parent=5 // pred_check_branch
        %394 = sbr.rel (%p392) target = $region56
      $region55: #{convolutional_nn_forward.1} parent=5 // pred_region
        // Predicated region
        $region57: #{convolutional_nn_forward.1} parent=55 // pred_check
          %p395 = pneg %p44
        $region58: #{convolutional_nn_forward.1} parent=55 // pred_check_branch
          %397 = sbr.rel (%p395) target = $region60
        $region59: #{convolutional_nn_forward.1} parent=55 // pred_region
          %p398 = scmp.lt.s32.totalorder %s24, 1
          %s399 = scalar_select %p398, %s24, 1
          %s400 = smul.addr %s399, 2
          %s401 = smul.addr %s400, 8
          %s402 = scalar_lea.vmem %s0, %s401
        $region60: #{convolutional_nn_forward.1} parent=55 // pred_fallthru
          _
      $region56: #{convolutional_nn_forward.1} parent=5 // pred_fallthru
        _
      %p403 = scmp.le.s32.totalorder 1, %s24
      %p404 = scmp.lt.s32.totalorder %s24, 3
      %p405 = pnand %p403, %p404
      %p406 = pneg %p405
      // Predicated region
      $region61: #{convolutional_nn_forward.1} parent=5 // pred_check
        _
      $region62: #{convolutional_nn_forward.1} parent=5 // pred_check_branch
        %408 = sbr.rel (%p405) target = $region64
      $region63: #{convolutional_nn_forward.1} parent=5 // pred_region
        %s409 = ssub.s32 %s24, 1
        // Predicated region
        $region65: #{convolutional_nn_forward.1} parent=63 // pred_check
          %p410 = pneg %p71
        $region66: #{convolutional_nn_forward.1} parent=63 // pred_check_branch
          %412 = sbr.rel (%p410) target = $region68
        $region67: #{convolutional_nn_forward.1} parent=63 // pred_region
          %413 = dma.done [#allocation5], 10240
        $region68: #{convolutional_nn_forward.1} parent=63 // pred_fallthru
          _
        // Predicated region
        $region69: #{convolutional_nn_forward.1} parent=63 // pred_check
          %p414 = pneg %p134
        $region70: #{convolutional_nn_forward.1} parent=63 // pred_check_branch
          %416 = sbr.rel (%p414) target = $region72
        $region71: #{convolutional_nn_forward.1} parent=63 // pred_region
          %417 = dma.done [#allocation8], 4096
        $region72: #{convolutional_nn_forward.1} parent=63 // pred_fallthru
          _
        // Predicated region
        $region73: #{convolutional_nn_forward.1} parent=63 // pred_check
          %p418 = pneg %p155
        $region74: #{convolutional_nn_forward.1} parent=63 // pred_check_branch
          %420 = sbr.rel (%p418) target = $region76
        $region75: #{convolutional_nn_forward.1} parent=63 // pred_region
          %421 = dma.done [#allocation8], 20480
        $region76: #{convolutional_nn_forward.1} parent=63 // pred_fallthru
          _
        // Predicated region
        $region77: #{convolutional_nn_forward.1} parent=63 // pred_check
          %p422 = pneg %p197
        $region78: #{convolutional_nn_forward.1} parent=63 // pred_check_branch
          %424 = sbr.rel (%p422) target = $region80
        $region79: #{convolutional_nn_forward.1} parent=63 // pred_region
          %425 = dma.done [#allocation11], 4096
        $region80: #{convolutional_nn_forward.1} parent=63 // pred_fallthru
          _
        // Predicated region
        $region81: #{convolutional_nn_forward.1} parent=63 // pred_check
          %p426 = pneg %p218
        $region82: #{convolutional_nn_forward.1} parent=63 // pred_check_branch
          %428 = sbr.rel (%p426) target = $region84
        $region83: #{convolutional_nn_forward.1} parent=63 // pred_region
          %429 = dma.done [#allocation11], 4096
        $region84: #{convolutional_nn_forward.1} parent=63 // pred_fallthru
          _
        // Predicated region
        $region85: #{convolutional_nn_forward.1} parent=63 // pred_check
          %p430 = pneg %p239
        $region86: #{convolutional_nn_forward.1} parent=63 // pred_check_branch
          %432 = sbr.rel (%p430) target = $region88
        $region87: #{convolutional_nn_forward.1} parent=63 // pred_region
          %433 = dma.done [#allocation14], 8192
        $region88: #{convolutional_nn_forward.1} parent=63 // pred_fallthru
          _
        %p434 = scmp.lt.s32.totalorder %s29, 1
        %s435 = scalar_select %p434, %s29, 1
        %s436 = smul.addr %s435, 2
        %s437 = smul.addr %s436, 8
        %s438 = scalar_lea.vmem %s0, %s437
        %p439 = pneg %p50
        %p440 = pneg %p47
        %p441 = pneg %p71
        %p442 = pneg %p68
        %p443 = pneg %p92
        %p444 = pneg %p89
        %p445 = pneg %p113
        %p446 = pneg %p110
        %p447 = pneg %p134
        %p448 = pneg %p131
        %p449 = pneg %p155
        %p450 = pneg %p152
        %p451 = pneg %p176
        %p452 = pneg %p173
        %p453 = pneg %p197
        %p454 = pneg %p194
        %p455 = pneg %p218
        %p456 = pneg %p215
        %p457 = pneg %p239
        %p458 = pneg %p236
        %p459 = pneg %p260
        %p460 = pneg %p257
        %p461 = pneg %p286
        %p462 = pneg %p283
        %s463 = sand.u32 %s273, 1
        %s464 = scalar_lea.sflag [#allocation6], %s463
        %s465 = sand.u32 %s273, 1
        %s466 = scalar_lea.vmem [#allocation15], %s465
        %p467 = scmp.lt.s32.totalorder %s29, 1
        %s468 = scalar_select %p467, %s29, 1
        %s469 = smul.addr %s468, 2
        %s470 = smul.addr %s469, 8
        %s471 = scalar_lea.vmem %s0, %s470
        %vm472 = vcmask 523264
        %473 = vst.msk [vmem:[#allocation2] sm:$0xff] %vm472, 0.0
        %474 = vst.msk [vmem:[#allocation2 + $0x8] sm:$0xff] %vm472, 0.0
        %vm475 = vcmask 519168
        %476 = vst.msk [vmem:[#allocation2 + $0x10] sm:$0xf] %vm475, 0.0
        %v477 = vld [vmem:[%s471] sm:$0xff]
        %v478 = vld [vmem:[%s471 + $0x8] sm:$0xff]
        %479 = vst.msk [vmem:[#allocation2 + $0x2] sm:$0xff] %vm472, %v477
        %480 = vst.msk [vmem:[#allocation2 + $0xa] sm:$0xff] %vm472, %v478
        %v481 = vld [vmem:[#allocation2] sm:$0xff]
        %v482 = vld [vmem:[#allocation2 + $0x8] sm:$0xff]
        %v483 = vld [vmem:[#allocation4] sm:$0xff]
        %v484 = vld [vmem:[#allocation4 + $0x8] sm:$0xff]
        %v485 = vld [vmem:[#allocation4 + $0x10] sm:$0xff]
        %v486 = vld [vmem:[#allocation4 + $0x18] sm:$0xff]
        %v487 = vld [vmem:[#allocation4 + $0x20] sm:$0xff]
        %v488 = vld [vmem:[#allocation4 + $0x28] sm:$0xff]
        %v489 = vld [vmem:[#allocation4 + $0x30] sm:$0xff]
        %v490 = vld [vmem:[#allocation4 + $0x38] sm:$0xff]
        %v491 = vld [vmem:[#allocation4 + $0x40] sm:$0xff]
        %v492 = vld [vmem:[#allocation4 + $0x48] sm:$0xff]
        %v493 = vld [vmem:[#allocation4 + $0x50] sm:$0xff]
        %v494 = vld [vmem:[#allocation4 + $0x58] sm:$0xff]
        %v495 = vld [vmem:[#allocation4 + $0x60] sm:$0xff]
        %v496 = vld [vmem:[#allocation4 + $0x68] sm:$0xff]
        %v497 = vld [vmem:[#allocation4 + $0x70] sm:$0xff]
        %v498 = vld [vmem:[#allocation4 + $0x78] sm:$0xff]
        %v499 = vld [vmem:[#allocation2 + $0x1] sm:$0xff]
        %v500 = vld [vmem:[#allocation2 + $0x9] sm:$0xff]
        %s501 = scalar_lea.vmem [#allocation4], 128
        %v502 = vld [vmem:[%s501] sm:$0xff]
        %v503 = vld [vmem:[%s501 + $0x8] sm:$0xff]
        %v504 = vld [vmem:[%s501 + $0x10] sm:$0xff]
        %v505 = vld [vmem:[%s501 + $0x18] sm:$0xff]
        %v506 = vld [vmem:[%s501 + $0x20] sm:$0xff]
        %v507 = vld [vmem:[%s501 + $0x28] sm:$0xff]
        %v508 = vld [vmem:[%s501 + $0x30] sm:$0xff]
        %v509 = vld [vmem:[%s501 + $0x38] sm:$0xff]
        %v510 = vld [vmem:[%s501 + $0x40] sm:$0xff]
        %v511 = vld [vmem:[%s501 + $0x48] sm:$0xff]
        %v512 = vld [vmem:[%s501 + $0x50] sm:$0xff]
        %v513 = vld [vmem:[%s501 + $0x58] sm:$0xff]
        %v514 = vld [vmem:[%s501 + $0x60] sm:$0xff]
        %v515 = vld [vmem:[%s501 + $0x68] sm:$0xff]
        %v516 = vld [vmem:[%s501 + $0x70] sm:$0xff]
        %v517 = vld [vmem:[%s501 + $0x78] sm:$0xff]
        %v519 = vsel %vm472, %v499, 0
        %v522 = vsel %vm472, %v500, 0
        %524 = vmatprep.subr.mxu0 0.0
        %525 = vmatpush1.msra.mxu0 0.0
        %526 = vmatprep.subr.mxu0 0.0
        %527 = vmatpush1.msra.mxu0 0.0
        %528 = vmatprep.subr.mxu0 0.0
        %529 = vmatpush1.msra.mxu0 0.0
        %530 = vmatprep.subr.mxu0 0.0
        %531 = vmatpush1.msra.mxu0 0.0
        %532 = vmatprep.subr.mxu0 0.0
        %533 = vmatpush1.msra.mxu0 0.0
        %534 = vmatprep.subr.mxu0 0.0
        %535 = vmatpush1.msra.mxu0 0.0
        %536 = vmatprep.subr.mxu0 0.0
        %537 = vmatpush1.msra.mxu0 0.0
        %538 = vmatprep.subr.mxu0 0.0
        %539 = vmatpush1.msra.mxu0 0.0
        %540 = vmatprep.subr.mxu0 %v517
        %541 = vmatpush1.msra.mxu0 %v516
        %542 = vmatprep.subr.mxu0 %v515
        %543 = vmatpush1.msra.mxu0 %v514
        %544 = vmatprep.subr.mxu0 %v513
        %545 = vmatpush1.msra.mxu0 %v512
        %546 = vmatprep.subr.mxu0 %v511
        %547 = vmatpush1.msra.mxu0 %v510
        %548 = vmatprep.subr.mxu0 %v509
        %549 = vmatpush1.msra.mxu0 %v508
        %550 = vmatprep.subr.mxu0 %v507
        %551 = vmatpush1.msra.mxu0 %v506
        %552 = vmatprep.subr.mxu0 %v505
        %553 = vmatpush1.msra.mxu0 %v504
        %554 = vmatprep.subr.mxu0 %v503
        %555 = vmatpush1.msra.mxu0 %v502
        %556 = vmatprep.subr.mxu0 0.0
        %557 = vmatpush2.msra.mxu0 0.0
        %558 = vmatprep.subr.mxu0 0.0
        %559 = vmatpush2.msra.mxu0 0.0
        %560 = vmatprep.subr.mxu0 0.0
        %561 = vmatpush2.msra.mxu0 0.0
        %562 = vmatprep.subr.mxu0 0.0
        %563 = vmatpush2.msra.mxu0 0.0
        %564 = vmatprep.subr.mxu0 0.0
        %565 = vmatpush2.msra.mxu0 0.0
        %566 = vmatprep.subr.mxu0 0.0
        %567 = vmatpush2.msra.mxu0 0.0
        %568 = vmatprep.subr.mxu0 0.0
        %569 = vmatpush2.msra.mxu0 0.0
        %570 = vmatprep.subr.mxu0 0.0
        %571 = vmatpush2.msra.mxu0 0.0
        %572 = vmatprep.subr.mxu0 0.0
        %573 = vmatpush2.msra.mxu0 0.0
        %574 = vmatprep.subr.mxu0 0.0
        %575 = vmatpush2.msra.mxu0 0.0
        %576 = vmatprep.subr.mxu0 0.0
        %577 = vmatpush2.msra.mxu0 0.0
        %578 = vmatprep.subr.mxu0 0.0
        %579 = vmatpush2.msra.mxu0 0.0
        %580 = vmatprep.subr.mxu0 0.0
        %581 = vmatpush2.msra.mxu0 0.0
        %582 = vmatprep.subr.mxu0 0.0
        %583 = vmatpush2.msra.mxu0 0.0
        %584 = vmatprep.subr.mxu0 0.0
        %585 = vmatpush2.msra.mxu0 0.0
        %586 = vmatprep.subr.mxu0 0.0
        %587 = vmatpush2.msra.mxu0 0.0
        %588 = vmatprep.mubr.f32.mxu0 0.0
        %589 = vmatmul.mubr.f32.gmra.mxu0 %v519
        %v590 = vpop.f32.mrf.mxu0
        %v591 = vadd.f32 0.0, %v590
        %v592 = vpop.f32.mrf.mxu0
        %v593 = vadd.f32 0.0, %v592
        %594 = vmatprep.mubr.f32.mxu0 0.0
        %595 = vmatmul.mubr.f32.gmra.mxu0 %v522
        %v596 = vpop.f32.mrf.mxu0
        %v597 = vadd.f32 0.0, %v596
        %v598 = vpop.f32.mrf.mxu0
        %v599 = vadd.f32 0.0, %v598
        %600 = vdwg.mxu0
        %v602 = vsel %vm472, %v481, 0
        %v605 = vsel %vm472, %v482, 0
        %607 = vmatprep.subr.mxu0 0.0
        %608 = vmatpush1.msra.mxu0 0.0
        %609 = vmatprep.subr.mxu0 0.0
        %610 = vmatpush1.msra.mxu0 0.0
        %611 = vmatprep.subr.mxu0 0.0
        %612 = vmatpush1.msra.mxu0 0.0
        %613 = vmatprep.subr.mxu0 0.0
        %614 = vmatpush1.msra.mxu0 0.0
        %615 = vmatprep.subr.mxu0 0.0
        %616 = vmatpush1.msra.mxu0 0.0
        %617 = vmatprep.subr.mxu0 0.0
        %618 = vmatpush1.msra.mxu0 0.0
        %619 = vmatprep.subr.mxu0 0.0
        %620 = vmatpush1.msra.mxu0 0.0
        %621 = vmatprep.subr.mxu0 0.0
        %622 = vmatpush1.msra.mxu0 0.0
        %623 = vmatprep.subr.mxu0 %v498
        %624 = vmatpush1.msra.mxu0 %v497
        %625 = vmatprep.subr.mxu0 %v496
        %626 = vmatpush1.msra.mxu0 %v495
        %627 = vmatprep.subr.mxu0 %v494
        %628 = vmatpush1.msra.mxu0 %v493
        %629 = vmatprep.subr.mxu0 %v492
        %630 = vmatpush1.msra.mxu0 %v491
        %631 = vmatprep.subr.mxu0 %v490
        %632 = vmatpush1.msra.mxu0 %v489
        %633 = vmatprep.subr.mxu0 %v488
        %634 = vmatpush1.msra.mxu0 %v487
        %635 = vmatprep.subr.mxu0 %v486
        %636 = vmatpush1.msra.mxu0 %v485
        %637 = vmatprep.subr.mxu0 %v484
        %638 = vmatpush1.msra.mxu0 %v483
        %639 = vmatprep.subr.mxu0 0.0
        %640 = vmatpush2.msra.mxu0 0.0
        %641 = vmatprep.subr.mxu0 0.0
        %642 = vmatpush2.msra.mxu0 0.0
        %643 = vmatprep.subr.mxu0 0.0
        %644 = vmatpush2.msra.mxu0 0.0
        %645 = vmatprep.subr.mxu0 0.0
        %646 = vmatpush2.msra.mxu0 0.0
        %647 = vmatprep.subr.mxu0 0.0
        %648 = vmatpush2.msra.mxu0 0.0
        %649 = vmatprep.subr.mxu0 0.0
        %650 = vmatpush2.msra.mxu0 0.0
        %651 = vmatprep.subr.mxu0 0.0
        %652 = vmatpush2.msra.mxu0 0.0
        %653 = vmatprep.subr.mxu0 0.0
        %654 = vmatpush2.msra.mxu0 0.0
        %655 = vmatprep.subr.mxu0 0.0
        %656 = vmatpush2.msra.mxu0 0.0
        %657 = vmatprep.subr.mxu0 0.0
        %658 = vmatpush2.msra.mxu0 0.0
        %659 = vmatprep.subr.mxu0 0.0
        %660 = vmatpush2.msra.mxu0 0.0
        %661 = vmatprep.subr.mxu0 0.0
        %662 = vmatpush2.msra.mxu0 0.0
        %663 = vmatprep.subr.mxu0 0.0
        %664 = vmatpush2.msra.mxu0 0.0
        %665 = vmatprep.subr.mxu0 0.0
        %666 = vmatpush2.msra.mxu0 0.0
        %667 = vmatprep.subr.mxu0 0.0
        %668 = vmatpush2.msra.mxu0 0.0
        %669 = vmatprep.subr.mxu0 0.0
        %670 = vmatpush2.msra.mxu0 0.0
        %671 = vmatprep.mubr.f32.mxu0 0.0
        %672 = vmatmul.mubr.f32.gmra.mxu0 %v602
        %v673 = vpop.f32.mrf.mxu0
        %v674 = vadd.f32 %v591, %v673
        %v675 = vpop.f32.mrf.mxu0
        %v676 = vadd.f32 %v593, %v675
        %677 = vmatprep.mubr.f32.mxu0 0.0
        %678 = vmatmul.mubr.f32.gmra.mxu0 %v605
        %v679 = vpop.f32.mrf.mxu0
        %v680 = vadd.f32 %v597, %v679
        %v681 = vpop.f32.mrf.mxu0
        %v682 = vadd.f32 %v599, %v681
        %683 = vdwg.mxu0
        %v684 = vld [vmem:[#allocation2 + $0x2] sm:$0xff]
        %v685 = vld [vmem:[#allocation2 + $0xa] sm:$0xff]
        %s686 = scalar_lea.vmem [#allocation4], 256
        %v687 = vld [vmem:[%s686] sm:$0xff]
        %v688 = vld [vmem:[%s686 + $0x8] sm:$0xff]
        %v689 = vld [vmem:[%s686 + $0x10] sm:$0xff]
        %v690 = vld [vmem:[%s686 + $0x18] sm:$0xff]
        %v691 = vld [vmem:[%s686 + $0x20] sm:$0xff]
        %v692 = vld [vmem:[%s686 + $0x28] sm:$0xff]
        %v693 = vld [vmem:[%s686 + $0x30] sm:$0xff]
        %v694 = vld [vmem:[%s686 + $0x38] sm:$0xff]
        %v695 = vld [vmem:[%s686 + $0x40] sm:$0xff]
        %v696 = vld [vmem:[%s686 + $0x48] sm:$0xff]
        %v697 = vld [vmem:[%s686 + $0x50] sm:$0xff]
        %v698 = vld [vmem:[%s686 + $0x58] sm:$0xff]
        %v699 = vld [vmem:[%s686 + $0x60] sm:$0xff]
        %v700 = vld [vmem:[%s686 + $0x68] sm:$0xff]
        %v701 = vld [vmem:[%s686 + $0x70] sm:$0xff]
        %v702 = vld [vmem:[%s686 + $0x78] sm:$0xff]
        %v704 = vsel %vm472, %v684, 0
        %v707 = vsel %vm472, %v685, 0
        %709 = vmatprep.subr.mxu0 0.0
        %710 = vmatpush1.msra.mxu0 0.0
        %711 = vmatprep.subr.mxu0 0.0
        %712 = vmatpush1.msra.mxu0 0.0
        %713 = vmatprep.subr.mxu0 0.0
        %714 = vmatpush1.msra.mxu0 0.0
        %715 = vmatprep.subr.mxu0 0.0
        %716 = vmatpush1.msra.mxu0 0.0
        %717 = vmatprep.subr.mxu0 0.0
        %718 = vmatpush1.msra.mxu0 0.0
        %719 = vmatprep.subr.mxu0 0.0
        %720 = vmatpush1.msra.mxu0 0.0
        %721 = vmatprep.subr.mxu0 0.0
        %722 = vmatpush1.msra.mxu0 0.0
        %723 = vmatprep.subr.mxu0 0.0
        %724 = vmatpush1.msra.mxu0 0.0
        %725 = vmatprep.subr.mxu0 %v702
        %726 = vmatpush1.msra.mxu0 %v701
        %727 = vmatprep.subr.mxu0 %v700
        %728 = vmatpush1.msra.mxu0 %v699
        %729 = vmatprep.subr.mxu0 %v698
        %730 = vmatpush1.msra.mxu0 %v697
        %731 = vmatprep.subr.mxu0 %v696
        %732 = vmatpush1.msra.mxu0 %v695
        %733 = vmatprep.subr.mxu0 %v694
        %734 = vmatpush1.msra.mxu0 %v693
        %735 = vmatprep.subr.mxu0 %v692
        %736 = vmatpush1.msra.mxu0 %v691
        %737 = vmatprep.subr.mxu0 %v690
        %738 = vmatpush1.msra.mxu0 %v689
        %739 = vmatprep.subr.mxu0 %v688
        %740 = vmatpush1.msra.mxu0 %v687
        %741 = vmatprep.subr.mxu0 0.0
        %742 = vmatpush2.msra.mxu0 0.0
        %743 = vmatprep.subr.mxu0 0.0
        %744 = vmatpush2.msra.mxu0 0.0
        %745 = vmatprep.subr.mxu0 0.0
        %746 = vmatpush2.msra.mxu0 0.0
        %747 = vmatprep.subr.mxu0 0.0
        %748 = vmatpush2.msra.mxu0 0.0
        %749 = vmatprep.subr.mxu0 0.0
        %750 = vmatpush2.msra.mxu0 0.0
        %751 = vmatprep.subr.mxu0 0.0
        %752 = vmatpush2.msra.mxu0 0.0
        %753 = vmatprep.subr.mxu0 0.0
        %754 = vmatpush2.msra.mxu0 0.0
        %755 = vmatprep.subr.mxu0 0.0
        %756 = vmatpush2.msra.mxu0 0.0
        %757 = vmatprep.subr.mxu0 0.0
        %758 = vmatpush2.msra.mxu0 0.0
        %759 = vmatprep.subr.mxu0 0.0
        %760 = vmatpush2.msra.mxu0 0.0
        %761 = vmatprep.subr.mxu0 0.0
        %762 = vmatpush2.msra.mxu0 0.0
        %763 = vmatprep.subr.mxu0 0.0
        %764 = vmatpush2.msra.mxu0 0.0
        %765 = vmatprep.subr.mxu0 0.0
        %766 = vmatpush2.msra.mxu0 0.0
        %767 = vmatprep.subr.mxu0 0.0
        %768 = vmatpush2.msra.mxu0 0.0
        %769 = vmatprep.subr.mxu0 0.0
        %770 = vmatpush2.msra.mxu0 0.0
        %771 = vmatprep.subr.mxu0 0.0
        %772 = vmatpush2.msra.mxu0 0.0
        %773 = vmatprep.mubr.f32.mxu0 0.0
        %774 = vmatmul.mubr.f32.gmra.mxu0 %v704
        %v775 = vpop.f32.mrf.mxu0
        %v776 = vadd.f32 0.0, %v775
        %v777 = vpop.f32.mrf.mxu0
        %v778 = vadd.f32 0.0, %v777
        %779 = vmatprep.mubr.f32.mxu0 0.0
        %780 = vmatmul.mubr.f32.gmra.mxu0 %v707
        %v781 = vpop.f32.mrf.mxu0
        %v782 = vadd.f32 0.0, %v781
        %v783 = vpop.f32.mrf.mxu0
        %v784 = vadd.f32 0.0, %v783
        %785 = vdwg.mxu0
        %v786 = vadd.f32 %v674, %v776
        %v787 = vadd.f32 %v676, %v778
        %v788 = vadd.f32 %v680, %v782
        %v789 = vadd.f32 %v682, %v784
        %v790 = vld [vmem:[#allocation2 + $0x3] sm:$0xff]
        %v791 = vld [vmem:[#allocation2 + $0xb] sm:$0xff]
        %s792 = scalar_lea.vmem [#allocation4], 384
        %v793 = vld [vmem:[%s792] sm:$0xff]
        %v794 = vld [vmem:[%s792 + $0x8] sm:$0xff]
        %v795 = vld [vmem:[%s792 + $0x10] sm:$0xff]
        %v796 = vld [vmem:[%s792 + $0x18] sm:$0xff]
        %v797 = vld [vmem:[%s792 + $0x20] sm:$0xff]
        %v798 = vld [vmem:[%s792 + $0x28] sm:$0xff]
        %v799 = vld [vmem:[%s792 + $0x30] sm:$0xff]
        %v800 = vld [vmem:[%s792 + $0x38] sm:$0xff]
        %v801 = vld [vmem:[%s792 + $0x40] sm:$0xff]
        %v802 = vld [vmem:[%s792 + $0x48] sm:$0xff]
        %v803 = vld [vmem:[%s792 + $0x50] sm:$0xff]
        %v804 = vld [vmem:[%s792 + $0x58] sm:$0xff]
        %v805 = vld [vmem:[%s792 + $0x60] sm:$0xff]
        %v806 = vld [vmem:[%s792 + $0x68] sm:$0xff]
        %v807 = vld [vmem:[%s792 + $0x70] sm:$0xff]
        %v808 = vld [vmem:[%s792 + $0x78] sm:$0xff]
        %v810 = vsel %vm472, %v790, 0
        %v813 = vsel %vm472, %v791, 0
        %815 = vmatprep.subr.mxu0 0.0
        %816 = vmatpush1.msra.mxu0 0.0
        %817 = vmatprep.subr.mxu0 0.0
        %818 = vmatpush1.msra.mxu0 0.0
        %819 = vmatprep.subr.mxu0 0.0
        %820 = vmatpush1.msra.mxu0 0.0
        %821 = vmatprep.subr.mxu0 0.0
        %822 = vmatpush1.msra.mxu0 0.0
        %823 = vmatprep.subr.mxu0 0.0
        %824 = vmatpush1.msra.mxu0 0.0
        %825 = vmatprep.subr.mxu0 0.0
        %826 = vmatpush1.msra.mxu0 0.0
        %827 = vmatprep.subr.mxu0 0.0
        %828 = vmatpush1.msra.mxu0 0.0
        %829 = vmatprep.subr.mxu0 0.0
        %830 = vmatpush1.msra.mxu0 0.0
        %831 = vmatprep.subr.mxu0 %v808
        %832 = vmatpush1.msra.mxu0 %v807
        %833 = vmatprep.subr.mxu0 %v806
        %834 = vmatpush1.msra.mxu0 %v805
        %835 = vmatprep.subr.mxu0 %v804
        %836 = vmatpush1.msra.mxu0 %v803
        %837 = vmatprep.subr.mxu0 %v802
        %838 = vmatpush1.msra.mxu0 %v801
        %839 = vmatprep.subr.mxu0 %v800
        %840 = vmatpush1.msra.mxu0 %v799
        %841 = vmatprep.subr.mxu0 %v798
        %842 = vmatpush1.msra.mxu0 %v797
        %843 = vmatprep.subr.mxu0 %v796
        %844 = vmatpush1.msra.mxu0 %v795
        %845 = vmatprep.subr.mxu0 %v794
        %846 = vmatpush1.msra.mxu0 %v793
        %847 = vmatprep.subr.mxu0 0.0
        %848 = vmatpush2.msra.mxu0 0.0
        %849 = vmatprep.subr.mxu0 0.0
        %850 = vmatpush2.msra.mxu0 0.0
        %851 = vmatprep.subr.mxu0 0.0
        %852 = vmatpush2.msra.mxu0 0.0
        %853 = vmatprep.subr.mxu0 0.0
        %854 = vmatpush2.msra.mxu0 0.0
        %855 = vmatprep.subr.mxu0 0.0
        %856 = vmatpush2.msra.mxu0 0.0
        %857 = vmatprep.subr.mxu0 0.0
        %858 = vmatpush2.msra.mxu0 0.0
        %859 = vmatprep.subr.mxu0 0.0
        %860 = vmatpush2.msra.mxu0 0.0
        %861 = vmatprep.subr.mxu0 0.0
        %862 = vmatpush2.msra.mxu0 0.0
        %863 = vmatprep.subr.mxu0 0.0
        %864 = vmatpush2.msra.mxu0 0.0
        %865 = vmatprep.subr.mxu0 0.0
        %866 = vmatpush2.msra.mxu0 0.0
        %867 = vmatprep.subr.mxu0 0.0
        %868 = vmatpush2.msra.mxu0 0.0
        %869 = vmatprep.subr.mxu0 0.0
        %870 = vmatpush2.msra.mxu0 0.0
        %871 = vmatprep.subr.mxu0 0.0
        %872 = vmatpush2.msra.mxu0 0.0
        %873 = vmatprep.subr.mxu0 0.0
        %874 = vmatpush2.msra.mxu0 0.0
        %875 = vmatprep.subr.mxu0 0.0
        %876 = vmatpush2.msra.mxu0 0.0
        %877 = vmatprep.subr.mxu0 0.0
        %878 = vmatpush2.msra.mxu0 0.0
        %879 = vmatprep.mubr.f32.mxu0 0.0
        %880 = vmatmul.mubr.f32.gmra.mxu0 %v810
        %v881 = vpop.f32.mrf.mxu0
        %v882 = vadd.f32 0.0, %v881
        %v883 = vpop.f32.mrf.mxu0
        %v884 = vadd.f32 0.0, %v883
        %885 = vmatprep.mubr.f32.mxu0 0.0
        %886 = vmatmul.mubr.f32.gmra.mxu0 %v813
        %v887 = vpop.f32.mrf.mxu0
        %v888 = vadd.f32 0.0, %v887
        %v889 = vpop.f32.mrf.mxu0
        %v890 = vadd.f32 0.0, %v889
        %891 = vdwg.mxu0
        %v892 = vadd.f32 %v786, %v882
        %v893 = vadd.f32 %v787, %v884
        %v894 = vadd.f32 %v788, %v888
        %v895 = vadd.f32 %v789, %v890
        %v896 = vld [vmem:[#allocation2 + $0x4] sm:$0xff]
        %v897 = vld [vmem:[#allocation2 + $0xc] sm:$0xff]
        %s898 = scalar_lea.vmem [#allocation4], 512
        %v899 = vld [vmem:[%s898] sm:$0xff]
        %v900 = vld [vmem:[%s898 + $0x8] sm:$0xff]
        %v901 = vld [vmem:[%s898 + $0x10] sm:$0xff]
        %v902 = vld [vmem:[%s898 + $0x18] sm:$0xff]
        %v903 = vld [vmem:[%s898 + $0x20] sm:$0xff]
        %v904 = vld [vmem:[%s898 + $0x28] sm:$0xff]
        %v905 = vld [vmem:[%s898 + $0x30] sm:$0xff]
        %v906 = vld [vmem:[%s898 + $0x38] sm:$0xff]
        %v907 = vld [vmem:[%s898 + $0x40] sm:$0xff]
        %v908 = vld [vmem:[%s898 + $0x48] sm:$0xff]
        %v909 = vld [vmem:[%s898 + $0x50] sm:$0xff]
        %v910 = vld [vmem:[%s898 + $0x58] sm:$0xff]
        %v911 = vld [vmem:[%s898 + $0x60] sm:$0xff]
        %v912 = vld [vmem:[%s898 + $0x68] sm:$0xff]
        %v913 = vld [vmem:[%s898 + $0x70] sm:$0xff]
        %v914 = vld [vmem:[%s898 + $0x78] sm:$0xff]
        %v916 = vsel %vm472, %v896, 0
        %v919 = vsel %vm472, %v897, 0
        %921 = vmatprep.subr.mxu0 0.0
        %922 = vmatpush1.msra.mxu0 0.0
        %923 = vmatprep.subr.mxu0 0.0
        %924 = vmatpush1.msra.mxu0 0.0
        %925 = vmatprep.subr.mxu0 0.0
        %926 = vmatpush1.msra.mxu0 0.0
        %927 = vmatprep.subr.mxu0 0.0
        %928 = vmatpush1.msra.mxu0 0.0
        %929 = vmatprep.subr.mxu0 0.0
        %930 = vmatpush1.msra.mxu0 0.0
        %931 = vmatprep.subr.mxu0 0.0
        %932 = vmatpush1.msra.mxu0 0.0
        %933 = vmatprep.subr.mxu0 0.0
        %934 = vmatpush1.msra.mxu0 0.0
        %935 = vmatprep.subr.mxu0 0.0
        %936 = vmatpush1.msra.mxu0 0.0
        %937 = vmatprep.subr.mxu0 %v914
        %938 = vmatpush1.msra.mxu0 %v913
        %939 = vmatprep.subr.mxu0 %v912
        %940 = vmatpush1.msra.mxu0 %v911
        %941 = vmatprep.subr.mxu0 %v910
        %942 = vmatpush1.msra.mxu0 %v909
        %943 = vmatprep.subr.mxu0 %v908
        %944 = vmatpush1.msra.mxu0 %v907
        %945 = vmatprep.subr.mxu0 %v906
        %946 = vmatpush1.msra.mxu0 %v905
        %947 = vmatprep.subr.mxu0 %v904
        %948 = vmatpush1.msra.mxu0 %v903
        %949 = vmatprep.subr.mxu0 %v902
        %950 = vmatpush1.msra.mxu0 %v901
        %951 = vmatprep.subr.mxu0 %v900
        %952 = vmatpush1.msra.mxu0 %v899
        %953 = vmatprep.subr.mxu0 0.0
        %954 = vmatpush2.msra.mxu0 0.0
        %955 = vmatprep.subr.mxu0 0.0
        %956 = vmatpush2.msra.mxu0 0.0
        %957 = vmatprep.subr.mxu0 0.0
        %958 = vmatpush2.msra.mxu0 0.0
        %959 = vmatprep.subr.mxu0 0.0
        %960 = vmatpush2.msra.mxu0 0.0
        %961 = vmatprep.subr.mxu0 0.0
        %962 = vmatpush2.msra.mxu0 0.0
        %963 = vmatprep.subr.mxu0 0.0
        %964 = vmatpush2.msra.mxu0 0.0
        %965 = vmatprep.subr.mxu0 0.0
        %966 = vmatpush2.msra.mxu0 0.0
        %967 = vmatprep.subr.mxu0 0.0
        %968 = vmatpush2.msra.mxu0 0.0
        %969 = vmatprep.subr.mxu0 0.0
        %970 = vmatpush2.msra.mxu0 0.0
        %971 = vmatprep.subr.mxu0 0.0
        %972 = vmatpush2.msra.mxu0 0.0
        %973 = vmatprep.subr.mxu0 0.0
        %974 = vmatpush2.msra.mxu0 0.0
        %975 = vmatprep.subr.mxu0 0.0
        %976 = vmatpush2.msra.mxu0 0.0
        %977 = vmatprep.subr.mxu0 0.0
        %978 = vmatpush2.msra.mxu0 0.0
        %979 = vmatprep.subr.mxu0 0.0
        %980 = vmatpush2.msra.mxu0 0.0
        %981 = vmatprep.subr.mxu0 0.0
        %982 = vmatpush2.msra.mxu0 0.0
        %983 = vmatprep.subr.mxu0 0.0
        %984 = vmatpush2.msra.mxu0 0.0
        %985 = vmatprep.mubr.f32.mxu0 0.0
        %986 = vmatmul.mubr.f32.gmra.mxu0 %v916
        %v987 = vpop.f32.mrf.mxu0
        %v988 = vadd.f32 0.0, %v987
        %v989 = vpop.f32.mrf.mxu0
        %v990 = vadd.f32 0.0, %v989
        %991 = vmatprep.mubr.f32.mxu0 0.0
        %992 = vmatmul.mubr.f32.gmra.mxu0 %v919
        %v993 = vpop.f32.mrf.mxu0
        %v994 = vadd.f32 0.0, %v993
        %v995 = vpop.f32.mrf.mxu0
        %v996 = vadd.f32 0.0, %v995
        %997 = vdwg.mxu0
        %v998 = vadd.f32 %v892, %v988
        %v999 = vadd.f32 %v893, %v990
        %v1000 = vadd.f32 %v894, %v994
        %v1001 = vadd.f32 %v895, %v996
        %v1002 = vld [vmem:[%s2] sm:$0x3]
        %v1004 = vlaneseq
        %v1005 = vshrl.u32 %v1004, 7
        %v1006 = vsub.s32 0, %v1005
        %v1007 = vrot.slane %v1002, %v1006
        %v1008 = vlaneseq
        %v1009 = vshrl.u32 %v1008, 7
        %v1010 = vsub.s32 1, %v1009
        %v1011 = vrot.slane %v1002, %v1010
        %v1014 = vadd.f32 %v998, %v1007
        %v1015 = vadd.f32 %v999, %v1011
        %v1016 = vadd.f32 %v1000, %v1007
        %v1017 = vadd.f32 %v1001, %v1011
        %v1018 = vmax.f32 %v1014, 0.0
        %v1019 = vmax.f32 %v1015, 0.0
        %v1020 = vmax.f32 %v1016, 0.0
        %v1021 = vmax.f32 %v1017, 0.0
        %v1026 = vcombine.low %v1018, %v1019
        %v1027 = vcombine.high %v1018, %v1019
        %v1029 = vunpack.c.l.s4 1983009808
        %v1030 = vunpack.c.0.s8 %v1029
        %v1031 = vlaneseq
        %v1032 = vshrl.u32 %v1031, 7
        %v1033 = vsub.s32 %v1030, %v1032
        %v1034 = vrot.slane %v1026, %v1033
        %v1036 = vunpack.c.l.s4 1983009808
        %v1037 = vunpack.c.0.s8 %v1036
        %v1038 = vlaneseq
        %v1039 = vshrl.u32 %v1038, 7
        %v1040 = vsub.s32 %v1037, %v1039
        %v1041 = vrot.slane %v1027, %v1040
        %v1042 = vcombine.high %v1034, %v1034
        %v1043 = vcombine.high %v1041, %v1041
        %v1044 = vcombine.low %v1020, %v1021
        %v1045 = vcombine.high %v1020, %v1021
        %v1047 = vunpack.c.l.s4 1983009808
        %v1048 = vunpack.c.0.s8 %v1047
        %v1049 = vlaneseq
        %v1050 = vshrl.u32 %v1049, 7
        %v1051 = vsub.s32 %v1048, %v1050
        %v1052 = vrot.slane %v1044, %v1051
        %v1054 = vunpack.c.l.s4 1983009808
        %v1055 = vunpack.c.0.s8 %v1054
        %v1056 = vlaneseq
        %v1057 = vshrl.u32 %v1056, 7
        %v1058 = vsub.s32 %v1055, %v1057
        %v1059 = vrot.slane %v1045, %v1058
        %v1060 = vcombine.high %v1052, %v1052
        %v1061 = vcombine.high %v1059, %v1059
        %v1063 = vunpack.c.l.s4 1983009808
        %v1064 = vunpack.c.0.s8 %v1063
        %v1065 = vlaneseq
        %v1066 = vshrl.u32 %v1065, 7
        %v1067 = vsub.s32 %v1064, %v1066
        %v1068 = vrot.slane %v1034, %v1067
        %v1069 = vcombine.high %v1068, %v1068
        %v1071 = vunpack.c.l.s4 1983009808
        %v1072 = vunpack.c.0.s8 %v1071
        %v1073 = vlaneseq
        %v1074 = vshrl.u32 %v1073, 7
        %v1075 = vsub.s32 %v1072, %v1074
        %v1076 = vrot.slane %v1042, %v1075
        %v1077 = vcombine.high %v1076, %v1076
        %v1079 = vunpack.c.l.s4 1983009808
        %v1080 = vunpack.c.0.s8 %v1079
        %v1081 = vlaneseq
        %v1082 = vshrl.u32 %v1081, 7
        %v1083 = vsub.s32 %v1080, %v1082
        %v1084 = vrot.slane %v1041, %v1083
        %v1085 = vcombine.high %v1084, %v1084
        %v1087 = vunpack.c.l.s4 1983009808
        %v1088 = vunpack.c.0.s8 %v1087
        %v1089 = vlaneseq
        %v1090 = vshrl.u32 %v1089, 7
        %v1091 = vsub.s32 %v1088, %v1090
        %v1092 = vrot.slane %v1043, %v1091
        %v1093 = vcombine.high %v1092, %v1092
        %v1095 = vunpack.c.l.s4 1983009808
        %v1096 = vunpack.c.0.s8 %v1095
        %v1097 = vlaneseq
        %v1098 = vshrl.u32 %v1097, 7
        %v1099 = vsub.s32 %v1096, %v1098
        %v1100 = vrot.slane %v1052, %v1099
        %v1101 = vcombine.high %v1100, %v1100
        %v1103 = vunpack.c.l.s4 1983009808
        %v1104 = vunpack.c.0.s8 %v1103
        %v1105 = vlaneseq
        %v1106 = vshrl.u32 %v1105, 7
        %v1107 = vsub.s32 %v1104, %v1106
        %v1108 = vrot.slane %v1060, %v1107
        %v1109 = vcombine.high %v1108, %v1108
        %v1111 = vunpack.c.l.s4 1983009808
        %v1112 = vunpack.c.0.s8 %v1111
        %v1113 = vlaneseq
        %v1114 = vshrl.u32 %v1113, 7
        %v1115 = vsub.s32 %v1112, %v1114
        %v1116 = vrot.slane %v1059, %v1115
        %v1117 = vcombine.high %v1116, %v1116
        %v1119 = vunpack.c.l.s4 1983009808
        %v1120 = vunpack.c.0.s8 %v1119
        %v1121 = vlaneseq
        %v1122 = vshrl.u32 %v1121, 7
        %v1123 = vsub.s32 %v1120, %v1122
        %v1124 = vrot.slane %v1061, %v1123
        %v1125 = vcombine.high %v1124, %v1124
        %vm1142 = vcmask 1041408
        %v1143 = vsel %vm1142, %v1068, -inf
        %v1144 = vrot.slane %v1143, 4
        %v1145 = vmax.f32 %v1143, %v1144
        %v1146 = vrot.slane %v1145, 2
        %v1147 = vmax.f32 %v1145, %v1146
        %v1148 = vrot.slane %v1147, 1
        %v1149 = vmax.f32 %v1147, %v1148
        %v1150 = vsel %vm1142, %v1069, -inf
        %v1151 = vrot.slane %v1150, 4
        %v1152 = vmax.f32 %v1150, %v1151
        %v1153 = vrot.slane %v1152, 2
        %v1154 = vmax.f32 %v1152, %v1153
        %v1155 = vrot.slane %v1154, 1
        %v1156 = vmax.f32 %v1154, %v1155
        %v1157 = vsel %vm1142, %v1076, -inf
        %v1158 = vrot.slane %v1157, 4
        %v1159 = vmax.f32 %v1157, %v1158
        %v1160 = vrot.slane %v1159, 2
        %v1161 = vmax.f32 %v1159, %v1160
        %v1162 = vrot.slane %v1161, 1
        %v1163 = vmax.f32 %v1161, %v1162
        %v1164 = vsel %vm1142, %v1077, -inf
        %v1165 = vrot.slane %v1164, 4
        %v1166 = vmax.f32 %v1164, %v1165
        %v1167 = vrot.slane %v1166, 2
        %v1168 = vmax.f32 %v1166, %v1167
        %v1169 = vrot.slane %v1168, 1
        %v1170 = vmax.f32 %v1168, %v1169
        %v1171 = vsel %vm1142, %v1084, -inf
        %v1172 = vrot.slane %v1171, 4
        %v1173 = vmax.f32 %v1171, %v1172
        %v1174 = vrot.slane %v1173, 2
        %v1175 = vmax.f32 %v1173, %v1174
        %v1176 = vrot.slane %v1175, 1
        %v1177 = vmax.f32 %v1175, %v1176
        %v1178 = vsel %vm1142, %v1085, -inf
        %v1179 = vrot.slane %v1178, 4
        %v1180 = vmax.f32 %v1178, %v1179
        %v1181 = vrot.slane %v1180, 2
        %v1182 = vmax.f32 %v1180, %v1181
        %v1183 = vrot.slane %v1182, 1
        %v1184 = vmax.f32 %v1182, %v1183
        %v1185 = vsel %vm1142, %v1092, -inf
        %v1186 = vrot.slane %v1185, 4
        %v1187 = vmax.f32 %v1185, %v1186
        %v1188 = vrot.slane %v1187, 2
        %v1189 = vmax.f32 %v1187, %v1188
        %v1190 = vrot.slane %v1189, 1
        %v1191 = vmax.f32 %v1189, %v1190
        %v1192 = vsel %vm1142, %v1093, -inf
        %v1193 = vrot.slane %v1192, 4
        %v1194 = vmax.f32 %v1192, %v1193
        %v1195 = vrot.slane %v1194, 2
        %v1196 = vmax.f32 %v1194, %v1195
        %v1197 = vrot.slane %v1196, 1
        %v1198 = vmax.f32 %v1196, %v1197
        %v1199 = vsel %vm1142, %v1100, -inf
        %v1200 = vrot.slane %v1199, 4
        %v1201 = vmax.f32 %v1199, %v1200
        %v1202 = vrot.slane %v1201, 2
        %v1203 = vmax.f32 %v1201, %v1202
        %v1204 = vrot.slane %v1203, 1
        %v1205 = vmax.f32 %v1203, %v1204
        %v1206 = vsel %vm1142, %v1101, -inf
        %v1207 = vrot.slane %v1206, 4
        %v1208 = vmax.f32 %v1206, %v1207
        %v1209 = vrot.slane %v1208, 2
        %v1210 = vmax.f32 %v1208, %v1209
        %v1211 = vrot.slane %v1210, 1
        %v1212 = vmax.f32 %v1210, %v1211
        %v1213 = vsel %vm1142, %v1108, -inf
        %v1214 = vrot.slane %v1213, 4
        %v1215 = vmax.f32 %v1213, %v1214
        %v1216 = vrot.slane %v1215, 2
        %v1217 = vmax.f32 %v1215, %v1216
        %v1218 = vrot.slane %v1217, 1
        %v1219 = vmax.f32 %v1217, %v1218
        %v1220 = vsel %vm1142, %v1109, -inf
        %v1221 = vrot.slane %v1220, 4
        %v1222 = vmax.f32 %v1220, %v1221
        %v1223 = vrot.slane %v1222, 2
        %v1224 = vmax.f32 %v1222, %v1223
        %v1225 = vrot.slane %v1224, 1
        %v1226 = vmax.f32 %v1224, %v1225
        %v1227 = vsel %vm1142, %v1116, -inf
        %v1228 = vrot.slane %v1227, 4
        %v1229 = vmax.f32 %v1227, %v1228
        %v1230 = vrot.slane %v1229, 2
        %v1231 = vmax.f32 %v1229, %v1230
        %v1232 = vrot.slane %v1231, 1
        %v1233 = vmax.f32 %v1231, %v1232
        %v1234 = vsel %vm1142, %v1117, -inf
        %v1235 = vrot.slane %v1234, 4
        %v1236 = vmax.f32 %v1234, %v1235
        %v1237 = vrot.slane %v1236, 2
        %v1238 = vmax.f32 %v1236, %v1237
        %v1239 = vrot.slane %v1238, 1
        %v1240 = vmax.f32 %v1238, %v1239
        %v1241 = vsel %vm1142, %v1124, -inf
        %v1242 = vrot.slane %v1241, 4
        %v1243 = vmax.f32 %v1241, %v1242
        %v1244 = vrot.slane %v1243, 2
        %v1245 = vmax.f32 %v1243, %v1244
        %v1246 = vrot.slane %v1245, 1
        %v1247 = vmax.f32 %v1245, %v1246
        %v1248 = vsel %vm1142, %v1125, -inf
        %v1249 = vrot.slane %v1248, 4
        %v1250 = vmax.f32 %v1248, %v1249
        %v1251 = vrot.slane %v1250, 2
        %v1252 = vmax.f32 %v1250, %v1251
        %v1253 = vrot.slane %v1252, 1
        %v1254 = vmax.f32 %v1252, %v1253
        %v1255 = vld [vmem:[%s3] sm:$0xff]
        %v1256 = vld [vmem:[%s3 + $0x8] sm:$0xff]
        %v1257 = vld [vmem:[%s3 + $0x10] sm:$0xff]
        %v1258 = vld [vmem:[%s3 + $0x18] sm:$0xff]
        %v1259 = vld [vmem:[%s3 + $0x20] sm:$0xff]
        %v1260 = vld [vmem:[%s3 + $0x28] sm:$0xff]
        %v1261 = vld [vmem:[%s3 + $0x30] sm:$0xff]
        %v1262 = vld [vmem:[%s3 + $0x38] sm:$0xff]
        %v1263 = vld [vmem:[%s3 + $0x40] sm:$0xff]
        %v1264 = vld [vmem:[%s3 + $0x48] sm:$0xff]
        %v1265 = vld [vmem:[%s3 + $0x50] sm:$0xff]
        %v1266 = vld [vmem:[%s3 + $0x58] sm:$0xff]
        %v1267 = vld [vmem:[%s3 + $0x60] sm:$0xff]
        %v1268 = vld [vmem:[%s3 + $0x68] sm:$0xff]
        %v1269 = vld [vmem:[%s3 + $0x70] sm:$0xff]
        %v1270 = vld [vmem:[%s3 + $0x78] sm:$0xff]
        %v1271 = vld [vmem:[%s3 + $0x80] sm:$0xff]
        %v1272 = vld [vmem:[%s3 + $0x88] sm:$0xff]
        %v1273 = vld [vmem:[%s3 + $0x90] sm:$0xff]
        %v1274 = vld [vmem:[%s3 + $0x98] sm:$0xff]
        %v1275 = vld [vmem:[%s3 + $0xa0] sm:$0xff]
        %v1276 = vld [vmem:[%s3 + $0xa8] sm:$0xff]
        %v1277 = vld [vmem:[%s3 + $0xb0] sm:$0xff]
        %v1278 = vld [vmem:[%s3 + $0xb8] sm:$0xff]
        %v1279 = vld [vmem:[%s3 + $0xc0] sm:$0xff]
        %v1280 = vld [vmem:[%s3 + $0xc8] sm:$0xff]
        %v1281 = vld [vmem:[%s3 + $0xd0] sm:$0xff]
        %v1282 = vld [vmem:[%s3 + $0xd8] sm:$0xff]
        %v1283 = vld [vmem:[%s3 + $0xe0] sm:$0xff]
        %v1284 = vld [vmem:[%s3 + $0xe8] sm:$0xff]
        %v1285 = vld [vmem:[%s3 + $0xf0] sm:$0xff]
        %v1286 = vld [vmem:[%s3 + $0xf8] sm:$0xff]
        %vm1303 = vcmask 1041409
        %v1304 = vsel %vm1303, %v1163, %v1149
        %vm1305 = vcmask 1042434
        %v1306 = vsel %vm1305, %v1177, %v1304
        %vm1307 = vcmask 1043459
        %v1308 = vsel %vm1307, %v1191, %v1306
        %vm1309 = vcmask 1044484
        %v1310 = vsel %vm1309, %v1205, %v1308
        %vm1311 = vcmask 1045509
        %v1312 = vsel %vm1311, %v1219, %v1310
        %vm1313 = vcmask 1046534
        %v1314 = vsel %vm1313, %v1233, %v1312
        %vm1315 = vcmask 1047559
        %v1316 = vsel %vm1315, %v1247, %v1314
        %v1317 = vsel %vm1303, %v1170, %v1156
        %v1318 = vsel %vm1305, %v1184, %v1317
        %v1319 = vsel %vm1307, %v1198, %v1318
        %v1320 = vsel %vm1309, %v1212, %v1319
        %v1321 = vsel %vm1311, %v1226, %v1320
        %v1322 = vsel %vm1313, %v1240, %v1321
        %v1323 = vsel %vm1315, %v1254, %v1322
        %1326 = vmatprep.subr.mxu0 0.0
        %1327 = vmatpush1.msra.mxu0 %v1270
        %1328 = vmatprep.subr.mxu0 0.0
        %1329 = vmatpush1.msra.mxu0 %v1269
        %1330 = vmatprep.subr.mxu0 0.0
        %1331 = vmatpush1.msra.mxu0 %v1268
        %1332 = vmatprep.subr.mxu0 0.0
        %1333 = vmatpush1.msra.mxu0 %v1267
        %1334 = vmatprep.subr.mxu0 0.0
        %1335 = vmatpush1.msra.mxu0 %v1266
        %1336 = vmatprep.subr.mxu0 0.0
        %1337 = vmatpush1.msra.mxu0 %v1265
        %1338 = vmatprep.subr.mxu0 0.0
        %1339 = vmatpush1.msra.mxu0 %v1264
        %1340 = vmatprep.subr.mxu0 0.0
        %1341 = vmatpush1.msra.mxu0 %v1263
        %1342 = vmatprep.subr.mxu0 0.0
        %1343 = vmatpush1.msra.mxu0 %v1262
        %1344 = vmatprep.subr.mxu0 0.0
        %1345 = vmatpush1.msra.mxu0 %v1261
        %1346 = vmatprep.subr.mxu0 0.0
        %1347 = vmatpush1.msra.mxu0 %v1260
        %1348 = vmatprep.subr.mxu0 0.0
        %1349 = vmatpush1.msra.mxu0 %v1259
        %1350 = vmatprep.subr.mxu0 0.0
        %1351 = vmatpush1.msra.mxu0 %v1258
        %1352 = vmatprep.subr.mxu0 0.0
        %1353 = vmatpush1.msra.mxu0 %v1257
        %1354 = vmatprep.subr.mxu0 0.0
        %1355 = vmatpush1.msra.mxu0 %v1256
        %1356 = vmatprep.subr.mxu0 0.0
        %1357 = vmatpush1.msra.mxu0 %v1255
        %1358 = vmatprep.subr.mxu0 0.0
        %1359 = vmatpush2.msra.mxu0 %v1286
        %1360 = vmatprep.subr.mxu0 0.0
        %1361 = vmatpush2.msra.mxu0 %v1285
        %1362 = vmatprep.subr.mxu0 0.0
        %1363 = vmatpush2.msra.mxu0 %v1284
        %1364 = vmatprep.subr.mxu0 0.0
        %1365 = vmatpush2.msra.mxu0 %v1283
        %1366 = vmatprep.subr.mxu0 0.0
        %1367 = vmatpush2.msra.mxu0 %v1282
        %1368 = vmatprep.subr.mxu0 0.0
        %1369 = vmatpush2.msra.mxu0 %v1281
        %1370 = vmatprep.subr.mxu0 0.0
        %1371 = vmatpush2.msra.mxu0 %v1280
        %1372 = vmatprep.subr.mxu0 0.0
        %1373 = vmatpush2.msra.mxu0 %v1279
        %1374 = vmatprep.subr.mxu0 0.0
        %1375 = vmatpush2.msra.mxu0 %v1278
        %1376 = vmatprep.subr.mxu0 0.0
        %1377 = vmatpush2.msra.mxu0 %v1277
        %1378 = vmatprep.subr.mxu0 0.0
        %1379 = vmatpush2.msra.mxu0 %v1276
        %1380 = vmatprep.subr.mxu0 0.0
        %1381 = vmatpush2.msra.mxu0 %v1275
        %1382 = vmatprep.subr.mxu0 0.0
        %1383 = vmatpush2.msra.mxu0 %v1274
        %1384 = vmatprep.subr.mxu0 0.0
        %1385 = vmatpush2.msra.mxu0 %v1273
        %1386 = vmatprep.subr.mxu0 0.0
        %1387 = vmatpush2.msra.mxu0 %v1272
        %1388 = vmatprep.subr.mxu0 0.0
        %1389 = vmatpush2.msra.mxu0 %v1271
        %1390 = vmatprep.mubr.f32.mxu0 %v1323
        %1391 = vmatmul.mubr.f32.gmra.mxu0 %v1316
        %v1392 = vpop.f32.mrf.mxu0
        %v1393 = vadd.f32 0.0, %v1392
        %v1394 = vpop.f32.mrf.mxu0
        %1395 = vdwg.mxu0
        %v1396 = vld [vmem:[#allocation7] sm:$0xff]
        %v1397 = vld [vmem:[#allocation7 + $0x8] sm:$0xff]
        %v1398 = vld [vmem:[#allocation7 + $0x10] sm:$0xff]
        %v1399 = vld [vmem:[#allocation7 + $0x18] sm:$0xff]
        %v1400 = vld [vmem:[#allocation7 + $0x20] sm:$0xff]
        %v1401 = vld [vmem:[#allocation7 + $0x28] sm:$0xff]
        %v1402 = vld [vmem:[#allocation7 + $0x30] sm:$0xff]
        %v1403 = vld [vmem:[#allocation7 + $0x38] sm:$0xff]
        %v1404 = vld [vmem:[#allocation7 + $0x40] sm:$0xff]
        %v1405 = vld [vmem:[#allocation7 + $0x48] sm:$0xff]
        %v1406 = vld [vmem:[#allocation7 + $0x50] sm:$0xff]
        %v1407 = vld [vmem:[#allocation7 + $0x58] sm:$0xff]
        %v1408 = vld [vmem:[#allocation7 + $0x60] sm:$0xff]
        %v1409 = vld [vmem:[#allocation7 + $0x68] sm:$0xff]
        %v1410 = vld [vmem:[#allocation7 + $0x70] sm:$0xff]
        %v1411 = vld [vmem:[#allocation7 + $0x78] sm:$0xff]
        %v1412 = vld [vmem:[#allocation7 + $0x80] sm:$0xff]
        %v1413 = vld [vmem:[#allocation7 + $0x88] sm:$0xff]
        %v1414 = vld [vmem:[#allocation7 + $0x90] sm:$0xff]
        %v1415 = vld [vmem:[#allocation7 + $0x98] sm:$0xff]
        %v1416 = vld [vmem:[#allocation7 + $0xa0] sm:$0xff]
        %v1417 = vld [vmem:[#allocation7 + $0xa8] sm:$0xff]
        %v1418 = vld [vmem:[#allocation7 + $0xb0] sm:$0xff]
        %v1419 = vld [vmem:[#allocation7 + $0xb8] sm:$0xff]
        %v1420 = vld [vmem:[#allocation7 + $0xc0] sm:$0xff]
        %v1421 = vld [vmem:[#allocation7 + $0xc8] sm:$0xff]
        %v1422 = vld [vmem:[#allocation7 + $0xd0] sm:$0xff]
        %v1423 = vld [vmem:[#allocation7 + $0xd8] sm:$0xff]
        %v1424 = vld [vmem:[#allocation7 + $0xe0] sm:$0xff]
        %v1425 = vld [vmem:[#allocation7 + $0xe8] sm:$0xff]
        %v1426 = vld [vmem:[#allocation7 + $0xf0] sm:$0xff]
        %v1427 = vld [vmem:[#allocation7 + $0xf8] sm:$0xff]
        %1428 = vmatprep.subr.mxu0 0.0
        %1429 = vmatpush1.msra.mxu0 %v1411
        %1430 = vmatprep.subr.mxu0 0.0
        %1431 = vmatpush1.msra.mxu0 %v1410
        %1432 = vmatprep.subr.mxu0 0.0
        %1433 = vmatpush1.msra.mxu0 %v1409
        %1434 = vmatprep.subr.mxu0 0.0
        %1435 = vmatpush1.msra.mxu0 %v1408
        %1436 = vmatprep.subr.mxu0 0.0
        %1437 = vmatpush1.msra.mxu0 %v1407
        %1438 = vmatprep.subr.mxu0 0.0
        %1439 = vmatpush1.msra.mxu0 %v1406
        %1440 = vmatprep.subr.mxu0 0.0
        %1441 = vmatpush1.msra.mxu0 %v1405
        %1442 = vmatprep.subr.mxu0 0.0
        %1443 = vmatpush1.msra.mxu0 %v1404
        %1444 = vmatprep.subr.mxu0 0.0
        %1445 = vmatpush1.msra.mxu0 %v1403
        %1446 = vmatprep.subr.mxu0 0.0
        %1447 = vmatpush1.msra.mxu0 %v1402
        %1448 = vmatprep.subr.mxu0 0.0
        %1449 = vmatpush1.msra.mxu0 %v1401
        %1450 = vmatprep.subr.mxu0 0.0
        %1451 = vmatpush1.msra.mxu0 %v1400
        %1452 = vmatprep.subr.mxu0 0.0
        %1453 = vmatpush1.msra.mxu0 %v1399
        %1454 = vmatprep.subr.mxu0 0.0
        %1455 = vmatpush1.msra.mxu0 %v1398
        %1456 = vmatprep.subr.mxu0 0.0
        %1457 = vmatpush1.msra.mxu0 %v1397
        %1458 = vmatprep.subr.mxu0 0.0
        %1459 = vmatpush1.msra.mxu0 %v1396
        %1460 = vmatprep.subr.mxu0 0.0
        %1461 = vmatpush2.msra.mxu0 %v1427
        %1462 = vmatprep.subr.mxu0 0.0
        %1463 = vmatpush2.msra.mxu0 %v1426
        %1464 = vmatprep.subr.mxu0 0.0
        %1465 = vmatpush2.msra.mxu0 %v1425
        %1466 = vmatprep.subr.mxu0 0.0
        %1467 = vmatpush2.msra.mxu0 %v1424
        %1468 = vmatprep.subr.mxu0 0.0
        %1469 = vmatpush2.msra.mxu0 %v1423
        %1470 = vmatprep.subr.mxu0 0.0
        %1471 = vmatpush2.msra.mxu0 %v1422
        %1472 = vmatprep.subr.mxu0 0.0
        %1473 = vmatpush2.msra.mxu0 %v1421
        %1474 = vmatprep.subr.mxu0 0.0
        %1475 = vmatpush2.msra.mxu0 %v1420
        %1476 = vmatprep.subr.mxu0 0.0
        %1477 = vmatpush2.msra.mxu0 %v1419
        %1478 = vmatprep.subr.mxu0 0.0
        %1479 = vmatpush2.msra.mxu0 %v1418
        %1480 = vmatprep.subr.mxu0 0.0
        %1481 = vmatpush2.msra.mxu0 %v1417
        %1482 = vmatprep.subr.mxu0 0.0
        %1483 = vmatpush2.msra.mxu0 %v1416
        %1484 = vmatprep.subr.mxu0 0.0
        %1485 = vmatpush2.msra.mxu0 %v1415
        %1486 = vmatprep.subr.mxu0 0.0
        %1487 = vmatpush2.msra.mxu0 %v1414
        %1488 = vmatprep.subr.mxu0 0.0
        %1489 = vmatpush2.msra.mxu0 %v1413
        %1490 = vmatprep.subr.mxu0 0.0
        %1491 = vmatpush2.msra.mxu0 %v1412
        %1492 = vmatprep.mubr.f32.mxu0 %v1323
        %1493 = vmatmul.mubr.f32.gmra.mxu0 %v1316
        %v1494 = vpop.f32.mrf.mxu0
        %v1495 = vadd.f32 0.0, %v1494
        %v1496 = vpop.f32.mrf.mxu0
        %1497 = vdwg.mxu0
        %v1498 = vmax.f32 %v1393, %v1495
        %1499 = vst [vmem:[#allocation3] sm:$0xff] 0.0
        %1500 = vst [vmem:[#allocation3 + $0x8] sm:$0xf] 0.0
        %1501 = vst [vmem:[#allocation3 + $0x2] sm:$0xff] %v1498
        %v1502 = vld [vmem:[#allocation3] sm:$0xff]
        %v1503 = vld [vmem:[#allocation9] sm:$0xff]
        %v1504 = vld [vmem:[#allocation9 + $0x8] sm:$0xff]
        %v1505 = vld [vmem:[#allocation9 + $0x10] sm:$0xff]
        %v1506 = vld [vmem:[#allocation9 + $0x18] sm:$0xff]
        %v1507 = vld [vmem:[#allocation9 + $0x20] sm:$0xff]
        %v1508 = vld [vmem:[#allocation9 + $0x28] sm:$0xff]
        %v1509 = vld [vmem:[#allocation9 + $0x30] sm:$0xff]
        %v1510 = vld [vmem:[#allocation9 + $0x38] sm:$0xff]
        %v1511 = vld [vmem:[#allocation9 + $0x40] sm:$0xff]
        %v1512 = vld [vmem:[#allocation9 + $0x48] sm:$0xff]
        %v1513 = vld [vmem:[#allocation9 + $0x50] sm:$0xff]
        %v1514 = vld [vmem:[#allocation9 + $0x58] sm:$0xff]
        %v1515 = vld [vmem:[#allocation9 + $0x60] sm:$0xff]
        %v1516 = vld [vmem:[#allocation9 + $0x68] sm:$0xff]
        %v1517 = vld [vmem:[#allocation9 + $0x70] sm:$0xff]
        %v1518 = vld [vmem:[#allocation9 + $0x78] sm:$0xff]
        %v1519 = vld [vmem:[#allocation9 + $0x80] sm:$0xff]
        %v1520 = vld [vmem:[#allocation9 + $0x88] sm:$0xff]
        %v1521 = vld [vmem:[#allocation9 + $0x90] sm:$0xff]
        %v1522 = vld [vmem:[#allocation9 + $0x98] sm:$0xff]
        %v1523 = vld [vmem:[#allocation9 + $0xa0] sm:$0xff]
        %v1524 = vld [vmem:[#allocation9 + $0xa8] sm:$0xff]
        %v1525 = vld [vmem:[#allocation9 + $0xb0] sm:$0xff]
        %v1526 = vld [vmem:[#allocation9 + $0xb8] sm:$0xff]
        %v1527 = vld [vmem:[#allocation9 + $0xc0] sm:$0xff]
        %v1528 = vld [vmem:[#allocation9 + $0xc8] sm:$0xff]
        %v1529 = vld [vmem:[#allocation9 + $0xd0] sm:$0xff]
        %v1530 = vld [vmem:[#allocation9 + $0xd8] sm:$0xff]
        %v1531 = vld [vmem:[#allocation9 + $0xe0] sm:$0xff]
        %v1532 = vld [vmem:[#allocation9 + $0xe8] sm:$0xff]
        %v1533 = vld [vmem:[#allocation9 + $0xf0] sm:$0xff]
        %v1534 = vld [vmem:[#allocation9 + $0xf8] sm:$0xff]
        %v1535 = vld [vmem:[#allocation3 + $0x1] sm:$0xff]
        %s1536 = scalar_lea.vmem [#allocation9], 256
        %v1537 = vld [vmem:[%s1536] sm:$0xff]
        %v1538 = vld [vmem:[%s1536 + $0x8] sm:$0xff]
        %v1539 = vld [vmem:[%s1536 + $0x10] sm:$0xff]
        %v1540 = vld [vmem:[%s1536 + $0x18] sm:$0xff]
        %v1541 = vld [vmem:[%s1536 + $0x20] sm:$0xff]
        %v1542 = vld [vmem:[%s1536 + $0x28] sm:$0xff]
        %v1543 = vld [vmem:[%s1536 + $0x30] sm:$0xff]
        %v1544 = vld [vmem:[%s1536 + $0x38] sm:$0xff]
        %v1545 = vld [vmem:[%s1536 + $0x40] sm:$0xff]
        %v1546 = vld [vmem:[%s1536 + $0x48] sm:$0xff]
        %v1547 = vld [vmem:[%s1536 + $0x50] sm:$0xff]
        %v1548 = vld [vmem:[%s1536 + $0x58] sm:$0xff]
        %v1549 = vld [vmem:[%s1536 + $0x60] sm:$0xff]
        %v1550 = vld [vmem:[%s1536 + $0x68] sm:$0xff]
        %v1551 = vld [vmem:[%s1536 + $0x70] sm:$0xff]
        %v1552 = vld [vmem:[%s1536 + $0x78] sm:$0xff]
        %v1553 = vld [vmem:[%s1536 + $0x80] sm:$0xff]
        %v1554 = vld [vmem:[%s1536 + $0x88] sm:$0xff]
        %v1555 = vld [vmem:[%s1536 + $0x90] sm:$0xff]
        %v1556 = vld [vmem:[%s1536 + $0x98] sm:$0xff]
        %v1557 = vld [vmem:[%s1536 + $0xa0] sm:$0xff]
        %v1558 = vld [vmem:[%s1536 + $0xa8] sm:$0xff]
        %v1559 = vld [vmem:[%s1536 + $0xb0] sm:$0xff]
        %v1560 = vld [vmem:[%s1536 + $0xb8] sm:$0xff]
        %v1561 = vld [vmem:[%s1536 + $0xc0] sm:$0xff]
        %v1562 = vld [vmem:[%s1536 + $0xc8] sm:$0xff]
        %v1563 = vld [vmem:[%s1536 + $0xd0] sm:$0xff]
        %v1564 = vld [vmem:[%s1536 + $0xd8] sm:$0xff]
        %v1565 = vld [vmem:[%s1536 + $0xe0] sm:$0xff]
        %v1566 = vld [vmem:[%s1536 + $0xe8] sm:$0xff]
        %v1567 = vld [vmem:[%s1536 + $0xf0] sm:$0xff]
        %v1568 = vld [vmem:[%s1536 + $0xf8] sm:$0xff]
        %1569 = vmatprep.subr.mxu0 %v1568
        %1570 = vmatpush1.msra.mxu0 %v1567
        %1571 = vmatprep.subr.mxu0 %v1566
        %1572 = vmatpush1.msra.mxu0 %v1565
        %1573 = vmatprep.subr.mxu0 %v1564
        %1574 = vmatpush1.msra.mxu0 %v1563
        %1575 = vmatprep.subr.mxu0 %v1562
        %1576 = vmatpush1.msra.mxu0 %v1561
        %1577 = vmatprep.subr.mxu0 %v1560
        %1578 = vmatpush1.msra.mxu0 %v1559
        %1579 = vmatprep.subr.mxu0 %v1558
        %1580 = vmatpush1.msra.mxu0 %v1557
        %1581 = vmatprep.subr.mxu0 %v1556
        %1582 = vmatpush1.msra.mxu0 %v1555
        %1583 = vmatprep.subr.mxu0 %v1554
        %1584 = vmatpush1.msra.mxu0 %v1553
        %1585 = vmatprep.subr.mxu0 %v1552
        %1586 = vmatpush1.msra.mxu0 %v1551
        %1587 = vmatprep.subr.mxu0 %v1550
        %1588 = vmatpush1.msra.mxu0 %v1549
        %1589 = vmatprep.subr.mxu0 %v1548
        %1590 = vmatpush1.msra.mxu0 %v1547
        %1591 = vmatprep.subr.mxu0 %v1546
        %1592 = vmatpush1.msra.mxu0 %v1545
        %1593 = vmatprep.subr.mxu0 %v1544
        %1594 = vmatpush1.msra.mxu0 %v1543
        %1595 = vmatprep.subr.mxu0 %v1542
        %1596 = vmatpush1.msra.mxu0 %v1541
        %1597 = vmatprep.subr.mxu0 %v1540
        %1598 = vmatpush1.msra.mxu0 %v1539
        %1599 = vmatprep.subr.mxu0 %v1538
        %1600 = vmatpush1.msra.mxu0 %v1537
        %1601 = vmatprep.subr.mxu0 0.0
        %1602 = vmatpush2.msra.mxu0 0.0
        %1603 = vmatprep.subr.mxu0 0.0
        %1604 = vmatpush2.msra.mxu0 0.0
        %1605 = vmatprep.subr.mxu0 0.0
        %1606 = vmatpush2.msra.mxu0 0.0
        %1607 = vmatprep.subr.mxu0 0.0
        %1608 = vmatpush2.msra.mxu0 0.0
        %1609 = vmatprep.subr.mxu0 0.0
        %1610 = vmatpush2.msra.mxu0 0.0
        %1611 = vmatprep.subr.mxu0 0.0
        %1612 = vmatpush2.msra.mxu0 0.0
        %1613 = vmatprep.subr.mxu0 0.0
        %1614 = vmatpush2.msra.mxu0 0.0
        %1615 = vmatprep.subr.mxu0 0.0
        %1616 = vmatpush2.msra.mxu0 0.0
        %1617 = vmatprep.subr.mxu0 0.0
        %1618 = vmatpush2.msra.mxu0 0.0
        %1619 = vmatprep.subr.mxu0 0.0
        %1620 = vmatpush2.msra.mxu0 0.0
        %1621 = vmatprep.subr.mxu0 0.0
        %1622 = vmatpush2.msra.mxu0 0.0
        %1623 = vmatprep.subr.mxu0 0.0
        %1624 = vmatpush2.msra.mxu0 0.0
        %1625 = vmatprep.subr.mxu0 0.0
        %1626 = vmatpush2.msra.mxu0 0.0
        %1627 = vmatprep.subr.mxu0 0.0
        %1628 = vmatpush2.msra.mxu0 0.0
        %1629 = vmatprep.subr.mxu0 0.0
        %1630 = vmatpush2.msra.mxu0 0.0
        %1631 = vmatprep.subr.mxu0 0.0
        %1632 = vmatpush2.msra.mxu0 0.0
        %1633 = vmatprep.mubr.f32.mxu0 0.0
        %1634 = vmatmul.mubr.f32.gmra.mxu0 %v1535
        %v1635 = vpop.f32.mrf.mxu0
        %v1636 = vadd.f32 0.0, %v1635
        %v1637 = vpop.f32.mrf.mxu0
        %v1638 = vadd.f32 0.0, %v1637
        %1639 = vdwg.mxu0
        %1640 = vmatprep.subr.mxu0 %v1534
        %1641 = vmatpush1.msra.mxu0 %v1533
        %1642 = vmatprep.subr.mxu0 %v1532
        %1643 = vmatpush1.msra.mxu0 %v1531
        %1644 = vmatprep.subr.mxu0 %v1530
        %1645 = vmatpush1.msra.mxu0 %v1529
        %1646 = vmatprep.subr.mxu0 %v1528
        %1647 = vmatpush1.msra.mxu0 %v1527
        %1648 = vmatprep.subr.mxu0 %v1526
        %1649 = vmatpush1.msra.mxu0 %v1525
        %1650 = vmatprep.subr.mxu0 %v1524
        %1651 = vmatpush1.msra.mxu0 %v1523
        %1652 = vmatprep.subr.mxu0 %v1522
        %1653 = vmatpush1.msra.mxu0 %v1521
        %1654 = vmatprep.subr.mxu0 %v1520
        %1655 = vmatpush1.msra.mxu0 %v1519
        %1656 = vmatprep.subr.mxu0 %v1518
        %1657 = vmatpush1.msra.mxu0 %v1517
        %1658 = vmatprep.subr.mxu0 %v1516
        %1659 = vmatpush1.msra.mxu0 %v1515
        %1660 = vmatprep.subr.mxu0 %v1514
        %1661 = vmatpush1.msra.mxu0 %v1513
        %1662 = vmatprep.subr.mxu0 %v1512
        %1663 = vmatpush1.msra.mxu0 %v1511
        %1664 = vmatprep.subr.mxu0 %v1510
        %1665 = vmatpush1.msra.mxu0 %v1509
        %1666 = vmatprep.subr.mxu0 %v1508
        %1667 = vmatpush1.msra.mxu0 %v1507
        %1668 = vmatprep.subr.mxu0 %v1506
        %1669 = vmatpush1.msra.mxu0 %v1505
        %1670 = vmatprep.subr.mxu0 %v1504
        %1671 = vmatpush1.msra.mxu0 %v1503
        %1672 = vmatprep.subr.mxu0 0.0
        %1673 = vmatpush2.msra.mxu0 0.0
        %1674 = vmatprep.subr.mxu0 0.0
        %1675 = vmatpush2.msra.mxu0 0.0
        %1676 = vmatprep.subr.mxu0 0.0
        %1677 = vmatpush2.msra.mxu0 0.0
        %1678 = vmatprep.subr.mxu0 0.0
        %1679 = vmatpush2.msra.mxu0 0.0
        %1680 = vmatprep.subr.mxu0 0.0
        %1681 = vmatpush2.msra.mxu0 0.0
        %1682 = vmatprep.subr.mxu0 0.0
        %1683 = vmatpush2.msra.mxu0 0.0
        %1684 = vmatprep.subr.mxu0 0.0
        %1685 = vmatpush2.msra.mxu0 0.0
        %1686 = vmatprep.subr.mxu0 0.0
        %1687 = vmatpush2.msra.mxu0 0.0
        %1688 = vmatprep.subr.mxu0 0.0
        %1689 = vmatpush2.msra.mxu0 0.0
        %1690 = vmatprep.subr.mxu0 0.0
        %1691 = vmatpush2.msra.mxu0 0.0
        %1692 = vmatprep.subr.mxu0 0.0
        %1693 = vmatpush2.msra.mxu0 0.0
        %1694 = vmatprep.subr.mxu0 0.0
        %1695 = vmatpush2.msra.mxu0 0.0
        %1696 = vmatprep.subr.mxu0 0.0
        %1697 = vmatpush2.msra.mxu0 0.0
        %1698 = vmatprep.subr.mxu0 0.0
        %1699 = vmatpush2.msra.mxu0 0.0
        %1700 = vmatprep.subr.mxu0 0.0
        %1701 = vmatpush2.msra.mxu0 0.0
        %1702 = vmatprep.subr.mxu0 0.0
        %1703 = vmatpush2.msra.mxu0 0.0
        %1704 = vmatprep.mubr.f32.mxu0 0.0
        %1705 = vmatmul.mubr.f32.gmra.mxu0 %v1502
        %v1706 = vpop.f32.mrf.mxu0
        %v1707 = vadd.f32 %v1636, %v1706
        %v1708 = vpop.f32.mrf.mxu0
        %v1709 = vadd.f32 %v1638, %v1708
        %1710 = vdwg.mxu0
        %v1711 = vld [vmem:[#allocation3 + $0x2] sm:$0xff]
        %s1712 = scalar_lea.vmem [#allocation9], 512
        %v1713 = vld [vmem:[%s1712] sm:$0xff]
        %v1714 = vld [vmem:[%s1712 + $0x8] sm:$0xff]
        %v1715 = vld [vmem:[%s1712 + $0x10] sm:$0xff]
        %v1716 = vld [vmem:[%s1712 + $0x18] sm:$0xff]
        %v1717 = vld [vmem:[%s1712 + $0x20] sm:$0xff]
        %v1718 = vld [vmem:[%s1712 + $0x28] sm:$0xff]
        %v1719 = vld [vmem:[%s1712 + $0x30] sm:$0xff]
        %v1720 = vld [vmem:[%s1712 + $0x38] sm:$0xff]
        %v1721 = vld [vmem:[%s1712 + $0x40] sm:$0xff]
        %v1722 = vld [vmem:[%s1712 + $0x48] sm:$0xff]
        %v1723 = vld [vmem:[%s1712 + $0x50] sm:$0xff]
        %v1724 = vld [vmem:[%s1712 + $0x58] sm:$0xff]
        %v1725 = vld [vmem:[%s1712 + $0x60] sm:$0xff]
        %v1726 = vld [vmem:[%s1712 + $0x68] sm:$0xff]
        %v1727 = vld [vmem:[%s1712 + $0x70] sm:$0xff]
        %v1728 = vld [vmem:[%s1712 + $0x78] sm:$0xff]
        %v1729 = vld [vmem:[%s1712 + $0x80] sm:$0xff]
        %v1730 = vld [vmem:[%s1712 + $0x88] sm:$0xff]
        %v1731 = vld [vmem:[%s1712 + $0x90] sm:$0xff]
        %v1732 = vld [vmem:[%s1712 + $0x98] sm:$0xff]
        %v1733 = vld [vmem:[%s1712 + $0xa0] sm:$0xff]
        %v1734 = vld [vmem:[%s1712 + $0xa8] sm:$0xff]
        %v1735 = vld [vmem:[%s1712 + $0xb0] sm:$0xff]
        %v1736 = vld [vmem:[%s1712 + $0xb8] sm:$0xff]
        %v1737 = vld [vmem:[%s1712 + $0xc0] sm:$0xff]
        %v1738 = vld [vmem:[%s1712 + $0xc8] sm:$0xff]
        %v1739 = vld [vmem:[%s1712 + $0xd0] sm:$0xff]
        %v1740 = vld [vmem:[%s1712 + $0xd8] sm:$0xff]
        %v1741 = vld [vmem:[%s1712 + $0xe0] sm:$0xff]
        %v1742 = vld [vmem:[%s1712 + $0xe8] sm:$0xff]
        %v1743 = vld [vmem:[%s1712 + $0xf0] sm:$0xff]
        %v1744 = vld [vmem:[%s1712 + $0xf8] sm:$0xff]
        %1745 = vmatprep.subr.mxu0 %v1744
        %1746 = vmatpush1.msra.mxu0 %v1743
        %1747 = vmatprep.subr.mxu0 %v1742
        %1748 = vmatpush1.msra.mxu0 %v1741
        %1749 = vmatprep.subr.mxu0 %v1740
        %1750 = vmatpush1.msra.mxu0 %v1739
        %1751 = vmatprep.subr.mxu0 %v1738
        %1752 = vmatpush1.msra.mxu0 %v1737
        %1753 = vmatprep.subr.mxu0 %v1736
        %1754 = vmatpush1.msra.mxu0 %v1735
        %1755 = vmatprep.subr.mxu0 %v1734
        %1756 = vmatpush1.msra.mxu0 %v1733
        %1757 = vmatprep.subr.mxu0 %v1732
        %1758 = vmatpush1.msra.mxu0 %v1731
        %1759 = vmatprep.subr.mxu0 %v1730
        %1760 = vmatpush1.msra.mxu0 %v1729
        %1761 = vmatprep.subr.mxu0 %v1728
        %1762 = vmatpush1.msra.mxu0 %v1727
        %1763 = vmatprep.subr.mxu0 %v1726
        %1764 = vmatpush1.msra.mxu0 %v1725
        %1765 = vmatprep.subr.mxu0 %v1724
        %1766 = vmatpush1.msra.mxu0 %v1723
        %1767 = vmatprep.subr.mxu0 %v1722
        %1768 = vmatpush1.msra.mxu0 %v1721
        %1769 = vmatprep.subr.mxu0 %v1720
        %1770 = vmatpush1.msra.mxu0 %v1719
        %1771 = vmatprep.subr.mxu0 %v1718
        %1772 = vmatpush1.msra.mxu0 %v1717
        %1773 = vmatprep.subr.mxu0 %v1716
        %1774 = vmatpush1.msra.mxu0 %v1715
        %1775 = vmatprep.subr.mxu0 %v1714
        %1776 = vmatpush1.msra.mxu0 %v1713
        %1777 = vmatprep.subr.mxu0 0.0
        %1778 = vmatpush2.msra.mxu0 0.0
        %1779 = vmatprep.subr.mxu0 0.0
        %1780 = vmatpush2.msra.mxu0 0.0
        %1781 = vmatprep.subr.mxu0 0.0
        %1782 = vmatpush2.msra.mxu0 0.0
        %1783 = vmatprep.subr.mxu0 0.0
        %1784 = vmatpush2.msra.mxu0 0.0
        %1785 = vmatprep.subr.mxu0 0.0
        %1786 = vmatpush2.msra.mxu0 0.0
        %1787 = vmatprep.subr.mxu0 0.0
        %1788 = vmatpush2.msra.mxu0 0.0
        %1789 = vmatprep.subr.mxu0 0.0
        %1790 = vmatpush2.msra.mxu0 0.0
        %1791 = vmatprep.subr.mxu0 0.0
        %1792 = vmatpush2.msra.mxu0 0.0
        %1793 = vmatprep.subr.mxu0 0.0
        %1794 = vmatpush2.msra.mxu0 0.0
        %1795 = vmatprep.subr.mxu0 0.0
        %1796 = vmatpush2.msra.mxu0 0.0
        %1797 = vmatprep.subr.mxu0 0.0
        %1798 = vmatpush2.msra.mxu0 0.0
        %1799 = vmatprep.subr.mxu0 0.0
        %1800 = vmatpush2.msra.mxu0 0.0
        %1801 = vmatprep.subr.mxu0 0.0
        %1802 = vmatpush2.msra.mxu0 0.0
        %1803 = vmatprep.subr.mxu0 0.0
        %1804 = vmatpush2.msra.mxu0 0.0
        %1805 = vmatprep.subr.mxu0 0.0
        %1806 = vmatpush2.msra.mxu0 0.0
        %1807 = vmatprep.subr.mxu0 0.0
        %1808 = vmatpush2.msra.mxu0 0.0
        %1809 = vmatprep.mubr.f32.mxu0 0.0
        %1810 = vmatmul.mubr.f32.gmra.mxu0 %v1711
        %v1811 = vpop.f32.mrf.mxu0
        %v1812 = vadd.f32 0.0, %v1811
        %v1813 = vpop.f32.mrf.mxu0
        %v1814 = vadd.f32 0.0, %v1813
        %1815 = vdwg.mxu0
        %v1816 = vadd.f32 %v1707, %v1812
        %v1817 = vadd.f32 %v1709, %v1814
        %v1818 = vld [vmem:[#allocation3 + $0x3] sm:$0xff]
        %s1819 = scalar_lea.vmem [#allocation9], 768
        %v1820 = vld [vmem:[%s1819] sm:$0xff]
        %v1821 = vld [vmem:[%s1819 + $0x8] sm:$0xff]
        %v1822 = vld [vmem:[%s1819 + $0x10] sm:$0xff]
        %v1823 = vld [vmem:[%s1819 + $0x18] sm:$0xff]
        %v1824 = vld [vmem:[%s1819 + $0x20] sm:$0xff]
        %v1825 = vld [vmem:[%s1819 + $0x28] sm:$0xff]
        %v1826 = vld [vmem:[%s1819 + $0x30] sm:$0xff]
        %v1827 = vld [vmem:[%s1819 + $0x38] sm:$0xff]
        %v1828 = vld [vmem:[%s1819 + $0x40] sm:$0xff]
        %v1829 = vld [vmem:[%s1819 + $0x48] sm:$0xff]
        %v1830 = vld [vmem:[%s1819 + $0x50] sm:$0xff]
        %v1831 = vld [vmem:[%s1819 + $0x58] sm:$0xff]
        %v1832 = vld [vmem:[%s1819 + $0x60] sm:$0xff]
        %v1833 = vld [vmem:[%s1819 + $0x68] sm:$0xff]
        %v1834 = vld [vmem:[%s1819 + $0x70] sm:$0xff]
        %v1835 = vld [vmem:[%s1819 + $0x78] sm:$0xff]
        %v1836 = vld [vmem:[%s1819 + $0x80] sm:$0xff]
        %v1837 = vld [vmem:[%s1819 + $0x88] sm:$0xff]
        %v1838 = vld [vmem:[%s1819 + $0x90] sm:$0xff]
        %v1839 = vld [vmem:[%s1819 + $0x98] sm:$0xff]
        %v1840 = vld [vmem:[%s1819 + $0xa0] sm:$0xff]
        %v1841 = vld [vmem:[%s1819 + $0xa8] sm:$0xff]
        %v1842 = vld [vmem:[%s1819 + $0xb0] sm:$0xff]
        %v1843 = vld [vmem:[%s1819 + $0xb8] sm:$0xff]
        %v1844 = vld [vmem:[%s1819 + $0xc0] sm:$0xff]
        %v1845 = vld [vmem:[%s1819 + $0xc8] sm:$0xff]
        %v1846 = vld [vmem:[%s1819 + $0xd0] sm:$0xff]
        %v1847 = vld [vmem:[%s1819 + $0xd8] sm:$0xff]
        %v1848 = vld [vmem:[%s1819 + $0xe0] sm:$0xff]
        %v1849 = vld [vmem:[%s1819 + $0xe8] sm:$0xff]
        %v1850 = vld [vmem:[%s1819 + $0xf0] sm:$0xff]
        %v1851 = vld [vmem:[%s1819 + $0xf8] sm:$0xff]
        %1852 = vmatprep.subr.mxu0 %v1851
        %1853 = vmatpush1.msra.mxu0 %v1850
        %1854 = vmatprep.subr.mxu0 %v1849
        %1855 = vmatpush1.msra.mxu0 %v1848
        %1856 = vmatprep.subr.mxu0 %v1847
        %1857 = vmatpush1.msra.mxu0 %v1846
        %1858 = vmatprep.subr.mxu0 %v1845
        %1859 = vmatpush1.msra.mxu0 %v1844
        %1860 = vmatprep.subr.mxu0 %v1843
        %1861 = vmatpush1.msra.mxu0 %v1842
        %1862 = vmatprep.subr.mxu0 %v1841
        %1863 = vmatpush1.msra.mxu0 %v1840
        %1864 = vmatprep.subr.mxu0 %v1839
        %1865 = vmatpush1.msra.mxu0 %v1838
        %1866 = vmatprep.subr.mxu0 %v1837
        %1867 = vmatpush1.msra.mxu0 %v1836
        %1868 = vmatprep.subr.mxu0 %v1835
        %1869 = vmatpush1.msra.mxu0 %v1834
        %1870 = vmatprep.subr.mxu0 %v1833
        %1871 = vmatpush1.msra.mxu0 %v1832
        %1872 = vmatprep.subr.mxu0 %v1831
        %1873 = vmatpush1.msra.mxu0 %v1830
        %1874 = vmatprep.subr.mxu0 %v1829
        %1875 = vmatpush1.msra.mxu0 %v1828
        %1876 = vmatprep.subr.mxu0 %v1827
        %1877 = vmatpush1.msra.mxu0 %v1826
        %1878 = vmatprep.subr.mxu0 %v1825
        %1879 = vmatpush1.msra.mxu0 %v1824
        %1880 = vmatprep.subr.mxu0 %v1823
        %1881 = vmatpush1.msra.mxu0 %v1822
        %1882 = vmatprep.subr.mxu0 %v1821
        %1883 = vmatpush1.msra.mxu0 %v1820
        %1884 = vmatprep.subr.mxu0 0.0
        %1885 = vmatpush2.msra.mxu0 0.0
        %1886 = vmatprep.subr.mxu0 0.0
        %1887 = vmatpush2.msra.mxu0 0.0
        %1888 = vmatprep.subr.mxu0 0.0
        %1889 = vmatpush2.msra.mxu0 0.0
        %1890 = vmatprep.subr.mxu0 0.0
        %1891 = vmatpush2.msra.mxu0 0.0
        %1892 = vmatprep.subr.mxu0 0.0
        %1893 = vmatpush2.msra.mxu0 0.0
        %1894 = vmatprep.subr.mxu0 0.0
        %1895 = vmatpush2.msra.mxu0 0.0
        %1896 = vmatprep.subr.mxu0 0.0
        %1897 = vmatpush2.msra.mxu0 0.0
        %1898 = vmatprep.subr.mxu0 0.0
        %1899 = vmatpush2.msra.mxu0 0.0
        %1900 = vmatprep.subr.mxu0 0.0
        %1901 = vmatpush2.msra.mxu0 0.0
        %1902 = vmatprep.subr.mxu0 0.0
        %1903 = vmatpush2.msra.mxu0 0.0
        %1904 = vmatprep.subr.mxu0 0.0
        %1905 = vmatpush2.msra.mxu0 0.0
        %1906 = vmatprep.subr.mxu0 0.0
        %1907 = vmatpush2.msra.mxu0 0.0
        %1908 = vmatprep.subr.mxu0 0.0
        %1909 = vmatpush2.msra.mxu0 0.0
        %1910 = vmatprep.subr.mxu0 0.0
        %1911 = vmatpush2.msra.mxu0 0.0
        %1912 = vmatprep.subr.mxu0 0.0
        %1913 = vmatpush2.msra.mxu0 0.0
        %1914 = vmatprep.subr.mxu0 0.0
        %1915 = vmatpush2.msra.mxu0 0.0
        %1916 = vmatprep.mubr.f32.mxu0 0.0
        %1917 = vmatmul.mubr.f32.gmra.mxu0 %v1818
        %v1918 = vpop.f32.mrf.mxu0
        %v1919 = vadd.f32 0.0, %v1918
        %v1920 = vpop.f32.mrf.mxu0
        %v1921 = vadd.f32 0.0, %v1920
        %1922 = vdwg.mxu0
        %v1923 = vadd.f32 %v1816, %v1919
        %v1924 = vadd.f32 %v1817, %v1921
        %v1925 = vld [vmem:[#allocation3 + $0x4] sm:$0xff]
        %s1926 = scalar_lea.vmem [#allocation9], 1024
        %v1927 = vld [vmem:[%s1926] sm:$0xff]
        %v1928 = vld [vmem:[%s1926 + $0x8] sm:$0xff]
        %v1929 = vld [vmem:[%s1926 + $0x10] sm:$0xff]
        %v1930 = vld [vmem:[%s1926 + $0x18] sm:$0xff]
        %v1931 = vld [vmem:[%s1926 + $0x20] sm:$0xff]
        %v1932 = vld [vmem:[%s1926 + $0x28] sm:$0xff]
        %v1933 = vld [vmem:[%s1926 + $0x30] sm:$0xff]
        %v1934 = vld [vmem:[%s1926 + $0x38] sm:$0xff]
        %v1935 = vld [vmem:[%s1926 + $0x40] sm:$0xff]
        %v1936 = vld [vmem:[%s1926 + $0x48] sm:$0xff]
        %v1937 = vld [vmem:[%s1926 + $0x50] sm:$0xff]
        %v1938 = vld [vmem:[%s1926 + $0x58] sm:$0xff]
        %v1939 = vld [vmem:[%s1926 + $0x60] sm:$0xff]
        %v1940 = vld [vmem:[%s1926 + $0x68] sm:$0xff]
        %v1941 = vld [vmem:[%s1926 + $0x70] sm:$0xff]
        %v1942 = vld [vmem:[%s1926 + $0x78] sm:$0xff]
        %v1943 = vld [vmem:[%s1926 + $0x80] sm:$0xff]
        %v1944 = vld [vmem:[%s1926 + $0x88] sm:$0xff]
        %v1945 = vld [vmem:[%s1926 + $0x90] sm:$0xff]
        %v1946 = vld [vmem:[%s1926 + $0x98] sm:$0xff]
        %v1947 = vld [vmem:[%s1926 + $0xa0] sm:$0xff]
        %v1948 = vld [vmem:[%s1926 + $0xa8] sm:$0xff]
        %v1949 = vld [vmem:[%s1926 + $0xb0] sm:$0xff]
        %v1950 = vld [vmem:[%s1926 + $0xb8] sm:$0xff]
        %v1951 = vld [vmem:[%s1926 + $0xc0] sm:$0xff]
        %v1952 = vld [vmem:[%s1926 + $0xc8] sm:$0xff]
        %v1953 = vld [vmem:[%s1926 + $0xd0] sm:$0xff]
        %v1954 = vld [vmem:[%s1926 + $0xd8] sm:$0xff]
        %v1955 = vld [vmem:[%s1926 + $0xe0] sm:$0xff]
        %v1956 = vld [vmem:[%s1926 + $0xe8] sm:$0xff]
        %v1957 = vld [vmem:[%s1926 + $0xf0] sm:$0xff]
        %v1958 = vld [vmem:[%s1926 + $0xf8] sm:$0xff]
        %1959 = vmatprep.subr.mxu0 %v1958
        %1960 = vmatpush1.msra.mxu0 %v1957
        %1961 = vmatprep.subr.mxu0 %v1956
        %1962 = vmatpush1.msra.mxu0 %v1955
        %1963 = vmatprep.subr.mxu0 %v1954
        %1964 = vmatpush1.msra.mxu0 %v1953
        %1965 = vmatprep.subr.mxu0 %v1952
        %1966 = vmatpush1.msra.mxu0 %v1951
        %1967 = vmatprep.subr.mxu0 %v1950
        %1968 = vmatpush1.msra.mxu0 %v1949
        %1969 = vmatprep.subr.mxu0 %v1948
        %1970 = vmatpush1.msra.mxu0 %v1947
        %1971 = vmatprep.subr.mxu0 %v1946
        %1972 = vmatpush1.msra.mxu0 %v1945
        %1973 = vmatprep.subr.mxu0 %v1944
        %1974 = vmatpush1.msra.mxu0 %v1943
        %1975 = vmatprep.subr.mxu0 %v1942
        %1976 = vmatpush1.msra.mxu0 %v1941
        %1977 = vmatprep.subr.mxu0 %v1940
        %1978 = vmatpush1.msra.mxu0 %v1939
        %1979 = vmatprep.subr.mxu0 %v1938
        %1980 = vmatpush1.msra.mxu0 %v1937
        %1981 = vmatprep.subr.mxu0 %v1936
        %1982 = vmatpush1.msra.mxu0 %v1935
        %1983 = vmatprep.subr.mxu0 %v1934
        %1984 = vmatpush1.msra.mxu0 %v1933
        %1985 = vmatprep.subr.mxu0 %v1932
        %1986 = vmatpush1.msra.mxu0 %v1931
        %1987 = vmatprep.subr.mxu0 %v1930
        %1988 = vmatpush1.msra.mxu0 %v1929
        %1989 = vmatprep.subr.mxu0 %v1928
        %1990 = vmatpush1.msra.mxu0 %v1927
        %1991 = vmatprep.subr.mxu0 0.0
        %1992 = vmatpush2.msra.mxu0 0.0
        %1993 = vmatprep.subr.mxu0 0.0
        %1994 = vmatpush2.msra.mxu0 0.0
        %1995 = vmatprep.subr.mxu0 0.0
        %1996 = vmatpush2.msra.mxu0 0.0
        %1997 = vmatprep.subr.mxu0 0.0
        %1998 = vmatpush2.msra.mxu0 0.0
        %1999 = vmatprep.subr.mxu0 0.0
        %2000 = vmatpush2.msra.mxu0 0.0
        %2001 = vmatprep.subr.mxu0 0.0
        %2002 = vmatpush2.msra.mxu0 0.0
        %2003 = vmatprep.subr.mxu0 0.0
        %2004 = vmatpush2.msra.mxu0 0.0
        %2005 = vmatprep.subr.mxu0 0.0
        %2006 = vmatpush2.msra.mxu0 0.0
        %2007 = vmatprep.subr.mxu0 0.0
        %2008 = vmatpush2.msra.mxu0 0.0
        %2009 = vmatprep.subr.mxu0 0.0
        %2010 = vmatpush2.msra.mxu0 0.0
        %2011 = vmatprep.subr.mxu0 0.0
        %2012 = vmatpush2.msra.mxu0 0.0
        %2013 = vmatprep.subr.mxu0 0.0
        %2014 = vmatpush2.msra.mxu0 0.0
        %2015 = vmatprep.subr.mxu0 0.0
        %2016 = vmatpush2.msra.mxu0 0.0
        %2017 = vmatprep.subr.mxu0 0.0
        %2018 = vmatpush2.msra.mxu0 0.0
        %2019 = vmatprep.subr.mxu0 0.0
        %2020 = vmatpush2.msra.mxu0 0.0
        %2021 = vmatprep.subr.mxu0 0.0
        %2022 = vmatpush2.msra.mxu0 0.0
        %2023 = vmatprep.mubr.f32.mxu0 0.0
        %2024 = vmatmul.mubr.f32.gmra.mxu0 %v1925
        %v2025 = vpop.f32.mrf.mxu0
        %v2026 = vadd.f32 0.0, %v2025
        %v2027 = vpop.f32.mrf.mxu0
        %v2028 = vadd.f32 0.0, %v2027
        %2029 = vdwg.mxu0
        %v2030 = vadd.f32 %v1923, %v2026
        %v2031 = vadd.f32 %v1924, %v2028
        %v2032 = vld [vmem:[%s6] sm:$0x3]
        %v2034 = vlaneseq
        %v2035 = vshrl.u32 %v2034, 7
        %v2036 = vsub.s32 0, %v2035
        %v2037 = vrot.slane %v2032, %v2036
        %v2038 = vlaneseq
        %v2039 = vshrl.u32 %v2038, 7
        %v2040 = vsub.s32 1, %v2039
        %v2041 = vrot.slane %v2032, %v2040
        %v2044 = vadd.f32 %v2030, %v2037
        %v2045 = vadd.f32 %v2031, %v2041
        %v2046 = vmax.f32 %v2044, 0.0
        %v2047 = vmax.f32 %v2045, 0.0
        %v2050 = vcombine.low %v2046, %v2047
        %v2051 = vcombine.high %v2046, %v2047
        %v2053 = vunpack.c.l.s4 1983009808
        %v2054 = vunpack.c.0.s8 %v2053
        %v2055 = vlaneseq
        %v2056 = vshrl.u32 %v2055, 7
        %v2057 = vsub.s32 %v2054, %v2056
        %v2058 = vrot.slane %v2050, %v2057
        %v2060 = vunpack.c.l.s4 1983009808
        %v2061 = vunpack.c.0.s8 %v2060
        %v2062 = vlaneseq
        %v2063 = vshrl.u32 %v2062, 7
        %v2064 = vsub.s32 %v2061, %v2063
        %v2065 = vrot.slane %v2051, %v2064
        %v2066 = vcombine.high %v2058, %v2058
        %v2067 = vcombine.high %v2065, %v2065
        %v2069 = vunpack.c.l.s4 1983009808
        %v2070 = vunpack.c.0.s8 %v2069
        %v2071 = vlaneseq
        %v2072 = vshrl.u32 %v2071, 7
        %v2073 = vsub.s32 %v2070, %v2072
        %v2074 = vrot.slane %v2058, %v2073
        %v2075 = vcombine.high %v2074, %v2074
        %v2077 = vunpack.c.l.s4 1983009808
        %v2078 = vunpack.c.0.s8 %v2077
        %v2079 = vlaneseq
        %v2080 = vshrl.u32 %v2079, 7
        %v2081 = vsub.s32 %v2078, %v2080
        %v2082 = vrot.slane %v2066, %v2081
        %v2083 = vcombine.high %v2082, %v2082
        %v2085 = vunpack.c.l.s4 1983009808
        %v2086 = vunpack.c.0.s8 %v2085
        %v2087 = vlaneseq
        %v2088 = vshrl.u32 %v2087, 7
        %v2089 = vsub.s32 %v2086, %v2088
        %v2090 = vrot.slane %v2065, %v2089
        %v2091 = vcombine.high %v2090, %v2090
        %v2093 = vunpack.c.l.s4 1983009808
        %v2094 = vunpack.c.0.s8 %v2093
        %v2095 = vlaneseq
        %v2096 = vshrl.u32 %v2095, 7
        %v2097 = vsub.s32 %v2094, %v2096
        %v2098 = vrot.slane %v2067, %v2097
        %v2099 = vcombine.high %v2098, %v2098
        %v2108 = vsel %vm1142, %v2074, -inf
        %v2109 = vrot.slane %v2108, 4
        %v2110 = vmax.f32 %v2108, %v2109
        %v2111 = vrot.slane %v2110, 2
        %v2112 = vmax.f32 %v2110, %v2111
        %v2113 = vrot.slane %v2112, 1
        %v2114 = vmax.f32 %v2112, %v2113
        %v2115 = vsel %vm1142, %v2075, -inf
        %v2116 = vrot.slane %v2115, 4
        %v2117 = vmax.f32 %v2115, %v2116
        %v2118 = vrot.slane %v2117, 2
        %v2119 = vmax.f32 %v2117, %v2118
        %v2120 = vrot.slane %v2119, 1
        %v2121 = vmax.f32 %v2119, %v2120
        %v2122 = vsel %vm1142, %v2082, -inf
        %v2123 = vrot.slane %v2122, 4
        %v2124 = vmax.f32 %v2122, %v2123
        %v2125 = vrot.slane %v2124, 2
        %v2126 = vmax.f32 %v2124, %v2125
        %v2127 = vrot.slane %v2126, 1
        %v2128 = vmax.f32 %v2126, %v2127
        %v2129 = vsel %vm1142, %v2083, -inf
        %v2130 = vrot.slane %v2129, 4
        %v2131 = vmax.f32 %v2129, %v2130
        %v2132 = vrot.slane %v2131, 2
        %v2133 = vmax.f32 %v2131, %v2132
        %v2134 = vrot.slane %v2133, 1
        %v2135 = vmax.f32 %v2133, %v2134
        %v2136 = vsel %vm1142, %v2090, -inf
        %v2137 = vrot.slane %v2136, 4
        %v2138 = vmax.f32 %v2136, %v2137
        %v2139 = vrot.slane %v2138, 2
        %v2140 = vmax.f32 %v2138, %v2139
        %v2141 = vrot.slane %v2140, 1
        %v2142 = vmax.f32 %v2140, %v2141
        %v2143 = vsel %vm1142, %v2091, -inf
        %v2144 = vrot.slane %v2143, 4
        %v2145 = vmax.f32 %v2143, %v2144
        %v2146 = vrot.slane %v2145, 2
        %v2147 = vmax.f32 %v2145, %v2146
        %v2148 = vrot.slane %v2147, 1
        %v2149 = vmax.f32 %v2147, %v2148
        %v2150 = vsel %vm1142, %v2098, -inf
        %v2151 = vrot.slane %v2150, 4
        %v2152 = vmax.f32 %v2150, %v2151
        %v2153 = vrot.slane %v2152, 2
        %v2154 = vmax.f32 %v2152, %v2153
        %v2155 = vrot.slane %v2154, 1
        %v2156 = vmax.f32 %v2154, %v2155
        %v2157 = vsel %vm1142, %v2099, -inf
        %v2158 = vrot.slane %v2157, 4
        %v2159 = vmax.f32 %v2157, %v2158
        %v2160 = vrot.slane %v2159, 2
        %v2161 = vmax.f32 %v2159, %v2160
        %v2162 = vrot.slane %v2161, 1
        %v2163 = vmax.f32 %v2161, %v2162
        %v2164 = vld [vmem:[#allocation10] sm:$0xff]
        %v2165 = vld [vmem:[#allocation10 + $0x8] sm:$0xff]
        %v2166 = vld [vmem:[#allocation10 + $0x10] sm:$0xff]
        %v2167 = vld [vmem:[#allocation10 + $0x18] sm:$0xff]
        %v2168 = vld [vmem:[#allocation10 + $0x20] sm:$0xff]
        %v2169 = vld [vmem:[#allocation10 + $0x28] sm:$0xff]
        %v2170 = vld [vmem:[#allocation10 + $0x30] sm:$0xff]
        %v2171 = vld [vmem:[#allocation10 + $0x38] sm:$0xff]
        %v2172 = vld [vmem:[#allocation10 + $0x40] sm:$0xff]
        %v2173 = vld [vmem:[#allocation10 + $0x48] sm:$0xff]
        %v2174 = vld [vmem:[#allocation10 + $0x50] sm:$0xff]
        %v2175 = vld [vmem:[#allocation10 + $0x58] sm:$0xff]
        %v2176 = vld [vmem:[#allocation10 + $0x60] sm:$0xff]
        %v2177 = vld [vmem:[#allocation10 + $0x68] sm:$0xff]
        %v2178 = vld [vmem:[#allocation10 + $0x70] sm:$0xff]
        %v2179 = vld [vmem:[#allocation10 + $0x78] sm:$0xff]
        %v2180 = vld [vmem:[#allocation10 + $0x80] sm:$0xff]
        %v2181 = vld [vmem:[#allocation10 + $0x88] sm:$0xff]
        %v2182 = vld [vmem:[#allocation10 + $0x90] sm:$0xff]
        %v2183 = vld [vmem:[#allocation10 + $0x98] sm:$0xff]
        %v2184 = vld [vmem:[#allocation10 + $0xa0] sm:$0xff]
        %v2185 = vld [vmem:[#allocation10 + $0xa8] sm:$0xff]
        %v2186 = vld [vmem:[#allocation10 + $0xb0] sm:$0xff]
        %v2187 = vld [vmem:[#allocation10 + $0xb8] sm:$0xff]
        %v2188 = vld [vmem:[#allocation10 + $0xc0] sm:$0xff]
        %v2189 = vld [vmem:[#allocation10 + $0xc8] sm:$0xff]
        %v2190 = vld [vmem:[#allocation10 + $0xd0] sm:$0xff]
        %v2191 = vld [vmem:[#allocation10 + $0xd8] sm:$0xff]
        %v2192 = vld [vmem:[#allocation10 + $0xe0] sm:$0xff]
        %v2193 = vld [vmem:[#allocation10 + $0xe8] sm:$0xff]
        %v2194 = vld [vmem:[#allocation10 + $0xf0] sm:$0xff]
        %v2195 = vld [vmem:[#allocation10 + $0xf8] sm:$0xff]
        %v2204 = vsel %vm1303, %v2128, %v2114
        %v2205 = vsel %vm1305, %v2142, %v2204
        %v2206 = vsel %vm1307, %v2156, %v2205
        %v2207 = vsel %vm1303, %v2135, %v2121
        %v2208 = vsel %vm1305, %v2149, %v2207
        %v2209 = vsel %vm1307, %v2163, %v2208
        %2212 = vmatprep.subr.mxu0 0.0
        %2213 = vmatpush1.msra.mxu0 %v2179
        %2214 = vmatprep.subr.mxu0 0.0
        %2215 = vmatpush1.msra.mxu0 %v2178
        %2216 = vmatprep.subr.mxu0 0.0
        %2217 = vmatpush1.msra.mxu0 %v2177
        %2218 = vmatprep.subr.mxu0 0.0
        %2219 = vmatpush1.msra.mxu0 %v2176
        %2220 = vmatprep.subr.mxu0 0.0
        %2221 = vmatpush1.msra.mxu0 %v2175
        %2222 = vmatprep.subr.mxu0 0.0
        %2223 = vmatpush1.msra.mxu0 %v2174
        %2224 = vmatprep.subr.mxu0 0.0
        %2225 = vmatpush1.msra.mxu0 %v2173
        %2226 = vmatprep.subr.mxu0 0.0
        %2227 = vmatpush1.msra.mxu0 %v2172
        %2228 = vmatprep.subr.mxu0 0.0
        %2229 = vmatpush1.msra.mxu0 %v2171
        %2230 = vmatprep.subr.mxu0 0.0
        %2231 = vmatpush1.msra.mxu0 %v2170
        %2232 = vmatprep.subr.mxu0 0.0
        %2233 = vmatpush1.msra.mxu0 %v2169
        %2234 = vmatprep.subr.mxu0 0.0
        %2235 = vmatpush1.msra.mxu0 %v2168
        %2236 = vmatprep.subr.mxu0 0.0
        %2237 = vmatpush1.msra.mxu0 %v2167
        %2238 = vmatprep.subr.mxu0 0.0
        %2239 = vmatpush1.msra.mxu0 %v2166
        %2240 = vmatprep.subr.mxu0 0.0
        %2241 = vmatpush1.msra.mxu0 %v2165
        %2242 = vmatprep.subr.mxu0 0.0
        %2243 = vmatpush1.msra.mxu0 %v2164
        %2244 = vmatprep.subr.mxu0 0.0
        %2245 = vmatpush2.msra.mxu0 %v2195
        %2246 = vmatprep.subr.mxu0 0.0
        %2247 = vmatpush2.msra.mxu0 %v2194
        %2248 = vmatprep.subr.mxu0 0.0
        %2249 = vmatpush2.msra.mxu0 %v2193
        %2250 = vmatprep.subr.mxu0 0.0
        %2251 = vmatpush2.msra.mxu0 %v2192
        %2252 = vmatprep.subr.mxu0 0.0
        %2253 = vmatpush2.msra.mxu0 %v2191
        %2254 = vmatprep.subr.mxu0 0.0
        %2255 = vmatpush2.msra.mxu0 %v2190
        %2256 = vmatprep.subr.mxu0 0.0
        %2257 = vmatpush2.msra.mxu0 %v2189
        %2258 = vmatprep.subr.mxu0 0.0
        %2259 = vmatpush2.msra.mxu0 %v2188
        %2260 = vmatprep.subr.mxu0 0.0
        %2261 = vmatpush2.msra.mxu0 %v2187
        %2262 = vmatprep.subr.mxu0 0.0
        %2263 = vmatpush2.msra.mxu0 %v2186
        %2264 = vmatprep.subr.mxu0 0.0
        %2265 = vmatpush2.msra.mxu0 %v2185
        %2266 = vmatprep.subr.mxu0 0.0
        %2267 = vmatpush2.msra.mxu0 %v2184
        %2268 = vmatprep.subr.mxu0 0.0
        %2269 = vmatpush2.msra.mxu0 %v2183
        %2270 = vmatprep.subr.mxu0 0.0
        %2271 = vmatpush2.msra.mxu0 %v2182
        %2272 = vmatprep.subr.mxu0 0.0
        %2273 = vmatpush2.msra.mxu0 %v2181
        %2274 = vmatprep.subr.mxu0 0.0
        %2275 = vmatpush2.msra.mxu0 %v2180
        %2276 = vmatprep.mubr.f32.mxu0 %v2209
        %2277 = vmatmul.mubr.f32.gmra.mxu0 %v2206
        %v2278 = vpop.f32.mrf.mxu0
        %v2279 = vadd.f32 0.0, %v2278
        %v2280 = vpop.f32.mrf.mxu0
        %2281 = vdwg.mxu0
        %v2282 = vld [vmem:[#allocation12] sm:$0xff]
        %v2283 = vld [vmem:[#allocation12 + $0x8] sm:$0xff]
        %v2284 = vld [vmem:[#allocation12 + $0x10] sm:$0xff]
        %v2285 = vld [vmem:[#allocation12 + $0x18] sm:$0xff]
        %v2286 = vld [vmem:[#allocation12 + $0x20] sm:$0xff]
        %v2287 = vld [vmem:[#allocation12 + $0x28] sm:$0xff]
        %v2288 = vld [vmem:[#allocation12 + $0x30] sm:$0xff]
        %v2289 = vld [vmem:[#allocation12 + $0x38] sm:$0xff]
        %v2290 = vld [vmem:[#allocation12 + $0x40] sm:$0xff]
        %v2291 = vld [vmem:[#allocation12 + $0x48] sm:$0xff]
        %v2292 = vld [vmem:[#allocation12 + $0x50] sm:$0xff]
        %v2293 = vld [vmem:[#allocation12 + $0x58] sm:$0xff]
        %v2294 = vld [vmem:[#allocation12 + $0x60] sm:$0xff]
        %v2295 = vld [vmem:[#allocation12 + $0x68] sm:$0xff]
        %v2296 = vld [vmem:[#allocation12 + $0x70] sm:$0xff]
        %v2297 = vld [vmem:[#allocation12 + $0x78] sm:$0xff]
        %v2298 = vld [vmem:[#allocation12 + $0x80] sm:$0xff]
        %v2299 = vld [vmem:[#allocation12 + $0x88] sm:$0xff]
        %v2300 = vld [vmem:[#allocation12 + $0x90] sm:$0xff]
        %v2301 = vld [vmem:[#allocation12 + $0x98] sm:$0xff]
        %v2302 = vld [vmem:[#allocation12 + $0xa0] sm:$0xff]
        %v2303 = vld [vmem:[#allocation12 + $0xa8] sm:$0xff]
        %v2304 = vld [vmem:[#allocation12 + $0xb0] sm:$0xff]
        %v2305 = vld [vmem:[#allocation12 + $0xb8] sm:$0xff]
        %v2306 = vld [vmem:[#allocation12 + $0xc0] sm:$0xff]
        %v2307 = vld [vmem:[#allocation12 + $0xc8] sm:$0xff]
        %v2308 = vld [vmem:[#allocation12 + $0xd0] sm:$0xff]
        %v2309 = vld [vmem:[#allocation12 + $0xd8] sm:$0xff]
        %v2310 = vld [vmem:[#allocation12 + $0xe0] sm:$0xff]
        %v2311 = vld [vmem:[#allocation12 + $0xe8] sm:$0xff]
        %v2312 = vld [vmem:[#allocation12 + $0xf0] sm:$0xff]
        %v2313 = vld [vmem:[#allocation12 + $0xf8] sm:$0xff]
        %2314 = vmatprep.subr.mxu0 0.0
        %2315 = vmatpush1.msra.mxu0 %v2297
        %2316 = vmatprep.subr.mxu0 0.0
        %2317 = vmatpush1.msra.mxu0 %v2296
        %2318 = vmatprep.subr.mxu0 0.0
        %2319 = vmatpush1.msra.mxu0 %v2295
        %2320 = vmatprep.subr.mxu0 0.0
        %2321 = vmatpush1.msra.mxu0 %v2294
        %2322 = vmatprep.subr.mxu0 0.0
        %2323 = vmatpush1.msra.mxu0 %v2293
        %2324 = vmatprep.subr.mxu0 0.0
        %2325 = vmatpush1.msra.mxu0 %v2292
        %2326 = vmatprep.subr.mxu0 0.0
        %2327 = vmatpush1.msra.mxu0 %v2291
        %2328 = vmatprep.subr.mxu0 0.0
        %2329 = vmatpush1.msra.mxu0 %v2290
        %2330 = vmatprep.subr.mxu0 0.0
        %2331 = vmatpush1.msra.mxu0 %v2289
        %2332 = vmatprep.subr.mxu0 0.0
        %2333 = vmatpush1.msra.mxu0 %v2288
        %2334 = vmatprep.subr.mxu0 0.0
        %2335 = vmatpush1.msra.mxu0 %v2287
        %2336 = vmatprep.subr.mxu0 0.0
        %2337 = vmatpush1.msra.mxu0 %v2286
        %2338 = vmatprep.subr.mxu0 0.0
        %2339 = vmatpush1.msra.mxu0 %v2285
        %2340 = vmatprep.subr.mxu0 0.0
        %2341 = vmatpush1.msra.mxu0 %v2284
        %2342 = vmatprep.subr.mxu0 0.0
        %2343 = vmatpush1.msra.mxu0 %v2283
        %2344 = vmatprep.subr.mxu0 0.0
        %2345 = vmatpush1.msra.mxu0 %v2282
        %2346 = vmatprep.subr.mxu0 0.0
        %2347 = vmatpush2.msra.mxu0 %v2313
        %2348 = vmatprep.subr.mxu0 0.0
        %2349 = vmatpush2.msra.mxu0 %v2312
        %2350 = vmatprep.subr.mxu0 0.0
        %2351 = vmatpush2.msra.mxu0 %v2311
        %2352 = vmatprep.subr.mxu0 0.0
        %2353 = vmatpush2.msra.mxu0 %v2310
        %2354 = vmatprep.subr.mxu0 0.0
        %2355 = vmatpush2.msra.mxu0 %v2309
        %2356 = vmatprep.subr.mxu0 0.0
        %2357 = vmatpush2.msra.mxu0 %v2308
        %2358 = vmatprep.subr.mxu0 0.0
        %2359 = vmatpush2.msra.mxu0 %v2307
        %2360 = vmatprep.subr.mxu0 0.0
        %2361 = vmatpush2.msra.mxu0 %v2306
        %2362 = vmatprep.subr.mxu0 0.0
        %2363 = vmatpush2.msra.mxu0 %v2305
        %2364 = vmatprep.subr.mxu0 0.0
        %2365 = vmatpush2.msra.mxu0 %v2304
        %2366 = vmatprep.subr.mxu0 0.0
        %2367 = vmatpush2.msra.mxu0 %v2303
        %2368 = vmatprep.subr.mxu0 0.0
        %2369 = vmatpush2.msra.mxu0 %v2302
        %2370 = vmatprep.subr.mxu0 0.0
        %2371 = vmatpush2.msra.mxu0 %v2301
        %2372 = vmatprep.subr.mxu0 0.0
        %2373 = vmatpush2.msra.mxu0 %v2300
        %2374 = vmatprep.subr.mxu0 0.0
        %2375 = vmatpush2.msra.mxu0 %v2299
        %2376 = vmatprep.subr.mxu0 0.0
        %2377 = vmatpush2.msra.mxu0 %v2298
        %2378 = vmatprep.mubr.f32.mxu0 %v2209
        %2379 = vmatmul.mubr.f32.gmra.mxu0 %v2206
        %v2380 = vpop.f32.mrf.mxu0
        %v2381 = vadd.f32 0.0, %v2380
        %v2382 = vpop.f32.mrf.mxu0
        %2383 = vdwg.mxu0
        %v2384 = vmax.f32 %v2279, %v2381
        %v2385 = vld [vmem:[%s10] sm:$0x1]
        %v2386 = vld [vmem:[#allocation13] sm:$0xff]
        %v2387 = vld [vmem:[#allocation13 + $0x8] sm:$0xff]
        %v2388 = vld [vmem:[#allocation13 + $0x10] sm:$0xff]
        %v2389 = vld [vmem:[#allocation13 + $0x18] sm:$0xff]
        %v2390 = vld [vmem:[#allocation13 + $0x20] sm:$0xff]
        %v2391 = vld [vmem:[#allocation13 + $0x28] sm:$0xff]
        %v2392 = vld [vmem:[#allocation13 + $0x30] sm:$0xff]
        %v2393 = vld [vmem:[#allocation13 + $0x38] sm:$0xff]
        %v2394 = vld [vmem:[#allocation13 + $0x40] sm:$0xff]
        %v2395 = vld [vmem:[#allocation13 + $0x48] sm:$0xff]
        %v2396 = vld [vmem:[#allocation13 + $0x50] sm:$0xff]
        %v2397 = vld [vmem:[#allocation13 + $0x58] sm:$0xff]
        %v2398 = vld [vmem:[#allocation13 + $0x60] sm:$0xff]
        %v2399 = vld [vmem:[#allocation13 + $0x68] sm:$0xff]
        %v2400 = vld [vmem:[#allocation13 + $0x70] sm:$0xff]
        %v2401 = vld [vmem:[#allocation13 + $0x78] sm:$0xff]
        %2402 = vmatprep.subr.mxu0 0.0
        %2403 = vmatpush1.msra.mxu0 %v2401
        %2404 = vmatprep.subr.mxu0 0.0
        %2405 = vmatpush1.msra.mxu0 %v2400
        %2406 = vmatprep.subr.mxu0 0.0
        %2407 = vmatpush1.msra.mxu0 %v2399
        %2408 = vmatprep.subr.mxu0 0.0
        %2409 = vmatpush1.msra.mxu0 %v2398
        %2410 = vmatprep.subr.mxu0 0.0
        %2411 = vmatpush1.msra.mxu0 %v2397
        %2412 = vmatprep.subr.mxu0 0.0
        %2413 = vmatpush1.msra.mxu0 %v2396
        %2414 = vmatprep.subr.mxu0 0.0
        %2415 = vmatpush1.msra.mxu0 %v2395
        %2416 = vmatprep.subr.mxu0 0.0
        %2417 = vmatpush1.msra.mxu0 %v2394
        %2418 = vmatprep.subr.mxu0 0.0
        %2419 = vmatpush1.msra.mxu0 %v2393
        %2420 = vmatprep.subr.mxu0 0.0
        %2421 = vmatpush1.msra.mxu0 %v2392
        %2422 = vmatprep.subr.mxu0 0.0
        %2423 = vmatpush1.msra.mxu0 %v2391
        %2424 = vmatprep.subr.mxu0 0.0
        %2425 = vmatpush1.msra.mxu0 %v2390
        %2426 = vmatprep.subr.mxu0 0.0
        %2427 = vmatpush1.msra.mxu0 %v2389
        %2428 = vmatprep.subr.mxu0 0.0
        %2429 = vmatpush1.msra.mxu0 %v2388
        %2430 = vmatprep.subr.mxu0 0.0
        %2431 = vmatpush1.msra.mxu0 %v2387
        %2432 = vmatprep.subr.mxu0 0.0
        %2433 = vmatpush1.msra.mxu0 %v2386
        %2434 = vmatprep.subr.mxu0 0.0
        %2435 = vmatpush2.msra.mxu0 0.0
        %2436 = vmatprep.subr.mxu0 0.0
        %2437 = vmatpush2.msra.mxu0 0.0
        %2438 = vmatprep.subr.mxu0 0.0
        %2439 = vmatpush2.msra.mxu0 0.0
        %2440 = vmatprep.subr.mxu0 0.0
        %2441 = vmatpush2.msra.mxu0 0.0
        %2442 = vmatprep.subr.mxu0 0.0
        %2443 = vmatpush2.msra.mxu0 0.0
        %2444 = vmatprep.subr.mxu0 0.0
        %2445 = vmatpush2.msra.mxu0 0.0
        %2446 = vmatprep.subr.mxu0 0.0
        %2447 = vmatpush2.msra.mxu0 0.0
        %2448 = vmatprep.subr.mxu0 0.0
        %2449 = vmatpush2.msra.mxu0 0.0
        %2450 = vmatprep.subr.mxu0 0.0
        %2451 = vmatpush2.msra.mxu0 0.0
        %2452 = vmatprep.subr.mxu0 0.0
        %2453 = vmatpush2.msra.mxu0 0.0
        %2454 = vmatprep.subr.mxu0 0.0
        %2455 = vmatpush2.msra.mxu0 0.0
        %2456 = vmatprep.subr.mxu0 0.0
        %2457 = vmatpush2.msra.mxu0 0.0
        %2458 = vmatprep.subr.mxu0 0.0
        %2459 = vmatpush2.msra.mxu0 0.0
        %2460 = vmatprep.subr.mxu0 0.0
        %2461 = vmatpush2.msra.mxu0 0.0
        %2462 = vmatprep.subr.mxu0 0.0
        %2463 = vmatpush2.msra.mxu0 0.0
        %2464 = vmatprep.subr.mxu0 0.0
        %2465 = vmatpush2.msra.mxu0 0.0
        %2466 = vmatprep.mubr.f32.mxu0 0.0
        %2467 = vmatmul.mubr.f32.gmra.mxu0 %v2384
        %v2468 = vpop.f32.mrf.mxu0
        %v2469 = vadd.f32 0.0, %v2468
        %v2470 = vpop.f32.mrf.mxu0
        %2471 = vdwg.mxu0
        %v2472 = vadd.f32 %v2385, %v2469
        %s2473 = scalar_lea.vmem [#allocation13], 128
        %v2474 = vld [vmem:[%s2473] sm:$0xff]
        %v2475 = vld [vmem:[%s2473 + $0x8] sm:$0xff]
        %v2476 = vld [vmem:[%s2473 + $0x10] sm:$0xff]
        %v2477 = vld [vmem:[%s2473 + $0x18] sm:$0xff]
        %v2478 = vld [vmem:[%s2473 + $0x20] sm:$0xff]
        %v2479 = vld [vmem:[%s2473 + $0x28] sm:$0xff]
        %v2480 = vld [vmem:[%s2473 + $0x30] sm:$0xff]
        %v2481 = vld [vmem:[%s2473 + $0x38] sm:$0xff]
        %v2482 = vld [vmem:[%s2473 + $0x40] sm:$0xff]
        %v2483 = vld [vmem:[%s2473 + $0x48] sm:$0xff]
        %v2484 = vld [vmem:[%s2473 + $0x50] sm:$0xff]
        %v2485 = vld [vmem:[%s2473 + $0x58] sm:$0xff]
        %v2486 = vld [vmem:[%s2473 + $0x60] sm:$0xff]
        %v2487 = vld [vmem:[%s2473 + $0x68] sm:$0xff]
        %v2488 = vld [vmem:[%s2473 + $0x70] sm:$0xff]
        %v2489 = vld [vmem:[%s2473 + $0x78] sm:$0xff]
        %v2491 = vrot.slane %v2384, 1
        %2493 = vmatprep.subr.mxu0 0.0
        %2494 = vmatpush1.msra.mxu0 %v2489
        %2495 = vmatprep.subr.mxu0 0.0
        %2496 = vmatpush1.msra.mxu0 %v2488
        %2497 = vmatprep.subr.mxu0 0.0
        %2498 = vmatpush1.msra.mxu0 %v2487
        %2499 = vmatprep.subr.mxu0 0.0
        %2500 = vmatpush1.msra.mxu0 %v2486
        %2501 = vmatprep.subr.mxu0 0.0
        %2502 = vmatpush1.msra.mxu0 %v2485
        %2503 = vmatprep.subr.mxu0 0.0
        %2504 = vmatpush1.msra.mxu0 %v2484
        %2505 = vmatprep.subr.mxu0 0.0
        %2506 = vmatpush1.msra.mxu0 %v2483
        %2507 = vmatprep.subr.mxu0 0.0
        %2508 = vmatpush1.msra.mxu0 %v2482
        %2509 = vmatprep.subr.mxu0 0.0
        %2510 = vmatpush1.msra.mxu0 %v2481
        %2511 = vmatprep.subr.mxu0 0.0
        %2512 = vmatpush1.msra.mxu0 %v2480
        %2513 = vmatprep.subr.mxu0 0.0
        %2514 = vmatpush1.msra.mxu0 %v2479
        %2515 = vmatprep.subr.mxu0 0.0
        %2516 = vmatpush1.msra.mxu0 %v2478
        %2517 = vmatprep.subr.mxu0 0.0
        %2518 = vmatpush1.msra.mxu0 %v2477
        %2519 = vmatprep.subr.mxu0 0.0
        %2520 = vmatpush1.msra.mxu0 %v2476
        %2521 = vmatprep.subr.mxu0 0.0
        %2522 = vmatpush1.msra.mxu0 %v2475
        %2523 = vmatprep.subr.mxu0 0.0
        %2524 = vmatpush1.msra.mxu0 %v2474
        %2525 = vmatprep.subr.mxu0 0.0
        %2526 = vmatpush2.msra.mxu0 0.0
        %2527 = vmatprep.subr.mxu0 0.0
        %2528 = vmatpush2.msra.mxu0 0.0
        %2529 = vmatprep.subr.mxu0 0.0
        %2530 = vmatpush2.msra.mxu0 0.0
        %2531 = vmatprep.subr.mxu0 0.0
        %2532 = vmatpush2.msra.mxu0 0.0
        %2533 = vmatprep.subr.mxu0 0.0
        %2534 = vmatpush2.msra.mxu0 0.0
        %2535 = vmatprep.subr.mxu0 0.0
        %2536 = vmatpush2.msra.mxu0 0.0
        %2537 = vmatprep.subr.mxu0 0.0
        %2538 = vmatpush2.msra.mxu0 0.0
        %2539 = vmatprep.subr.mxu0 0.0
        %2540 = vmatpush2.msra.mxu0 0.0
        %2541 = vmatprep.subr.mxu0 0.0
        %2542 = vmatpush2.msra.mxu0 0.0
        %2543 = vmatprep.subr.mxu0 0.0
        %2544 = vmatpush2.msra.mxu0 0.0
        %2545 = vmatprep.subr.mxu0 0.0
        %2546 = vmatpush2.msra.mxu0 0.0
        %2547 = vmatprep.subr.mxu0 0.0
        %2548 = vmatpush2.msra.mxu0 0.0
        %2549 = vmatprep.subr.mxu0 0.0
        %2550 = vmatpush2.msra.mxu0 0.0
        %2551 = vmatprep.subr.mxu0 0.0
        %2552 = vmatpush2.msra.mxu0 0.0
        %2553 = vmatprep.subr.mxu0 0.0
        %2554 = vmatpush2.msra.mxu0 0.0
        %2555 = vmatprep.subr.mxu0 0.0
        %2556 = vmatpush2.msra.mxu0 0.0
        %2557 = vmatprep.mubr.f32.mxu0 0.0
        %2558 = vmatmul.mubr.f32.gmra.mxu0 %v2491
        %v2559 = vpop.f32.mrf.mxu0
        %v2560 = vadd.f32 0.0, %v2559
        %v2561 = vpop.f32.mrf.mxu0
        %2562 = vdwg.mxu0
        %v2563 = vadd.f32 %v2472, %v2560
        %s2564 = scalar_lea.vmem [#allocation13], 256
        %v2565 = vld [vmem:[%s2564] sm:$0xff]
        %v2566 = vld [vmem:[%s2564 + $0x8] sm:$0xff]
        %v2567 = vld [vmem:[%s2564 + $0x10] sm:$0xff]
        %v2568 = vld [vmem:[%s2564 + $0x18] sm:$0xff]
        %v2569 = vld [vmem:[%s2564 + $0x20] sm:$0xff]
        %v2570 = vld [vmem:[%s2564 + $0x28] sm:$0xff]
        %v2571 = vld [vmem:[%s2564 + $0x30] sm:$0xff]
        %v2572 = vld [vmem:[%s2564 + $0x38] sm:$0xff]
        %v2573 = vld [vmem:[%s2564 + $0x40] sm:$0xff]
        %v2574 = vld [vmem:[%s2564 + $0x48] sm:$0xff]
        %v2575 = vld [vmem:[%s2564 + $0x50] sm:$0xff]
        %v2576 = vld [vmem:[%s2564 + $0x58] sm:$0xff]
        %v2577 = vld [vmem:[%s2564 + $0x60] sm:$0xff]
        %v2578 = vld [vmem:[%s2564 + $0x68] sm:$0xff]
        %v2579 = vld [vmem:[%s2564 + $0x70] sm:$0xff]
        %v2580 = vld [vmem:[%s2564 + $0x78] sm:$0xff]
        %v2581 = vrot.slane %v2384, 2
        %2583 = vmatprep.subr.mxu0 0.0
        %2584 = vmatpush1.msra.mxu0 %v2580
        %2585 = vmatprep.subr.mxu0 0.0
        %2586 = vmatpush1.msra.mxu0 %v2579
        %2587 = vmatprep.subr.mxu0 0.0
        %2588 = vmatpush1.msra.mxu0 %v2578
        %2589 = vmatprep.subr.mxu0 0.0
        %2590 = vmatpush1.msra.mxu0 %v2577
        %2591 = vmatprep.subr.mxu0 0.0
        %2592 = vmatpush1.msra.mxu0 %v2576
        %2593 = vmatprep.subr.mxu0 0.0
        %2594 = vmatpush1.msra.mxu0 %v2575
        %2595 = vmatprep.subr.mxu0 0.0
        %2596 = vmatpush1.msra.mxu0 %v2574
        %2597 = vmatprep.subr.mxu0 0.0
        %2598 = vmatpush1.msra.mxu0 %v2573
        %2599 = vmatprep.subr.mxu0 0.0
        %2600 = vmatpush1.msra.mxu0 %v2572
        %2601 = vmatprep.subr.mxu0 0.0
        %2602 = vmatpush1.msra.mxu0 %v2571
        %2603 = vmatprep.subr.mxu0 0.0
        %2604 = vmatpush1.msra.mxu0 %v2570
        %2605 = vmatprep.subr.mxu0 0.0
        %2606 = vmatpush1.msra.mxu0 %v2569
        %2607 = vmatprep.subr.mxu0 0.0
        %2608 = vmatpush1.msra.mxu0 %v2568
        %2609 = vmatprep.subr.mxu0 0.0
        %2610 = vmatpush1.msra.mxu0 %v2567
        %2611 = vmatprep.subr.mxu0 0.0
        %2612 = vmatpush1.msra.mxu0 %v2566
        %2613 = vmatprep.subr.mxu0 0.0
        %2614 = vmatpush1.msra.mxu0 %v2565
        %2615 = vmatprep.subr.mxu0 0.0
        %2616 = vmatpush2.msra.mxu0 0.0
        %2617 = vmatprep.subr.mxu0 0.0
        %2618 = vmatpush2.msra.mxu0 0.0
        %2619 = vmatprep.subr.mxu0 0.0
        %2620 = vmatpush2.msra.mxu0 0.0
        %2621 = vmatprep.subr.mxu0 0.0
        %2622 = vmatpush2.msra.mxu0 0.0
        %2623 = vmatprep.subr.mxu0 0.0
        %2624 = vmatpush2.msra.mxu0 0.0
        %2625 = vmatprep.subr.mxu0 0.0
        %2626 = vmatpush2.msra.mxu0 0.0
        %2627 = vmatprep.subr.mxu0 0.0
        %2628 = vmatpush2.msra.mxu0 0.0
        %2629 = vmatprep.subr.mxu0 0.0
        %2630 = vmatpush2.msra.mxu0 0.0
        %2631 = vmatprep.subr.mxu0 0.0
        %2632 = vmatpush2.msra.mxu0 0.0
        %2633 = vmatprep.subr.mxu0 0.0
        %2634 = vmatpush2.msra.mxu0 0.0
        %2635 = vmatprep.subr.mxu0 0.0
        %2636 = vmatpush2.msra.mxu0 0.0
        %2637 = vmatprep.subr.mxu0 0.0
        %2638 = vmatpush2.msra.mxu0 0.0
        %2639 = vmatprep.subr.mxu0 0.0
        %2640 = vmatpush2.msra.mxu0 0.0
        %2641 = vmatprep.subr.mxu0 0.0
        %2642 = vmatpush2.msra.mxu0 0.0
        %2643 = vmatprep.subr.mxu0 0.0
        %2644 = vmatpush2.msra.mxu0 0.0
        %2645 = vmatprep.subr.mxu0 0.0
        %2646 = vmatpush2.msra.mxu0 0.0
        %2647 = vmatprep.mubr.f32.mxu0 0.0
        %2648 = vmatmul.mubr.f32.gmra.mxu0 %v2581
        %v2649 = vpop.f32.mrf.mxu0
        %v2650 = vadd.f32 0.0, %v2649
        %v2651 = vpop.f32.mrf.mxu0
        %2652 = vdwg.mxu0
        %v2653 = vadd.f32 %v2563, %v2650
        %s2654 = scalar_lea.vmem [#allocation13], 384
        %v2655 = vld [vmem:[%s2654] sm:$0xff]
        %v2656 = vld [vmem:[%s2654 + $0x8] sm:$0xff]
        %v2657 = vld [vmem:[%s2654 + $0x10] sm:$0xff]
        %v2658 = vld [vmem:[%s2654 + $0x18] sm:$0xff]
        %v2659 = vld [vmem:[%s2654 + $0x20] sm:$0xff]
        %v2660 = vld [vmem:[%s2654 + $0x28] sm:$0xff]
        %v2661 = vld [vmem:[%s2654 + $0x30] sm:$0xff]
        %v2662 = vld [vmem:[%s2654 + $0x38] sm:$0xff]
        %v2663 = vld [vmem:[%s2654 + $0x40] sm:$0xff]
        %v2664 = vld [vmem:[%s2654 + $0x48] sm:$0xff]
        %v2665 = vld [vmem:[%s2654 + $0x50] sm:$0xff]
        %v2666 = vld [vmem:[%s2654 + $0x58] sm:$0xff]
        %v2667 = vld [vmem:[%s2654 + $0x60] sm:$0xff]
        %v2668 = vld [vmem:[%s2654 + $0x68] sm:$0xff]
        %v2669 = vld [vmem:[%s2654 + $0x70] sm:$0xff]
        %v2670 = vld [vmem:[%s2654 + $0x78] sm:$0xff]
        %v2671 = vrot.slane %v2384, 3
        %2673 = vmatprep.subr.mxu0 0.0
        %2674 = vmatpush1.msra.mxu0 %v2670
        %2675 = vmatprep.subr.mxu0 0.0
        %2676 = vmatpush1.msra.mxu0 %v2669
        %2677 = vmatprep.subr.mxu0 0.0
        %2678 = vmatpush1.msra.mxu0 %v2668
        %2679 = vmatprep.subr.mxu0 0.0
        %2680 = vmatpush1.msra.mxu0 %v2667
        %2681 = vmatprep.subr.mxu0 0.0
        %2682 = vmatpush1.msra.mxu0 %v2666
        %2683 = vmatprep.subr.mxu0 0.0
        %2684 = vmatpush1.msra.mxu0 %v2665
        %2685 = vmatprep.subr.mxu0 0.0
        %2686 = vmatpush1.msra.mxu0 %v2664
        %2687 = vmatprep.subr.mxu0 0.0
        %2688 = vmatpush1.msra.mxu0 %v2663
        %2689 = vmatprep.subr.mxu0 0.0
        %2690 = vmatpush1.msra.mxu0 %v2662
        %2691 = vmatprep.subr.mxu0 0.0
        %2692 = vmatpush1.msra.mxu0 %v2661
        %2693 = vmatprep.subr.mxu0 0.0
        %2694 = vmatpush1.msra.mxu0 %v2660
        %2695 = vmatprep.subr.mxu0 0.0
        %2696 = vmatpush1.msra.mxu0 %v2659
        %2697 = vmatprep.subr.mxu0 0.0
        %2698 = vmatpush1.msra.mxu0 %v2658
        %2699 = vmatprep.subr.mxu0 0.0
        %2700 = vmatpush1.msra.mxu0 %v2657
        %2701 = vmatprep.subr.mxu0 0.0
        %2702 = vmatpush1.msra.mxu0 %v2656
        %2703 = vmatprep.subr.mxu0 0.0
        %2704 = vmatpush1.msra.mxu0 %v2655
        %2705 = vmatprep.subr.mxu0 0.0
        %2706 = vmatpush2.msra.mxu0 0.0
        %2707 = vmatprep.subr.mxu0 0.0
        %2708 = vmatpush2.msra.mxu0 0.0
        %2709 = vmatprep.subr.mxu0 0.0
        %2710 = vmatpush2.msra.mxu0 0.0
        %2711 = vmatprep.subr.mxu0 0.0
        %2712 = vmatpush2.msra.mxu0 0.0
        %2713 = vmatprep.subr.mxu0 0.0
        %2714 = vmatpush2.msra.mxu0 0.0
        %2715 = vmatprep.subr.mxu0 0.0
        %2716 = vmatpush2.msra.mxu0 0.0
        %2717 = vmatprep.subr.mxu0 0.0
        %2718 = vmatpush2.msra.mxu0 0.0
        %2719 = vmatprep.subr.mxu0 0.0
        %2720 = vmatpush2.msra.mxu0 0.0
        %2721 = vmatprep.subr.mxu0 0.0
        %2722 = vmatpush2.msra.mxu0 0.0
        %2723 = vmatprep.subr.mxu0 0.0
        %2724 = vmatpush2.msra.mxu0 0.0
        %2725 = vmatprep.subr.mxu0 0.0
        %2726 = vmatpush2.msra.mxu0 0.0
        %2727 = vmatprep.subr.mxu0 0.0
        %2728 = vmatpush2.msra.mxu0 0.0
        %2729 = vmatprep.subr.mxu0 0.0
        %2730 = vmatpush2.msra.mxu0 0.0
        %2731 = vmatprep.subr.mxu0 0.0
        %2732 = vmatpush2.msra.mxu0 0.0
        %2733 = vmatprep.subr.mxu0 0.0
        %2734 = vmatpush2.msra.mxu0 0.0
        %2735 = vmatprep.subr.mxu0 0.0
        %2736 = vmatpush2.msra.mxu0 0.0
        %2737 = vmatprep.mubr.f32.mxu0 0.0
        %2738 = vmatmul.mubr.f32.gmra.mxu0 %v2671
        %v2739 = vpop.f32.mrf.mxu0
        %v2740 = vadd.f32 0.0, %v2739
        %v2741 = vpop.f32.mrf.mxu0
        %2742 = vdwg.mxu0
        %v2743 = vadd.f32 %v2653, %v2740
        %2744 = vst [vmem:[%s466] sm:$0x1] %v2743
        %s2745 = sand.u32 %s273, 1
        %s2746 = scalar_lea.sflag [#allocation6], %s2745
        %s2747 = sand.u32 %s273, 1
        %s2748 = scalar_lea.vmem [#allocation15], %s2747
        // Predicated region
        $region89: #{convolutional_nn_forward.1} parent=63 // pred_check
          %p2749 = pneg %p283
        $region90: #{convolutional_nn_forward.1} parent=63 // pred_check_branch
          %2751 = sbr.rel (%p2749) target = $region92
        $region91: #{convolutional_nn_forward.1} parent=63 // pred_region
          %s2753 = ssub.s32 16, 16
          %2754 = vsyncadd %s2746, %s2753
          %s2755 = smul.addr %s29, 16
          %s2756 = scalar_lea.hbm %s11, %s2755
          %s2758 = sshll.u32 %s2748, 4
          %s2759 = int_to_ptr.vmem [resolvable:$true] %s2758
          %2761 = dma.vmem_to_hbm [thread:$0]  %s2759, 16, %s2756, %s2746
        $region92: #{convolutional_nn_forward.1} parent=63 // pred_fallthru
          _
      $region64: #{convolutional_nn_forward.1} parent=5 // pred_fallthru
        _
      %p2762 = scmp.le.s32.totalorder 2, %s24
      // Predicated region
      $region93: #{convolutional_nn_forward.1} parent=5 // pred_check
        %p2763 = pneg %p2762
      $region94: #{convolutional_nn_forward.1} parent=5 // pred_check_branch
        %2765 = sbr.rel (%p2763) target = $region96
      $region95: #{convolutional_nn_forward.1} parent=5 // pred_region
        %s2766 = ssub.s32 %s24, 2
        // Predicated region
        $region97: #{convolutional_nn_forward.1} parent=95 // pred_check
          %p2767 = pneg %p289
        $region98: #{convolutional_nn_forward.1} parent=95 // pred_check_branch
          %2769 = sbr.rel (%p2767) target = $region100
        $region99: #{convolutional_nn_forward.1} parent=95 // pred_region
          %s2770 = sand.u32 %s274, 1
          %s2771 = scalar_lea.sflag [#allocation6], %s2770
          %s2772 = sand.u32 %s274, 1
          %s2773 = scalar_lea.vmem [#allocation15], %s2772
          %2774 = dma.done %s2771, 16
        $region100: #{convolutional_nn_forward.1} parent=95 // pred_fallthru
          _
      $region96: #{convolutional_nn_forward.1} parent=5 // pred_fallthru
        _
    $region6: #{convolutional_nn_forward.1} parent=1 // loop_footer
      %s28 = sadd.s32 1, %s24
    $region7: #{convolutional_nn_forward.1} parent=1 // loop_footer_branch
      %23 = sbr.rel target = $region3
    $region8: #{convolutional_nn_forward.1} parent=1 // loop_exit
      _
    %2775 = vsyncpa [#allocation5], 1
    %s2776 = scalar_lea.sflag [#allocation5], 1
    %2777 = vsyncpa %s2776, 1
    %2778 = vsyncpa [#allocation8], 1
    %2779 = vsyncpa [#allocation11], 1
    %2780 = vsyncpa [#allocation14], 1
    %2781 = vsyncpa [#allocation6], 1
    %s2782 = scalar_lea.sflag [#allocation6], 1
    %2783 = vsyncpa %s2782, 1

</llo_original>
